<compile_context>
chip_gen: v6e
topology: v6e:2x2x1
jax: 0.10.0
libtpu: 0.0.40
codegen_flags: <defaults>
</compile_context>

<pallas_src>
import math

import jax
import jax.numpy as jnp
from jax import lax
from jax.experimental import pallas as pl
from jax.experimental.pallas import tpu as pltpu

# ---------------- hyperparameters (small, consistent with the module) -------
INPUT_DIM = 16
EMB_DIM = 32
NHEAD = 4
HEAD_DIM = EMB_DIM // NHEAD
NUM_LAYERS = 2
HIDDEN_DIM = 64
OUTPUT_DIM = 8
MAX_SEQ_LEN = 16
BATCH = 2
SEQ_LEN = 8
BS = BATCH * SEQ_LEN

_LN_EPS = 1e-5
_NEG_INF = -1e30
_LANES = 128

# ---- per-layer weight slab row offsets (shape (L, WSLAB_ROWS, 128)) --------
W_QKV = 0                           # rows [0:E)      lanes [0:3E)
W_O = EMB_DIM                       # rows [E:2E)     lanes [0:E)
W_1 = 2 * EMB_DIM                   # rows [2E:3E)    lanes [0:HID)
W_2 = 3 * EMB_DIM                   # rows [3E:3E+H)  lanes [0:E)
WSLAB_ROWS = 3 * EMB_DIM + HIDDEN_DIM          # 160

# ---- per-layer vector slab row indices (shape (L, 8, 128)) -----------------
V_BQKV, V_BO, V_B1, V_B2, V_G1, V_BE1, V_G2, V_BE2 = range(8)

# ---- head slab row offsets (shape (HSLAB_ROWS, 128)) -----------------------
R_EMBW = 0                          # rows [0:Din)        lanes [0:E)
R_FC1W = R_EMBW + INPUT_DIM         # rows [16:48)        lanes [0:HID)
R_FC2W = R_FC1W + EMB_DIM           # rows [48:112)       lanes [0:128) (padded)
R_EMBB = R_FC2W + HIDDEN_DIM        # 112
R_LNW = R_EMBB + 1                  # 113
R_LNB = R_LNW + 1                   # 114
R_FC1B = R_LNB + 1                  # 115
R_FC2B = R_FC1B + 1                 # 116
HSLAB_ROWS = 120                    # padded up to a multiple of 8


# ---------------- Pallas kernel ---------------------------------------------
def _layer_norm(x, w, b):
    m = jnp.mean(x, axis=-1, keepdims=True)
    v = jnp.mean((x - m) ** 2, axis=-1, keepdims=True)
    return (x - m) * lax.rsqrt(v + _LN_EPS) * w + b


def _split_heads(mat, off):
    """(B*S, 96) lane group at `off` -> (H*B, S, Dh), head-major ordering."""
    return jnp.concatenate(
        [mat[:, off + h * HEAD_DIM: off + (h + 1) * HEAD_DIM]
         .reshape(BATCH, SEQ_LEN, HEAD_DIM) for h in range(NHEAD)],
        axis=0)


def transformer_kernel(lens_ref, x_ref, pos_ref, w_ref, v_ref, hd_ref, out_ref):
    f32 = jnp.float32

    # ---- additive key-padding mask from SMEM seq_lengths (built in-kernel) --
    col = lax.broadcasted_iota(jnp.int32, (1, SEQ_LEN), 1)
    mask = jnp.concatenate(
        [jnp.where(col >= lens_ref[b], f32(_NEG_INF), f32(0.0))
         for b in range(BATCH)], axis=0)                       # (B, S)
    mask_hb = jnp.concatenate([mask] * NHEAD, axis=0)[:, None, :]  # (H*B, 1, S)

    # ---- embedding + positional encoding ------------------------------------
    hd = hd_ref[...]                                           # (120, 128)
    emb_w = hd[R_EMBW:R_EMBW + INPUT_DIM, 0:EMB_DIM]           # (Din, E)
    emb_b = hd[R_EMBB:R_EMBB + 1, 0:EMB_DIM]                   # (1, E)
    pos = jnp.concatenate([pos_ref[...]] * BATCH, axis=0)      # (B*S, E)
    x2 = x_ref[...].reshape(BS, INPUT_DIM)                     # (B*S, Din)
    h = jnp.dot(x2, emb_w, preferred_element_type=f32) + emb_b + pos

    for l in range(NUM_LAYERS):                                # static unroll
        wl = w_ref[l]                                          # (160, 128)
        wqkv = wl[W_QKV:W_QKV + EMB_DIM, 0:3 * EMB_DIM]        # (E, 3E), q pre-scaled
        wo = wl[W_O:W_O + EMB_DIM, 0:EMB_DIM]                  # (E, E)
        w1 = wl[W_1:W_1 + EMB_DIM, 0:HIDDEN_DIM]               # (E, HID)
        w2 = wl[W_2:W_2 + HIDDEN_DIM, 0:EMB_DIM]               # (HID, E)

        vec = v_ref[l]                                         # (8, 128)
        bqkv = vec[V_BQKV:V_BQKV + 1, 0:3 * EMB_DIM]
        bo = vec[V_BO:V_BO + 1, 0:EMB_DIM]
        b1 = vec[V_B1:V_B1 + 1, 0:HIDDEN_DIM]
        b2 = vec[V_B2:V_B2 + 1, 0:EMB_DIM]
        g1 = vec[V_G1:V_G1 + 1, 0:EMB_DIM]
        be1 = vec[V_BE1:V_BE1 + 1, 0:EMB_DIM]
        g2 = vec[V_G2:V_G2 + 1, 0:EMB_DIM]
        be2 = vec[V_BE2:V_BE2 + 1, 0:EMB_DIM]

        # ---- fused qkv projection: ONE (B*S,E)@(E,3E) MXU push -------------
        qkv = jnp.dot(h, wqkv, preferred_element_type=f32) + bqkv   # (B*S, 3E)
        q = _split_heads(qkv, 0)                                    # (H*B, S, Dh)
        k = _split_heads(qkv, EMB_DIM)
        v = _split_heads(qkv, 2 * EMB_DIM)

        # ---- attention scores + masked softmax ------------------------------
        s = jnp.einsum('nqd,nkd->nqk', q, k, preferred_element_type=f32)
        s = s + mask_hb
        s = s - jnp.max(s, axis=-1, keepdims=True)
        p = jnp.exp(s)
        denom = jnp.sum(p, axis=-1, keepdims=True)
        o = jnp.einsum('nqk,nkd->nqd', p, v, preferred_element_type=f32)
        o = o * pl.reciprocal(denom, approx=True)                   # (H*B, S, Dh)

        # ---- fused out-projection: concat heads on lanes, ONE matmul --------
        o_cat = jnp.concatenate(
            [o[hh * BATCH:(hh + 1) * BATCH].reshape(BS, HEAD_DIM)
             for hh in range(NHEAD)], axis=1)                       # (B*S, H*Dh)
        attn = jnp.dot(o_cat, wo, preferred_element_type=f32) + bo  # (B*S, E)

        h = _layer_norm(h + attn, g1, be1)

        # ---- feed-forward ----------------------------------------------------
        ff = jnp.dot(h, w1, preferred_element_type=f32) + b1
        ff = jnp.maximum(ff, 0.0)
        ff = jnp.dot(ff, w2, preferred_element_type=f32) + b2
        h = _layer_norm(h + ff, g2, be2)

    # ---- head: last time step (static S-1, == PyTorch x[-1,:,:]) ------------
    last = h.reshape(BATCH, SEQ_LEN, EMB_DIM)[:, SEQ_LEN - 1:SEQ_LEN, :]
    last = last.reshape(BATCH, EMB_DIM)
    ln_w = hd[R_LNW:R_LNW + 1, 0:EMB_DIM]
    ln_b = hd[R_LNB:R_LNB + 1, 0:EMB_DIM]
    last = _layer_norm(last, ln_w, ln_b)

    fc1_w = hd[R_FC1W:R_FC1W + EMB_DIM, 0:HIDDEN_DIM]
    fc1_b = hd[R_FC1B:R_FC1B + 1, 0:HIDDEN_DIM]
    fc2_w = hd[R_FC2W:R_FC2W + HIDDEN_DIM, :]                  # (HID, 128) zero-padded
    fc2_b = hd[R_FC2B:R_FC2B + 1, :]                           # (1, 128) zero-padded

    z = jnp.dot(last, fc1_w, preferred_element_type=f32) + fc1_b
    z = jnp.maximum(z, 0.0)
    out_ref[...] = jnp.dot(z, fc2_w, preferred_element_type=f32) + fc2_b


# ---------------- parameter init (deterministic, synthetic, PyTorch layout) --
def init_params(key):
    def nrm(k, shape, s=0.05):
        return jax.random.normal(k, shape, dtype=jnp.float32) * s

    keys = iter(jax.random.split(key, 64))
    p = {}
    p['emb_w'] = nrm(next(keys), (EMB_DIM, INPUT_DIM))      # nn.Linear layout
    p['emb_b'] = nrm(next(keys), (EMB_DIM,))
    p['layers'] = []
    for _ in range(NUM_LAYERS):
        lp = {
            'in_proj_w': nrm(next(keys), (3 * EMB_DIM, EMB_DIM)),
            'in_proj_b': nrm(next(keys), (3 * EMB_DIM,)),
            'out_w': nrm(next(keys), (EMB_DIM, EMB_DIM)),
            'out_b': nrm(next(keys), (EMB_DIM,)),
            'lin1_w': nrm(next(keys), (HIDDEN_DIM, EMB_DIM)),
            'lin1_b': nrm(next(keys), (HIDDEN_DIM,)),
            'lin2_w': nrm(next(keys), (EMB_DIM, HIDDEN_DIM)),
            'lin2_b': nrm(next(keys), (EMB_DIM,)),
            'norm1_w': jnp.ones((EMB_DIM,), jnp.float32),
            'norm1_b': jnp.zeros((EMB_DIM,), jnp.float32),
            'norm2_w': jnp.ones((EMB_DIM,), jnp.float32),
            'norm2_b': jnp.zeros((EMB_DIM,), jnp.float32),
        }
        p['layers'].append(lp)
    p['ln_w'] = jnp.ones((EMB_DIM,), jnp.float32)
    p['ln_b'] = jnp.zeros((EMB_DIM,), jnp.float32)
    p['fc1_w'] = nrm(next(keys), (HIDDEN_DIM, EMB_DIM))
    p['fc1_b'] = nrm(next(keys), (HIDDEN_DIM,))
    p['fc2_w'] = nrm(next(keys), (OUTPUT_DIM, HIDDEN_DIM))
    p['fc2_b'] = nrm(next(keys), (OUTPUT_DIM,))
    return p


def sinusoidal_pos_encoding(max_len, emb_dim):
    position = jnp.arange(max_len, dtype=jnp.float32)[:, None]
    div_term = jnp.exp(jnp.arange(0, emb_dim, 2, dtype=jnp.float32) *
                       (-math.log(10000.0) / emb_dim))
    pe = jnp.zeros((max_len, emb_dim), jnp.float32)
    pe = pe.at[:, 0::2].set(jnp.sin(position * div_term))
    pe = pe.at[:, 1::2].set(jnp.cos(position * div_term))
    return pe


# ---------------- one-time parameter packing (outside the jitted forward) ----
def pack_params(params):
    """PyTorch-layout params -> 3 lane-dense slabs (done once, outside jit)."""
    scale = 1.0 / math.sqrt(HEAD_DIM)
    # fold the 1/sqrt(head_dim) q-scale into W_q and b_q
    qscale = jnp.concatenate([jnp.full((EMB_DIM,), scale, jnp.float32),
                              jnp.ones((2 * EMB_DIM,), jnp.float32)])

    def pad_lanes(a):
        return jnp.pad(a, ((0, 0), (0, _LANES - a.shape[-1])))

    def vec_row(v):
        return jnp.pad(v, (0, _LANES - v.shape[0]))[None, :]

    wslabs, vslabs = [], []
    for lp in params['layers']:
        wqkv = lp['in_proj_w'].T * qscale[None, :]            # (E, 3E), q pre-scaled
        wslab = jnp.concatenate([
            pad_lanes(wqkv),                                  # rows 0:32
            pad_lanes(lp['out_w'].T),                         # rows 32:64
            pad_lanes(lp['lin1_w'].T),                        # rows 64:96
            pad_lanes(lp['lin2_w'].T),                        # rows 96:160
        ], axis=0)
        assert wslab.shape == (WSLAB_ROWS, _LANES)
        wslabs.append(wslab)

        vslab = jnp.concatenate([
            vec_row(lp['in_proj_b'] * qscale),                # bqkv (q pre-scaled)
            vec_row(lp['out_b']),
            vec_row(lp['lin1_b']),
            vec_row(lp['lin2_b']),
            vec_row(lp['norm1_w']),
            vec_row(lp['norm1_b']),
            vec_row(lp['norm2_w']),
            vec_row(lp['norm2_b']),
        ], axis=0)                                            # (8, 128)
        vslabs.append(vslab)

    wslab = jnp.stack(wslabs)                                 # (L, 160, 128)
    vslab = jnp.stack(vslabs)                                 # (L, 8, 128)

    hslab = jnp.concatenate([
        pad_lanes(params['emb_w'].T),                         # rows 0:16
        pad_lanes(params['fc1_w'].T),                         # rows 16:48
        pad_lanes(params['fc2_w'].T),                         # rows 48:112 (lane-padded to 128)
        vec_row(params['emb_b']),                             # 112
        vec_row(params['ln_w']),                              # 113
        vec_row(params['ln_b']),                              # 114
        vec_row(params['fc1_b']),                             # 115
        vec_row(params['fc2_b']),                             # 116 (lane-padded to 128)
        jnp.zeros((HSLAB_ROWS - (R_FC2B + 1), _LANES), jnp.float32),
    ], axis=0)
    assert hslab.shape == (HSLAB_ROWS, _LANES)
    return wslab, vslab, hslab


# ---------------- wrapper -----------------------------------------------------
@jax.jit
def transformer_forward(x, seq_lengths, wslab, vslab, hslab, pos_s):
    # Single grid-less invocation: every operand is a whole-array block.
    # Total VMEM footprint << 1 MiB on v5e / v6e / v7x.
    out = pl.pallas_call(
        transformer_kernel,
        out_shape=jax.ShapeDtypeStruct((BATCH, _LANES), jnp.float32),
        in_specs=[
            pl.BlockSpec(memory_space=pltpu.MemorySpace.SMEM),   # seq_lengths
            pl.BlockSpec(memory_space=pltpu.MemorySpace.VMEM),   # x (B, S, Din)
            pl.BlockSpec(memory_space=pltpu.MemorySpace.VMEM),   # pos (S, E)
            pl.BlockSpec(memory_space=pltpu.MemorySpace.VMEM),   # weight slab
            pl.BlockSpec(memory_space=pltpu.MemorySpace.VMEM),   # vector slab
            pl.BlockSpec(memory_space=pltpu.MemorySpace.VMEM),   # head slab
        ],
        out_specs=pl.BlockSpec(memory_space=pltpu.MemorySpace.VMEM),
    )(seq_lengths, x, pos_s, wslab, vslab, hslab)
    return out[:, :OUTPUT_DIM]


# ---------------- main --------------------------------------------------------
if __name__ == "__main__":
    key = jax.random.PRNGKey(0)
    k_param, k_x = jax.random.split(key)

    params = init_params(k_param)
    wslab, vslab, hslab = pack_params(params)                # one-time packing
    pos_s = sinusoidal_pos_encoding(MAX_SEQ_LEN, EMB_DIM)[:SEQ_LEN]

    x = jax.random.normal(k_x, (BATCH, SEQ_LEN, INPUT_DIM), dtype=jnp.float32)
    seq_lengths = jnp.array([SEQ_LEN, 5], dtype=jnp.int32)

    out = transformer_forward(x, seq_lengths, wslab, vslab, hslab, pos_s)
    out = jax.block_until_ready(out)
    assert out.shape == (BATCH, OUTPUT_DIM)
    assert bool(jnp.all(jnp.isfinite(out)))
    print("KERNEL_OK")
</pallas_src>

<mosaic_0001>
module attributes {stable_mosaic.version = 11 : i64} {
  func.func @transformer_kernel(%arg0: memref<2xi32, #tpu.memory_space<smem>>, %arg1: memref<2x8x16xf32, #tpu.memory_space<vmem>>, %arg2: memref<8x32xf32, #tpu.memory_space<vmem>>, %arg3: memref<2x160x128xf32, #tpu.memory_space<vmem>>, %arg4: memref<2x8x128xf32, #tpu.memory_space<vmem>>, %arg5: memref<120x128xf32, #tpu.memory_space<vmem>>, %arg6: memref<2x128xf32, #tpu.memory_space<vmem>>) attributes {dimension_semantics = [], scalar_prefetch = 0 : i64, scratch_operands = 0 : i64, tpu.core_type = #tpu.core_type<tc>} {
    %0 = tpu.iota {dimensions = array<i32: 1>} : vector<1x8xi32>
    %c0 = arith.constant 0 : index
    %1 = memref.load %arg0[%c0] : memref<2xi32, #tpu.memory_space<smem>>
    %2 = vector.broadcast %1 : i32 to vector<1x8xi32>
    %3 = arith.cmpi sge, %0, %2 : vector<1x8xi32>
    %cst = arith.constant -1.000000e+30 : f32
    %cst_0 = arith.constant 0.000000e+00 : f32
    %4 = vector.broadcast %cst : f32 to vector<1x8xf32>
    %5 = vector.broadcast %cst_0 : f32 to vector<1x8xf32>
    %6 = arith.select %3, %4, %5 : vector<1x8xi1>, vector<1x8xf32>
    %c1 = arith.constant 1 : index
    %7 = memref.load %arg0[%c1] : memref<2xi32, #tpu.memory_space<smem>>
    %8 = vector.broadcast %7 : i32 to vector<1x8xi32>
    %9 = arith.cmpi sge, %0, %8 : vector<1x8xi32>
    %cst_1 = arith.constant -1.000000e+30 : f32
    %cst_2 = arith.constant 0.000000e+00 : f32
    %10 = vector.broadcast %cst_1 : f32 to vector<1x8xf32>
    %11 = vector.broadcast %cst_2 : f32 to vector<1x8xf32>
    %12 = arith.select %9, %10, %11 : vector<1x8xi1>, vector<1x8xf32>
    %13 = tpu.concatenate %6, %12 in 0 : vector<1x8xf32>, vector<1x8xf32> -> vector<2x8xf32>
    %14 = tpu.concatenate %13, %13, %13, %13 in 0 : vector<2x8xf32>, vector<2x8xf32>, vector<2x8xf32>, vector<2x8xf32> -> vector<8x8xf32>
    %15 = vector.shape_cast %14 : vector<8x8xf32> to vector<8x1x8xf32>
    %c0_3 = arith.constant 0 : index
    %c0_4 = arith.constant 0 : index
    %16 = vector.load %arg5[%c0_3, %c0_4] : memref<120x128xf32, #tpu.memory_space<vmem>>, vector<120x128xf32>
    %17 = vector.extract_strided_slice %16 {offsets = [0, 0], sizes = [16, 32], strides = [1, 1]} : vector<120x128xf32> to vector<16x32xf32>
    %18 = vector.extract_strided_slice %16 {offsets = [112, 0], sizes = [1, 32], strides = [1, 1]} : vector<120x128xf32> to vector<1x32xf32>
    %c0_5 = arith.constant 0 : index
    %c0_6 = arith.constant 0 : index
    %19 = vector.load %arg2[%c0_5, %c0_6] : memref<8x32xf32, #tpu.memory_space<vmem>>, vector<8x32xf32>
    %20 = tpu.concatenate %19, %19 in 0 : vector<8x32xf32>, vector<8x32xf32> -> vector<16x32xf32>
    %c0_7 = arith.constant 0 : index
    %c0_8 = arith.constant 0 : index
    %c0_9 = arith.constant 0 : index
    %21 = vector.load %arg1[%c0_7, %c0_8, %c0_9] : memref<2x8x16xf32, #tpu.memory_space<vmem>>, vector<2x8x16xf32>
    %22 = vector.shape_cast %21 : vector<2x8x16xf32> to vector<16x16xf32>
    %cst_10 = arith.constant dense<0.000000e+00> : vector<16x32xf32>
    %23 = tpu.matmul %22, %17, %cst_10 {dimension_numbers = #tpu.dot_dimension_numbers<[1], [0], [0], [1], [0, 0, 1, 1], [], []>} : vector<16x16xf32>, vector<16x32xf32>, vector<16x32xf32> -> vector<16x32xf32>
    %24 = vector.broadcast %18 : vector<1x32xf32> to vector<16x32xf32>
    %25 = arith.addf %23, %24 : vector<16x32xf32>
    %26 = arith.addf %25, %20 : vector<16x32xf32>
    %c0_11 = arith.constant 0 : index
    %c0_12 = arith.constant 0 : index
    %c0_13 = arith.constant 0 : index
    %27 = vector.load %arg3[%c0_11, %c0_12, %c0_13] : memref<2x160x128xf32, #tpu.memory_space<vmem>>, vector<1x160x128xf32>
    %28 = vector.shape_cast %27 : vector<1x160x128xf32> to vector<160x128xf32>
    %29 = vector.extract_strided_slice %28 {offsets = [0, 0], sizes = [32, 96], strides = [1, 1]} : vector<160x128xf32> to vector<32x96xf32>
    %30 = vector.extract_strided_slice %28 {offsets = [32, 0], sizes = [32, 32], strides = [1, 1]} : vector<160x128xf32> to vector<32x32xf32>
    %31 = vector.extract_strided_slice %28 {offsets = [64, 0], sizes = [32, 64], strides = [1, 1]} : vector<160x128xf32> to vector<32x64xf32>
    %32 = vector.extract_strided_slice %28 {offsets = [96, 0], sizes = [64, 32], strides = [1, 1]} : vector<160x128xf32> to vector<64x32xf32>
    %c0_14 = arith.constant 0 : index
    %c0_15 = arith.constant 0 : index
    %c0_16 = arith.constant 0 : index
    %33 = vector.load %arg4[%c0_14, %c0_15, %c0_16] : memref<2x8x128xf32, #tpu.memory_space<vmem>>, vector<1x8x128xf32>
    %34 = vector.shape_cast %33 : vector<1x8x128xf32> to vector<8x128xf32>
    %35 = vector.extract_strided_slice %34 {offsets = [0, 0], sizes = [1, 96], strides = [1, 1]} : vector<8x128xf32> to vector<1x96xf32>
    %36 = vector.extract_strided_slice %34 {offsets = [1, 0], sizes = [1, 32], strides = [1, 1]} : vector<8x128xf32> to vector<1x32xf32>
    %37 = vector.extract_strided_slice %34 {offsets = [2, 0], sizes = [1, 64], strides = [1, 1]} : vector<8x128xf32> to vector<1x64xf32>
    %38 = vector.extract_strided_slice %34 {offsets = [3, 0], sizes = [1, 32], strides = [1, 1]} : vector<8x128xf32> to vector<1x32xf32>
    %39 = vector.extract_strided_slice %34 {offsets = [4, 0], sizes = [1, 32], strides = [1, 1]} : vector<8x128xf32> to vector<1x32xf32>
    %40 = vector.extract_strided_slice %34 {offsets = [5, 0], sizes = [1, 32], strides = [1, 1]} : vector<8x128xf32> to vector<1x32xf32>
    %41 = vector.extract_strided_slice %34 {offsets = [6, 0], sizes = [1, 32], strides = [1, 1]} : vector<8x128xf32> to vector<1x32xf32>
    %42 = vector.extract_strided_slice %34 {offsets = [7, 0], sizes = [1, 32], strides = [1, 1]} : vector<8x128xf32> to vector<1x32xf32>
    %cst_17 = arith.constant dense<0.000000e+00> : vector<16x96xf32>
    %43 = tpu.matmul %26, %29, %cst_17 {dimension_numbers = #tpu.dot_dimension_numbers<[1], [0], [0], [1], [0, 0, 1, 1], [], []>} : vector<16x32xf32>, vector<32x96xf32>, vector<16x96xf32> -> vector<16x96xf32>
    %44 = vector.broadcast %35 : vector<1x96xf32> to vector<16x96xf32>
    %45 = arith.addf %43, %44 : vector<16x96xf32>
    %46 = vector.extract_strided_slice %45 {offsets = [0, 0], sizes = [16, 8], strides = [1, 1]} : vector<16x96xf32> to vector<16x8xf32>
    %47 = vector.shape_cast %46 : vector<16x8xf32> to vector<2x8x8xf32>
    %48 = vector.extract_strided_slice %45 {offsets = [0, 8], sizes = [16, 8], strides = [1, 1]} : vector<16x96xf32> to vector<16x8xf32>
    %49 = vector.shape_cast %48 : vector<16x8xf32> to vector<2x8x8xf32>
    %50 = vector.extract_strided_slice %45 {offsets = [0, 16], sizes = [16, 8], strides = [1, 1]} : vector<16x96xf32> to vector<16x8xf32>
    %51 = vector.shape_cast %50 : vector<16x8xf32> to vector<2x8x8xf32>
    %52 = vector.extract_strided_slice %45 {offsets = [0, 24], sizes = [16, 8], strides = [1, 1]} : vector<16x96xf32> to vector<16x8xf32>
    %53 = vector.shape_cast %52 : vector<16x8xf32> to vector<2x8x8xf32>
    %54 = tpu.concatenate %47, %49, %51, %53 in 0 : vector<2x8x8xf32>, vector<2x8x8xf32>, vector<2x8x8xf32>, vector<2x8x8xf32> -> vector<8x8x8xf32>
    %55 = vector.extract_strided_slice %45 {offsets = [0, 32], sizes = [16, 8], strides = [1, 1]} : vector<16x96xf32> to vector<16x8xf32>
    %56 = vector.shape_cast %55 : vector<16x8xf32> to vector<2x8x8xf32>
    %57 = vector.extract_strided_slice %45 {offsets = [0, 40], sizes = [16, 8], strides = [1, 1]} : vector<16x96xf32> to vector<16x8xf32>
    %58 = vector.shape_cast %57 : vector<16x8xf32> to vector<2x8x8xf32>
    %59 = vector.extract_strided_slice %45 {offsets = [0, 48], sizes = [16, 8], strides = [1, 1]} : vector<16x96xf32> to vector<16x8xf32>
    %60 = vector.shape_cast %59 : vector<16x8xf32> to vector<2x8x8xf32>
    %61 = vector.extract_strided_slice %45 {offsets = [0, 56], sizes = [16, 8], strides = [1, 1]} : vector<16x96xf32> to vector<16x8xf32>
    %62 = vector.shape_cast %61 : vector<16x8xf32> to vector<2x8x8xf32>
    %63 = tpu.concatenate %56, %58, %60, %62 in 0 : vector<2x8x8xf32>, vector<2x8x8xf32>, vector<2x8x8xf32>, vector<2x8x8xf32> -> vector<8x8x8xf32>
    %64 = vector.extract_strided_slice %45 {offsets = [0, 64], sizes = [16, 8], strides = [1, 1]} : vector<16x96xf32> to vector<16x8xf32>
    %65 = vector.shape_cast %64 : vector<16x8xf32> to vector<2x8x8xf32>
    %66 = vector.extract_strided_slice %45 {offsets = [0, 72], sizes = [16, 8], strides = [1, 1]} : vector<16x96xf32> to vector<16x8xf32>
    %67 = vector.shape_cast %66 : vector<16x8xf32> to vector<2x8x8xf32>
    %68 = vector.extract_strided_slice %45 {offsets = [0, 80], sizes = [16, 8], strides = [1, 1]} : vector<16x96xf32> to vector<16x8xf32>
    %69 = vector.shape_cast %68 : vector<16x8xf32> to vector<2x8x8xf32>
    %70 = vector.extract_strided_slice %45 {offsets = [0, 88], sizes = [16, 8], strides = [1, 1]} : vector<16x96xf32> to vector<16x8xf32>
    %71 = vector.shape_cast %70 : vector<16x8xf32> to vector<2x8x8xf32>
    %72 = tpu.concatenate %65, %67, %69, %71 in 0 : vector<2x8x8xf32>, vector<2x8x8xf32>, vector<2x8x8xf32>, vector<2x8x8xf32> -> vector<8x8x8xf32>
    "tpu.trace_start"() <{level = 10 : i32, message = "nqd,nkd->nqk"}> : () -> ()
    %cst_18 = arith.constant dense<0.000000e+00> : vector<8x8x8xf32>
    %73 = tpu.matmul %54, %63, %cst_18 {dimension_numbers = #tpu.dot_dimension_numbers<[2], [2], [1], [1], [0, 0, 0, 1, 1, 1], [0], [0]>} : vector<8x8x8xf32>, vector<8x8x8xf32>, vector<8x8x8xf32> -> vector<8x8x8xf32>
    "tpu.trace_stop"() : () -> ()
    %74 = vector.broadcast %15 : vector<8x1x8xf32> to vector<8x8x8xf32>
    %75 = arith.addf %73, %74 : vector<8x8x8xf32>
    %cst_19 = arith.constant dense<0xFF800000> : vector<8x8xf32>
    %76 = vector.multi_reduction <maximumf>, %75, %cst_19 [2] : vector<8x8x8xf32> to vector<8x8xf32>
    %77 = vector.shape_cast %76 : vector<8x8xf32> to vector<8x8x1xf32>
    %78 = vector.broadcast %77 : vector<8x8x1xf32> to vector<8x8x8xf32>
    %79 = arith.subf %75, %78 : vector<8x8x8xf32>
    %80 = math.exp %79 : vector<8x8x8xf32>
    %cst_20 = arith.constant dense<0.000000e+00> : vector<8x8xf32>
    %81 = vector.multi_reduction <add>, %80, %cst_20 [2] : vector<8x8x8xf32> to vector<8x8xf32>
    %82 = vector.shape_cast %81 : vector<8x8xf32> to vector<8x8x1xf32>
    "tpu.trace_start"() <{level = 10 : i32, message = "nqk,nkd->nqd"}> : () -> ()
    %cst_21 = arith.constant dense<0.000000e+00> : vector<8x8x8xf32>
    %83 = tpu.matmul %80, %72, %cst_21 {dimension_numbers = #tpu.dot_dimension_numbers<[2], [1], [1], [2], [0, 0, 0, 1, 1, 2], [0], [0]>} : vector<8x8x8xf32>, vector<8x8x8xf32>, vector<8x8x8xf32> -> vector<8x8x8xf32>
    "tpu.trace_stop"() : () -> ()
    %84 = tpu.reciprocal %82 {approx = true} : vector<8x8x1xf32> -> vector<8x8x1xf32>
    %85 = vector.broadcast %84 : vector<8x8x1xf32> to vector<8x8x8xf32>
    %86 = arith.mulf %83, %85 : vector<8x8x8xf32>
    %87 = vector.extract_strided_slice %86 {offsets = [0, 0, 0], sizes = [2, 8, 8], strides = [1, 1, 1]} : vector<8x8x8xf32> to vector<2x8x8xf32>
    %88 = vector.shape_cast %87 : vector<2x8x8xf32> to vector<16x8xf32>
    %89 = vector.extract_strided_slice %86 {offsets = [2, 0, 0], sizes = [2, 8, 8], strides = [1, 1, 1]} : vector<8x8x8xf32> to vector<2x8x8xf32>
    %90 = vector.shape_cast %89 : vector<2x8x8xf32> to vector<16x8xf32>
    %91 = vector.extract_strided_slice %86 {offsets = [4, 0, 0], sizes = [2, 8, 8], strides = [1, 1, 1]} : vector<8x8x8xf32> to vector<2x8x8xf32>
    %92 = vector.shape_cast %91 : vector<2x8x8xf32> to vector<16x8xf32>
    %93 = vector.extract_strided_slice %86 {offsets = [6, 0, 0], sizes = [2, 8, 8], strides = [1, 1, 1]} : vector<8x8x8xf32> to vector<2x8x8xf32>
    %94 = vector.shape_cast %93 : vector<2x8x8xf32> to vector<16x8xf32>
    %95 = tpu.concatenate %88, %90, %92, %94 in 1 : vector<16x8xf32>, vector<16x8xf32>, vector<16x8xf32>, vector<16x8xf32> -> vector<16x32xf32>
    %cst_22 = arith.constant dense<0.000000e+00> : vector<16x32xf32>
    %96 = tpu.matmul %95, %30, %cst_22 {dimension_numbers = #tpu.dot_dimension_numbers<[1], [0], [0], [1], [0, 0, 1, 1], [], []>} : vector<16x32xf32>, vector<32x32xf32>, vector<16x32xf32> -> vector<16x32xf32>
    %97 = vector.broadcast %36 : vector<1x32xf32> to vector<16x32xf32>
    %98 = arith.addf %96, %97 : vector<16x32xf32>
    %99 = arith.addf %26, %98 : vector<16x32xf32>
    %cst_23 = arith.constant dense<0.000000e+00> : vector<16xf32>
    %100 = vector.multi_reduction <add>, %99, %cst_23 [1] : vector<16x32xf32> to vector<16xf32>
    %101 = vector.shape_cast %100 : vector<16xf32> to vector<16x1xf32>
    %cst_24 = arith.constant 3.200000e+01 : f32
    %102 = vector.broadcast %cst_24 : f32 to vector<16x1xf32>
    %103 = arith.divf %101, %102 : vector<16x1xf32>
    %104 = vector.broadcast %103 : vector<16x1xf32> to vector<16x32xf32>
    %105 = arith.subf %99, %104 : vector<16x32xf32>
    %106 = arith.mulf %105, %105 : vector<16x32xf32>
    %cst_25 = arith.constant dense<0.000000e+00> : vector<16xf32>
    %107 = vector.multi_reduction <add>, %106, %cst_25 [1] : vector<16x32xf32> to vector<16xf32>
    %108 = vector.shape_cast %107 : vector<16xf32> to vector<16x1xf32>
    %cst_26 = arith.constant 3.200000e+01 : f32
    %109 = vector.broadcast %cst_26 : f32 to vector<16x1xf32>
    %110 = arith.divf %108, %109 : vector<16x1xf32>
    %111 = vector.broadcast %103 : vector<16x1xf32> to vector<16x32xf32>
    %112 = arith.subf %99, %111 : vector<16x32xf32>
    %cst_27 = arith.constant 9.99999974E-6 : f32
    %113 = vector.broadcast %cst_27 : f32 to vector<16x1xf32>
    %114 = arith.addf %110, %113 : vector<16x1xf32>
    %115 = math.rsqrt %114 : vector<16x1xf32>
    %116 = vector.broadcast %115 : vector<16x1xf32> to vector<16x32xf32>
    %117 = arith.mulf %112, %116 : vector<16x32xf32>
    %118 = vector.broadcast %39 : vector<1x32xf32> to vector<16x32xf32>
    %119 = arith.mulf %117, %118 : vector<16x32xf32>
    %120 = vector.broadcast %40 : vector<1x32xf32> to vector<16x32xf32>
    %121 = arith.addf %119, %120 : vector<16x32xf32>
    %cst_28 = arith.constant dense<0.000000e+00> : vector<16x64xf32>
    %122 = tpu.matmul %121, %31, %cst_28 {dimension_numbers = #tpu.dot_dimension_numbers<[1], [0], [0], [1], [0, 0, 1, 1], [], []>} : vector<16x32xf32>, vector<32x64xf32>, vector<16x64xf32> -> vector<16x64xf32>
    %123 = vector.broadcast %37 : vector<1x64xf32> to vector<16x64xf32>
    %124 = arith.addf %122, %123 : vector<16x64xf32>
    %cst_29 = arith.constant 0.000000e+00 : f32
    %125 = vector.broadcast %cst_29 : f32 to vector<16x64xf32>
    %126 = arith.maximumf %124, %125 : vector<16x64xf32>
    %cst_30 = arith.constant dense<0.000000e+00> : vector<16x32xf32>
    %127 = tpu.matmul %126, %32, %cst_30 {dimension_numbers = #tpu.dot_dimension_numbers<[1], [0], [0], [1], [0, 0, 1, 1], [], []>} : vector<16x64xf32>, vector<64x32xf32>, vector<16x32xf32> -> vector<16x32xf32>
    %128 = vector.broadcast %38 : vector<1x32xf32> to vector<16x32xf32>
    %129 = arith.addf %127, %128 : vector<16x32xf32>
    %130 = arith.addf %121, %129 : vector<16x32xf32>
    %cst_31 = arith.constant dense<0.000000e+00> : vector<16xf32>
    %131 = vector.multi_reduction <add>, %130, %cst_31 [1] : vector<16x32xf32> to vector<16xf32>
    %132 = vector.shape_cast %131 : vector<16xf32> to vector<16x1xf32>
    %cst_32 = arith.constant 3.200000e+01 : f32
    %133 = vector.broadcast %cst_32 : f32 to vector<16x1xf32>
    %134 = arith.divf %132, %133 : vector<16x1xf32>
    %135 = vector.broadcast %134 : vector<16x1xf32> to vector<16x32xf32>
    %136 = arith.subf %130, %135 : vector<16x32xf32>
    %137 = arith.mulf %136, %136 : vector<16x32xf32>
    %cst_33 = arith.constant dense<0.000000e+00> : vector<16xf32>
    %138 = vector.multi_reduction <add>, %137, %cst_33 [1] : vector<16x32xf32> to vector<16xf32>
    %139 = vector.shape_cast %138 : vector<16xf32> to vector<16x1xf32>
    %cst_34 = arith.constant 3.200000e+01 : f32
    %140 = vector.broadcast %cst_34 : f32 to vector<16x1xf32>
    %141 = arith.divf %139, %140 : vector<16x1xf32>
    %142 = vector.broadcast %134 : vector<16x1xf32> to vector<16x32xf32>
    %143 = arith.subf %130, %142 : vector<16x32xf32>
    %cst_35 = arith.constant 9.99999974E-6 : f32
    %144 = vector.broadcast %cst_35 : f32 to vector<16x1xf32>
    %145 = arith.addf %141, %144 : vector<16x1xf32>
    %146 = math.rsqrt %145 : vector<16x1xf32>
    %147 = vector.broadcast %146 : vector<16x1xf32> to vector<16x32xf32>
    %148 = arith.mulf %143, %147 : vector<16x32xf32>
    %149 = vector.broadcast %41 : vector<1x32xf32> to vector<16x32xf32>
    %150 = arith.mulf %148, %149 : vector<16x32xf32>
    %151 = vector.broadcast %42 : vector<1x32xf32> to vector<16x32xf32>
    %152 = arith.addf %150, %151 : vector<16x32xf32>
    %c1_36 = arith.constant 1 : index
    %c0_37 = arith.constant 0 : index
    %c0_38 = arith.constant 0 : index
    %153 = vector.load %arg3[%c1_36, %c0_37, %c0_38] : memref<2x160x128xf32, #tpu.memory_space<vmem>>, vector<1x160x128xf32>
    %154 = vector.shape_cast %153 : vector<1x160x128xf32> to vector<160x128xf32>
    %155 = vector.extract_strided_slice %154 {offsets = [0, 0], sizes = [32, 96], strides = [1, 1]} : vector<160x128xf32> to vector<32x96xf32>
    %156 = vector.extract_strided_slice %154 {offsets = [32, 0], sizes = [32, 32], strides = [1, 1]} : vector<160x128xf32> to vector<32x32xf32>
    %157 = vector.extract_strided_slice %154 {offsets = [64, 0], sizes = [32, 64], strides = [1, 1]} : vector<160x128xf32> to vector<32x64xf32>
    %158 = vector.extract_strided_slice %154 {offsets = [96, 0], sizes = [64, 32], strides = [1, 1]} : vector<160x128xf32> to vector<64x32xf32>
    %c1_39 = arith.constant 1 : index
    %c0_40 = arith.constant 0 : index
    %c0_41 = arith.constant 0 : index
    %159 = vector.load %arg4[%c1_39, %c0_40, %c0_41] : memref<2x8x128xf32, #tpu.memory_space<vmem>>, vector<1x8x128xf32>
    %160 = vector.shape_cast %159 : vector<1x8x128xf32> to vector<8x128xf32>
    %161 = vector.extract_strided_slice %160 {offsets = [0, 0], sizes = [1, 96], strides = [1, 1]} : vector<8x128xf32> to vector<1x96xf32>
    %162 = vector.extract_strided_slice %160 {offsets = [1, 0], sizes = [1, 32], strides = [1, 1]} : vector<8x128xf32> to vector<1x32xf32>
    %163 = vector.extract_strided_slice %160 {offsets = [2, 0], sizes = [1, 64], strides = [1, 1]} : vector<8x128xf32> to vector<1x64xf32>
    %164 = vector.extract_strided_slice %160 {offsets = [3, 0], sizes = [1, 32], strides = [1, 1]} : vector<8x128xf32> to vector<1x32xf32>
    %165 = vector.extract_strided_slice %160 {offsets = [4, 0], sizes = [1, 32], strides = [1, 1]} : vector<8x128xf32> to vector<1x32xf32>
    %166 = vector.extract_strided_slice %160 {offsets = [5, 0], sizes = [1, 32], strides = [1, 1]} : vector<8x128xf32> to vector<1x32xf32>
    %167 = vector.extract_strided_slice %160 {offsets = [6, 0], sizes = [1, 32], strides = [1, 1]} : vector<8x128xf32> to vector<1x32xf32>
    %168 = vector.extract_strided_slice %160 {offsets = [7, 0], sizes = [1, 32], strides = [1, 1]} : vector<8x128xf32> to vector<1x32xf32>
    %cst_42 = arith.constant dense<0.000000e+00> : vector<16x96xf32>
    %169 = tpu.matmul %152, %155, %cst_42 {dimension_numbers = #tpu.dot_dimension_numbers<[1], [0], [0], [1], [0, 0, 1, 1], [], []>} : vector<16x32xf32>, vector<32x96xf32>, vector<16x96xf32> -> vector<16x96xf32>
    %170 = vector.broadcast %161 : vector<1x96xf32> to vector<16x96xf32>
    %171 = arith.addf %169, %170 : vector<16x96xf32>
    %172 = vector.extract_strided_slice %171 {offsets = [0, 0], sizes = [16, 8], strides = [1, 1]} : vector<16x96xf32> to vector<16x8xf32>
    %173 = vector.shape_cast %172 : vector<16x8xf32> to vector<2x8x8xf32>
    %174 = vector.extract_strided_slice %171 {offsets = [0, 8], sizes = [16, 8], strides = [1, 1]} : vector<16x96xf32> to vector<16x8xf32>
    %175 = vector.shape_cast %174 : vector<16x8xf32> to vector<2x8x8xf32>
    %176 = vector.extract_strided_slice %171 {offsets = [0, 16], sizes = [16, 8], strides = [1, 1]} : vector<16x96xf32> to vector<16x8xf32>
    %177 = vector.shape_cast %176 : vector<16x8xf32> to vector<2x8x8xf32>
    %178 = vector.extract_strided_slice %171 {offsets = [0, 24], sizes = [16, 8], strides = [1, 1]} : vector<16x96xf32> to vector<16x8xf32>
    %179 = vector.shape_cast %178 : vector<16x8xf32> to vector<2x8x8xf32>
    %180 = tpu.concatenate %173, %175, %177, %179 in 0 : vector<2x8x8xf32>, vector<2x8x8xf32>, vector<2x8x8xf32>, vector<2x8x8xf32> -> vector<8x8x8xf32>
    %181 = vector.extract_strided_slice %171 {offsets = [0, 32], sizes = [16, 8], strides = [1, 1]} : vector<16x96xf32> to vector<16x8xf32>
    %182 = vector.shape_cast %181 : vector<16x8xf32> to vector<2x8x8xf32>
    %183 = vector.extract_strided_slice %171 {offsets = [0, 40], sizes = [16, 8], strides = [1, 1]} : vector<16x96xf32> to vector<16x8xf32>
    %184 = vector.shape_cast %183 : vector<16x8xf32> to vector<2x8x8xf32>
    %185 = vector.extract_strided_slice %171 {offsets = [0, 48], sizes = [16, 8], strides = [1, 1]} : vector<16x96xf32> to vector<16x8xf32>
    %186 = vector.shape_cast %185 : vector<16x8xf32> to vector<2x8x8xf32>
    %187 = vector.extract_strided_slice %171 {offsets = [0, 56], sizes = [16, 8], strides = [1, 1]} : vector<16x96xf32> to vector<16x8xf32>
    %188 = vector.shape_cast %187 : vector<16x8xf32> to vector<2x8x8xf32>
    %189 = tpu.concatenate %182, %184, %186, %188 in 0 : vector<2x8x8xf32>, vector<2x8x8xf32>, vector<2x8x8xf32>, vector<2x8x8xf32> -> vector<8x8x8xf32>
    %190 = vector.extract_strided_slice %171 {offsets = [0, 64], sizes = [16, 8], strides = [1, 1]} : vector<16x96xf32> to vector<16x8xf32>
    %191 = vector.shape_cast %190 : vector<16x8xf32> to vector<2x8x8xf32>
    %192 = vector.extract_strided_slice %171 {offsets = [0, 72], sizes = [16, 8], strides = [1, 1]} : vector<16x96xf32> to vector<16x8xf32>
    %193 = vector.shape_cast %192 : vector<16x8xf32> to vector<2x8x8xf32>
    %194 = vector.extract_strided_slice %171 {offsets = [0, 80], sizes = [16, 8], strides = [1, 1]} : vector<16x96xf32> to vector<16x8xf32>
    %195 = vector.shape_cast %194 : vector<16x8xf32> to vector<2x8x8xf32>
    %196 = vector.extract_strided_slice %171 {offsets = [0, 88], sizes = [16, 8], strides = [1, 1]} : vector<16x96xf32> to vector<16x8xf32>
    %197 = vector.shape_cast %196 : vector<16x8xf32> to vector<2x8x8xf32>
    %198 = tpu.concatenate %191, %193, %195, %197 in 0 : vector<2x8x8xf32>, vector<2x8x8xf32>, vector<2x8x8xf32>, vector<2x8x8xf32> -> vector<8x8x8xf32>
    "tpu.trace_start"() <{level = 10 : i32, message = "nqd,nkd->nqk"}> : () -> ()
    %cst_43 = arith.constant dense<0.000000e+00> : vector<8x8x8xf32>
    %199 = tpu.matmul %180, %189, %cst_43 {dimension_numbers = #tpu.dot_dimension_numbers<[2], [2], [1], [1], [0, 0, 0, 1, 1, 1], [0], [0]>} : vector<8x8x8xf32>, vector<8x8x8xf32>, vector<8x8x8xf32> -> vector<8x8x8xf32>
    "tpu.trace_stop"() : () -> ()
    %200 = vector.broadcast %15 : vector<8x1x8xf32> to vector<8x8x8xf32>
    %201 = arith.addf %199, %200 : vector<8x8x8xf32>
    %cst_44 = arith.constant dense<0xFF800000> : vector<8x8xf32>
    %202 = vector.multi_reduction <maximumf>, %201, %cst_44 [2] : vector<8x8x8xf32> to vector<8x8xf32>
    %203 = vector.shape_cast %202 : vector<8x8xf32> to vector<8x8x1xf32>
    %204 = vector.broadcast %203 : vector<8x8x1xf32> to vector<8x8x8xf32>
    %205 = arith.subf %201, %204 : vector<8x8x8xf32>
    %206 = math.exp %205 : vector<8x8x8xf32>
    %cst_45 = arith.constant dense<0.000000e+00> : vector<8x8xf32>
    %207 = vector.multi_reduction <add>, %206, %cst_45 [2] : vector<8x8x8xf32> to vector<8x8xf32>
    %208 = vector.shape_cast %207 : vector<8x8xf32> to vector<8x8x1xf32>
    "tpu.trace_start"() <{level = 10 : i32, message = "nqk,nkd->nqd"}> : () -> ()
    %cst_46 = arith.constant dense<0.000000e+00> : vector<8x8x8xf32>
    %209 = tpu.matmul %206, %198, %cst_46 {dimension_numbers = #tpu.dot_dimension_numbers<[2], [1], [1], [2], [0, 0, 0, 1, 1, 2], [0], [0]>} : vector<8x8x8xf32>, vector<8x8x8xf32>, vector<8x8x8xf32> -> vector<8x8x8xf32>
    "tpu.trace_stop"() : () -> ()
    %210 = tpu.reciprocal %208 {approx = true} : vector<8x8x1xf32> -> vector<8x8x1xf32>
    %211 = vector.broadcast %210 : vector<8x8x1xf32> to vector<8x8x8xf32>
    %212 = arith.mulf %209, %211 : vector<8x8x8xf32>
    %213 = vector.extract_strided_slice %212 {offsets = [0, 0, 0], sizes = [2, 8, 8], strides = [1, 1, 1]} : vector<8x8x8xf32> to vector<2x8x8xf32>
    %214 = vector.shape_cast %213 : vector<2x8x8xf32> to vector<16x8xf32>
    %215 = vector.extract_strided_slice %212 {offsets = [2, 0, 0], sizes = [2, 8, 8], strides = [1, 1, 1]} : vector<8x8x8xf32> to vector<2x8x8xf32>
    %216 = vector.shape_cast %215 : vector<2x8x8xf32> to vector<16x8xf32>
    %217 = vector.extract_strided_slice %212 {offsets = [4, 0, 0], sizes = [2, 8, 8], strides = [1, 1, 1]} : vector<8x8x8xf32> to vector<2x8x8xf32>
    %218 = vector.shape_cast %217 : vector<2x8x8xf32> to vector<16x8xf32>
    %219 = vector.extract_strided_slice %212 {offsets = [6, 0, 0], sizes = [2, 8, 8], strides = [1, 1, 1]} : vector<8x8x8xf32> to vector<2x8x8xf32>
    %220 = vector.shape_cast %219 : vector<2x8x8xf32> to vector<16x8xf32>
    %221 = tpu.concatenate %214, %216, %218, %220 in 1 : vector<16x8xf32>, vector<16x8xf32>, vector<16x8xf32>, vector<16x8xf32> -> vector<16x32xf32>
    %cst_47 = arith.constant dense<0.000000e+00> : vector<16x32xf32>
    %222 = tpu.matmul %221, %156, %cst_47 {dimension_numbers = #tpu.dot_dimension_numbers<[1], [0], [0], [1], [0, 0, 1, 1], [], []>} : vector<16x32xf32>, vector<32x32xf32>, vector<16x32xf32> -> vector<16x32xf32>
    %223 = vector.broadcast %162 : vector<1x32xf32> to vector<16x32xf32>
    %224 = arith.addf %222, %223 : vector<16x32xf32>
    %225 = arith.addf %152, %224 : vector<16x32xf32>
    %cst_48 = arith.constant dense<0.000000e+00> : vector<16xf32>
    %226 = vector.multi_reduction <add>, %225, %cst_48 [1] : vector<16x32xf32> to vector<16xf32>
    %227 = vector.shape_cast %226 : vector<16xf32> to vector<16x1xf32>
    %cst_49 = arith.constant 3.200000e+01 : f32
    %228 = vector.broadcast %cst_49 : f32 to vector<16x1xf32>
    %229 = arith.divf %227, %228 : vector<16x1xf32>
    %230 = vector.broadcast %229 : vector<16x1xf32> to vector<16x32xf32>
    %231 = arith.subf %225, %230 : vector<16x32xf32>
    %232 = arith.mulf %231, %231 : vector<16x32xf32>
    %cst_50 = arith.constant dense<0.000000e+00> : vector<16xf32>
    %233 = vector.multi_reduction <add>, %232, %cst_50 [1] : vector<16x32xf32> to vector<16xf32>
    %234 = vector.shape_cast %233 : vector<16xf32> to vector<16x1xf32>
    %cst_51 = arith.constant 3.200000e+01 : f32
    %235 = vector.broadcast %cst_51 : f32 to vector<16x1xf32>
    %236 = arith.divf %234, %235 : vector<16x1xf32>
    %237 = vector.broadcast %229 : vector<16x1xf32> to vector<16x32xf32>
    %238 = arith.subf %225, %237 : vector<16x32xf32>
    %cst_52 = arith.constant 9.99999974E-6 : f32
    %239 = vector.broadcast %cst_52 : f32 to vector<16x1xf32>
    %240 = arith.addf %236, %239 : vector<16x1xf32>
    %241 = math.rsqrt %240 : vector<16x1xf32>
    %242 = vector.broadcast %241 : vector<16x1xf32> to vector<16x32xf32>
    %243 = arith.mulf %238, %242 : vector<16x32xf32>
    %244 = vector.broadcast %165 : vector<1x32xf32> to vector<16x32xf32>
    %245 = arith.mulf %243, %244 : vector<16x32xf32>
    %246 = vector.broadcast %166 : vector<1x32xf32> to vector<16x32xf32>
    %247 = arith.addf %245, %246 : vector<16x32xf32>
    %cst_53 = arith.constant dense<0.000000e+00> : vector<16x64xf32>
    %248 = tpu.matmul %247, %157, %cst_53 {dimension_numbers = #tpu.dot_dimension_numbers<[1], [0], [0], [1], [0, 0, 1, 1], [], []>} : vector<16x32xf32>, vector<32x64xf32>, vector<16x64xf32> -> vector<16x64xf32>
    %249 = vector.broadcast %163 : vector<1x64xf32> to vector<16x64xf32>
    %250 = arith.addf %248, %249 : vector<16x64xf32>
    %cst_54 = arith.constant 0.000000e+00 : f32
    %251 = vector.broadcast %cst_54 : f32 to vector<16x64xf32>
    %252 = arith.maximumf %250, %251 : vector<16x64xf32>
    %cst_55 = arith.constant dense<0.000000e+00> : vector<16x32xf32>
    %253 = tpu.matmul %252, %158, %cst_55 {dimension_numbers = #tpu.dot_dimension_numbers<[1], [0], [0], [1], [0, 0, 1, 1], [], []>} : vector<16x64xf32>, vector<64x32xf32>, vector<16x32xf32> -> vector<16x32xf32>
    %254 = vector.broadcast %164 : vector<1x32xf32> to vector<16x32xf32>
    %255 = arith.addf %253, %254 : vector<16x32xf32>
    %256 = arith.addf %247, %255 : vector<16x32xf32>
    %cst_56 = arith.constant dense<0.000000e+00> : vector<16xf32>
    %257 = vector.multi_reduction <add>, %256, %cst_56 [1] : vector<16x32xf32> to vector<16xf32>
    %258 = vector.shape_cast %257 : vector<16xf32> to vector<16x1xf32>
    %cst_57 = arith.constant 3.200000e+01 : f32
    %259 = vector.broadcast %cst_57 : f32 to vector<16x1xf32>
    %260 = arith.divf %258, %259 : vector<16x1xf32>
    %261 = vector.broadcast %260 : vector<16x1xf32> to vector<16x32xf32>
    %262 = arith.subf %256, %261 : vector<16x32xf32>
    %263 = arith.mulf %262, %262 : vector<16x32xf32>
    %cst_58 = arith.constant dense<0.000000e+00> : vector<16xf32>
    %264 = vector.multi_reduction <add>, %263, %cst_58 [1] : vector<16x32xf32> to vector<16xf32>
    %265 = vector.shape_cast %264 : vector<16xf32> to vector<16x1xf32>
    %cst_59 = arith.constant 3.200000e+01 : f32
    %266 = vector.broadcast %cst_59 : f32 to vector<16x1xf32>
    %267 = arith.divf %265, %266 : vector<16x1xf32>
    %268 = vector.broadcast %260 : vector<16x1xf32> to vector<16x32xf32>
    %269 = arith.subf %256, %268 : vector<16x32xf32>
    %cst_60 = arith.constant 9.99999974E-6 : f32
    %270 = vector.broadcast %cst_60 : f32 to vector<16x1xf32>
    %271 = arith.addf %267, %270 : vector<16x1xf32>
    %272 = math.rsqrt %271 : vector<16x1xf32>
    %273 = vector.broadcast %272 : vector<16x1xf32> to vector<16x32xf32>
    %274 = arith.mulf %269, %273 : vector<16x32xf32>
    %275 = vector.broadcast %167 : vector<1x32xf32> to vector<16x32xf32>
    %276 = arith.mulf %274, %275 : vector<16x32xf32>
    %277 = vector.broadcast %168 : vector<1x32xf32> to vector<16x32xf32>
    %278 = arith.addf %276, %277 : vector<16x32xf32>
    %279 = vector.shape_cast %278 : vector<16x32xf32> to vector<2x8x32xf32>
    %280 = vector.extract_strided_slice %279 {offsets = [0, 7, 0], sizes = [2, 1, 32], strides = [1, 1, 1]} : vector<2x8x32xf32> to vector<2x1x32xf32>
    %281 = vector.shape_cast %280 : vector<2x1x32xf32> to vector<2x32xf32>
    %282 = vector.extract_strided_slice %16 {offsets = [113, 0], sizes = [1, 32], strides = [1, 1]} : vector<120x128xf32> to vector<1x32xf32>
    %283 = vector.extract_strided_slice %16 {offsets = [114, 0], sizes = [1, 32], strides = [1, 1]} : vector<120x128xf32> to vector<1x32xf32>
    %cst_61 = arith.constant dense<0.000000e+00> : vector<2xf32>
    %284 = vector.multi_reduction <add>, %281, %cst_61 [1] : vector<2x32xf32> to vector<2xf32>
    %285 = vector.shape_cast %284 : vector<2xf32> to vector<2x1xf32>
    %cst_62 = arith.constant 3.200000e+01 : f32
    %286 = vector.broadcast %cst_62 : f32 to vector<2x1xf32>
    %287 = arith.divf %285, %286 : vector<2x1xf32>
    %288 = vector.broadcast %287 : vector<2x1xf32> to vector<2x32xf32>
    %289 = arith.subf %281, %288 : vector<2x32xf32>
    %290 = arith.mulf %289, %289 : vector<2x32xf32>
    %cst_63 = arith.constant dense<0.000000e+00> : vector<2xf32>
    %291 = vector.multi_reduction <add>, %290, %cst_63 [1] : vector<2x32xf32> to vector<2xf32>
    %292 = vector.shape_cast %291 : vector<2xf32> to vector<2x1xf32>
    %cst_64 = arith.constant 3.200000e+01 : f32
    %293 = vector.broadcast %cst_64 : f32 to vector<2x1xf32>
    %294 = arith.divf %292, %293 : vector<2x1xf32>
    %295 = vector.broadcast %287 : vector<2x1xf32> to vector<2x32xf32>
    %296 = arith.subf %281, %295 : vector<2x32xf32>
    %cst_65 = arith.constant 9.99999974E-6 : f32
    %297 = vector.broadcast %cst_65 : f32 to vector<2x1xf32>
    %298 = arith.addf %294, %297 : vector<2x1xf32>
    %299 = math.rsqrt %298 : vector<2x1xf32>
    %300 = vector.broadcast %299 : vector<2x1xf32> to vector<2x32xf32>
    %301 = arith.mulf %296, %300 : vector<2x32xf32>
    %302 = vector.broadcast %282 : vector<1x32xf32> to vector<2x32xf32>
    %303 = arith.mulf %301, %302 : vector<2x32xf32>
    %304 = vector.broadcast %283 : vector<1x32xf32> to vector<2x32xf32>
    %305 = arith.addf %303, %304 : vector<2x32xf32>
    %306 = vector.extract_strided_slice %16 {offsets = [16, 0], sizes = [32, 64], strides = [1, 1]} : vector<120x128xf32> to vector<32x64xf32>
    %307 = vector.extract_strided_slice %16 {offsets = [115, 0], sizes = [1, 64], strides = [1, 1]} : vector<120x128xf32> to vector<1x64xf32>
    %308 = vector.extract_strided_slice %16 {offsets = [48, 0], sizes = [64, 128], strides = [1, 1]} : vector<120x128xf32> to vector<64x128xf32>
    %309 = vector.extract_strided_slice %16 {offsets = [116, 0], sizes = [1, 128], strides = [1, 1]} : vector<120x128xf32> to vector<1x128xf32>
    %cst_66 = arith.constant dense<0.000000e+00> : vector<2x64xf32>
    %310 = tpu.matmul %305, %306, %cst_66 {dimension_numbers = #tpu.dot_dimension_numbers<[1], [0], [0], [1], [0, 0, 1, 1], [], []>} : vector<2x32xf32>, vector<32x64xf32>, vector<2x64xf32> -> vector<2x64xf32>
    %311 = vector.broadcast %307 : vector<1x64xf32> to vector<2x64xf32>
    %312 = arith.addf %310, %311 : vector<2x64xf32>
    %cst_67 = arith.constant 0.000000e+00 : f32
    %313 = vector.broadcast %cst_67 : f32 to vector<2x64xf32>
    %314 = arith.maximumf %312, %313 : vector<2x64xf32>
    %cst_68 = arith.constant dense<0.000000e+00> : vector<2x128xf32>
    %315 = tpu.matmul %314, %308, %cst_68 {dimension_numbers = #tpu.dot_dimension_numbers<[1], [0], [0], [1], [0, 0, 1, 1], [], []>} : vector<2x64xf32>, vector<64x128xf32>, vector<2x128xf32> -> vector<2x128xf32>
    %316 = vector.broadcast %309 : vector<1x128xf32> to vector<2x128xf32>
    %317 = arith.addf %315, %316 : vector<2x128xf32>
    %c0_69 = arith.constant 0 : index
    %c0_70 = arith.constant 0 : index
    %318 = vector.load %arg6[%c0_69, %c0_70] : memref<2x128xf32, #tpu.memory_space<vmem>>, vector<2x128xf32>
    tpu.vector_store %arg6[%c0_69, %c0_70], %317 {strides = array<i32>} : memref<2x128xf32, #tpu.memory_space<vmem>>, vector<2x128xf32>,
    return
  }
}

</mosaic_0001>

<llo_original>
// kernel: transformer_forward.1
$region0: #{transformer_forward.1}
  #allocation0 [shape = 'u32[]', space=smem, size = 0x4, offset = 0x4, fixed_abs, tag = 'smem constant byte address 0x4 - core index']
  #allocation1 [shape = 'u32[144,128]{1,0:T(1,128)}', space=vmem, size = 0x12000, scoped, tag = 'internal scratch']
  %s0 = inlined_call_operand.vmem [shape: s32[2], index: 0, kind: input, shape index: {}]
  %s1 = inlined_call_operand.hbm [shape: f32[2,8,16], index: 1, kind: input, shape index: {}]
  %s2 = inlined_call_operand.vmem [shape: f32[8,32], index: 2, kind: input, shape index: {}]
  %s3 = inlined_call_operand.hbm [shape: f32[2,160,128], index: 3, kind: input, shape index: {}]
  %s4 = inlined_call_operand.hbm [shape: f32[2,8,128], index: 4, kind: input, shape index: {}]
  %s5 = inlined_call_operand.hbm [shape: f32[120,128], index: 5, kind: input, shape index: {}]
  %s6 = inlined_call_operand.hbm [shape: f32[2,128], index: 6, kind: output, shape index: {}]
  %s7 = sld [smem:[#allocation0]]
  $region54: #{transformer_forward.1} parent=0
    _
  %s9 = ssub.s32 1, %s7
  %s10 = scalar_select 0, %s9, %s7
  $region1: #{transformer_forward.1} parent=0
    #allocation2 [shape = 'u8[512]{0}', space=smem, size = 0x200, scoped, tag = 'input window, operand 0, single buffered']
    #allocation3 [shape = 's32[1]{0}', space=sflag, size = 0x4, scoped, tag = 'scoped memory for transformer_forward.1']
    #allocation4 [shape = 's32[1]{0}', space=sflag, size = 0x4, scoped, tag = 'scoped memory for transformer_forward.1']
    #allocation5 [shape = 's32[1]{0}', space=sflag, size = 0x4, scoped, tag = 'scoped memory for transformer_forward.1']
    #allocation6 [shape = 'u8[8192]{0}', space=vmem, size = 0x2000, scoped, tag = 'input window, operand 1, single buffered']
    #allocation7 [shape = 'u8[163840]{0}', space=vmem, size = 0x28000, scoped, tag = 'input window, operand 3, single buffered']
    #allocation8 [shape = 's32[1]{0}', space=sflag, size = 0x4, scoped, tag = 'scoped memory for transformer_forward.1']
    #allocation9 [shape = 'u8[8192]{0}', space=vmem, size = 0x2000, scoped, tag = 'input window, operand 4, single buffered']
    #allocation10 [shape = 'u8[61440]{0}', space=vmem, size = 0xf000, scoped, tag = 'input window, operand 5, single buffered']
    #allocation11 [shape = 's32[1]{0}', space=sflag, size = 0x4, scoped, tag = 'scoped memory for transformer_forward.1']
    #allocation12 [shape = 'u8[1024]{0}', space=vmem, size = 0x400, scoped, tag = 'output window, operand 0, single buffered']
    %11 = vsyncpa [#allocation5], 0
    %12 = vsyncpa [#allocation3], 0
    %13 = vsyncpa [#allocation8], 0
    %14 = vsyncpa [#allocation11], 0
    %15 = vsyncpa [#allocation4], 0
    // Predicated region
    $region2: #{transformer_forward.1} parent=1 // pred_check
      _
    $region3: #{transformer_forward.1} parent=1 // pred_check_branch
      %17 = sbr.rel (0) target = $region5
    $region4: #{transformer_forward.1} parent=1 // pred_region
      %s19 = ssub.s32 16, 16
      %20 = vsyncadd [#allocation5], %s19
      %s22 = sshll.u32 %s0, 4
      %s23 = int_to_ptr.vmem [resolvable:$true] %s22
      %25 = dma.vmem_to_smem %s23, 16, [#allocation2], [#allocation5]
    $region5: #{transformer_forward.1} parent=1 // pred_fallthru
      _
    // Predicated region
    $region6: #{transformer_forward.1} parent=1 // pred_check
      _
    $region7: #{transformer_forward.1} parent=1 // pred_check_branch
      %27 = sbr.rel (0) target = $region9
    $region8: #{transformer_forward.1} parent=1 // pred_region
      %s29 = ssub.s32 256, 256
      %30 = vsyncadd [#allocation3], %s29
      %s31 = sshll.u32 [#allocation6], 4
      %s32 = int_to_ptr.vmem [resolvable:$true] %s31
      %37 = dma.hbm_to_vmem [thread:$0]  %s1, 256, %s32, [#allocation3], 128, 128, 8
    $region9: #{transformer_forward.1} parent=1 // pred_fallthru
      _
    // Predicated region
    $region10: #{transformer_forward.1} parent=1 // pred_check
      _
    $region11: #{transformer_forward.1} parent=1 // pred_check_branch
      %39 = sbr.rel (0) target = $region13
    $region12: #{transformer_forward.1} parent=1 // pred_region
      _
    $region13: #{transformer_forward.1} parent=1 // pred_fallthru
      _
    // Predicated region
    $region14: #{transformer_forward.1} parent=1 // pred_check
      _
    $region15: #{transformer_forward.1} parent=1 // pred_check_branch
      %41 = sbr.rel (0) target = $region17
    $region16: #{transformer_forward.1} parent=1 // pred_region
      %s43 = ssub.s32 5120, 5120
      %44 = vsyncadd [#allocation8], %s43
      %s45 = sshll.u32 [#allocation7], 4
      %s46 = int_to_ptr.vmem [resolvable:$true] %s45
      %51 = dma.hbm_to_vmem [thread:$0]  %s3, 5120, %s46, [#allocation8], 128, 128, 8
    $region17: #{transformer_forward.1} parent=1 // pred_fallthru
      _
    // Predicated region
    $region18: #{transformer_forward.1} parent=1 // pred_check
      _
    $region19: #{transformer_forward.1} parent=1 // pred_check_branch
      %53 = sbr.rel (0) target = $region21
    $region20: #{transformer_forward.1} parent=1 // pred_region
      %s55 = ssub.s32 256, 256
      %56 = vsyncadd [#allocation8], %s55
      %s57 = sshll.u32 [#allocation9], 4
      %s58 = int_to_ptr.vmem [resolvable:$true] %s57
      %63 = dma.hbm_to_vmem [thread:$0]  %s4, 256, %s58, [#allocation8], 128, 128, 8
    $region21: #{transformer_forward.1} parent=1 // pred_fallthru
      _
    // Predicated region
    $region22: #{transformer_forward.1} parent=1 // pred_check
      _
    $region23: #{transformer_forward.1} parent=1 // pred_check_branch
      %65 = sbr.rel (0) target = $region25
    $region24: #{transformer_forward.1} parent=1 // pred_region
      %s67 = ssub.s32 1920, 1920
      %68 = vsyncadd [#allocation11], %s67
      %s69 = sshll.u32 [#allocation10], 4
      %s70 = int_to_ptr.vmem [resolvable:$true] %s69
      %75 = dma.hbm_to_vmem [thread:$0]  %s5, 1920, %s70, [#allocation11], 128, 128, 8
    $region25: #{transformer_forward.1} parent=1 // pred_fallthru
      _
    // Predicated region
    $region26: #{transformer_forward.1} parent=1 // pred_check
      _
    $region27: #{transformer_forward.1} parent=1 // pred_check_branch
      %77 = sbr.rel (0) target = $region29
    $region28: #{transformer_forward.1} parent=1 // pred_region
      %78 = dma.done [#allocation5], 16
    $region29: #{transformer_forward.1} parent=1 // pred_fallthru
      _
    // Predicated region
    $region30: #{transformer_forward.1} parent=1 // pred_check
      _
    $region31: #{transformer_forward.1} parent=1 // pred_check_branch
      %80 = sbr.rel (0) target = $region33
    $region32: #{transformer_forward.1} parent=1 // pred_region
      %81 = dma.done [#allocation3], 256
    $region33: #{transformer_forward.1} parent=1 // pred_fallthru
      _
    // Predicated region
    $region34: #{transformer_forward.1} parent=1 // pred_check
      _
    $region35: #{transformer_forward.1} parent=1 // pred_check_branch
      %83 = sbr.rel (0) target = $region37
    $region36: #{transformer_forward.1} parent=1 // pred_region
      %84 = dma.done [#allocation8], 5120
    $region37: #{transformer_forward.1} parent=1 // pred_fallthru
      _
    // Predicated region
    $region38: #{transformer_forward.1} parent=1 // pred_check
      _
    $region39: #{transformer_forward.1} parent=1 // pred_check_branch
      %86 = sbr.rel (0) target = $region41
    $region40: #{transformer_forward.1} parent=1 // pred_region
      %87 = dma.done [#allocation8], 256
    $region41: #{transformer_forward.1} parent=1 // pred_fallthru
      _
    // Predicated region
    $region42: #{transformer_forward.1} parent=1 // pred_check
      _
    $region43: #{transformer_forward.1} parent=1 // pred_check_branch
      %89 = sbr.rel (0) target = $region45
    $region44: #{transformer_forward.1} parent=1 // pred_region
      %90 = dma.done [#allocation11], 1920
    $region45: #{transformer_forward.1} parent=1 // pred_fallthru
      _
    %91 = sfence
    %v92 = vlaneseq
    %v93 = vand.u32 %v92, 127
    %s94 = sld [smem:[#allocation2]]
    %v95 = vstv %s94
    %vm96 = vcmp.ge.s32.totalorder %v93, %v95
    %v97 = vsel %vm96, -1e+30, 0.0
    %s98 = sld [smem:[#allocation2 + $0x1]]
    %v99 = vstv %s98
    %vm100 = vcmp.ge.s32.totalorder %v93, %v99
    %v101 = vsel %vm100, -1e+30, 0.0
    %vm102 = vcmask 1040384
    %v103 = vsel %vm102, %v97, %v101
    %v105 = vrot.slane %v103, 6
    %v107 = vrot.slane %v103, 4
    %v109 = vrot.slane %v103, 2
    %vm111 = vcmask 1041408
    %v112 = vsel %vm111, %v103, %v105
    %vm113 = vcmask 1043456
    %v114 = vsel %vm113, %v112, %v107
    %vm115 = vcmask 1045504
    %v116 = vsel %vm115, %v114, %v109
    %v118 = vcombine.high %v116, %v116
    %v120 = vunpack.c.l.s4 1966171168
    %v121 = vunpack.c.0.s8 %v120
    %v122 = vlaneseq
    %v123 = vshrl.u32 %v122, 7
    %v124 = vsub.s32 %v121, %v123
    %v125 = vrot.slane %v116, %v124
    %v127 = vunpack.c.l.s4 1966171168
    %v128 = vunpack.c.0.s8 %v127
    %v129 = vlaneseq
    %v130 = vshrl.u32 %v129, 7
    %v131 = vsub.s32 %v128, %v130
    %v132 = vrot.slane %v118, %v131
    %v133 = vcombine.high %v125, %v125
    %v134 = vcombine.high %v132, %v132
    %v136 = vunpack.c.l.s4 1966171168
    %v137 = vunpack.c.0.s8 %v136
    %v138 = vlaneseq
    %v139 = vshrl.u32 %v138, 7
    %v140 = vsub.s32 %v137, %v139
    %v141 = vrot.slane %v125, %v140
    %v143 = vunpack.c.l.s4 1966171168
    %v144 = vunpack.c.0.s8 %v143
    %v145 = vlaneseq
    %v146 = vshrl.u32 %v145, 7
    %v147 = vsub.s32 %v144, %v146
    %v148 = vrot.slane %v132, %v147
    %v150 = vunpack.c.l.s4 1966171168
    %v151 = vunpack.c.0.s8 %v150
    %v152 = vlaneseq
    %v153 = vshrl.u32 %v152, 7
    %v154 = vsub.s32 %v151, %v153
    %v155 = vrot.slane %v133, %v154
    %v157 = vunpack.c.l.s4 1966171168
    %v158 = vunpack.c.0.s8 %v157
    %v159 = vlaneseq
    %v160 = vshrl.u32 %v159, 7
    %v161 = vsub.s32 %v158, %v160
    %v162 = vrot.slane %v134, %v161
    %v163 = vcombine.high %v141, %v141
    %v164 = vcombine.high %v148, %v148
    %v165 = vcombine.high %v155, %v155
    %v166 = vcombine.high %v162, %v162
    %v167 = vld [vmem:[#allocation10] sm:$0xff]
    %v168 = vld [vmem:[#allocation10 + $0x8] sm:$0xff]
    %v169 = vld [vmem:[#allocation10 + $0x10] sm:$0xff]
    %v170 = vld [vmem:[#allocation10 + $0x18] sm:$0xff]
    %v171 = vld [vmem:[#allocation10 + $0x20] sm:$0xff]
    %v172 = vld [vmem:[#allocation10 + $0x28] sm:$0xff]
    %v173 = vld [vmem:[#allocation10 + $0x30] sm:$0xff]
    %v174 = vld [vmem:[#allocation10 + $0x38] sm:$0xff]
    %v175 = vld [vmem:[#allocation10 + $0x40] sm:$0xff]
    %v176 = vld [vmem:[#allocation10 + $0x48] sm:$0xff]
    %v177 = vld [vmem:[#allocation10 + $0x50] sm:$0xff]
    %v178 = vld [vmem:[#allocation10 + $0x58] sm:$0xff]
    %v179 = vld [vmem:[#allocation10 + $0x60] sm:$0xff]
    %v180 = vld [vmem:[#allocation10 + $0x68] sm:$0xff]
    %v181 = vld [vmem:[#allocation10 + $0x70] sm:$0xff]
    %v182 = vld [vmem:[%s2] sm:$0xff]
    %v183 = vld [vmem:[#allocation6] sm:$0xff]
    %v184 = vld [vmem:[#allocation6 + $0x8] sm:$0xff]
    %v185 = vlaneseq
    %v186 = vshrl.u32 %v185, 7
    %v187 = vsub.s32 0, %v186
    %v188 = vrot.slane %v181, %v187
    %vm189 = vcmask 130048
    %v191 = vsel %vm189, %v183, 0
    %v194 = vsel %vm189, %v184, 0
    %196 = vmatprep.subr.mxu0 0.0
    %197 = vmatpush1.msra.mxu0 0.0
    %198 = vmatprep.subr.mxu0 0.0
    %199 = vmatpush1.msra.mxu0 0.0
    %200 = vmatprep.subr.mxu0 0.0
    %201 = vmatpush1.msra.mxu0 0.0
    %202 = vmatprep.subr.mxu0 0.0
    %203 = vmatpush1.msra.mxu0 0.0
    %204 = vmatprep.subr.mxu0 0.0
    %205 = vmatpush1.msra.mxu0 0.0
    %206 = vmatprep.subr.mxu0 0.0
    %207 = vmatpush1.msra.mxu0 0.0
    %208 = vmatprep.subr.mxu0 0.0
    %209 = vmatpush1.msra.mxu0 0.0
    %210 = vmatprep.subr.mxu0 0.0
    %211 = vmatpush1.msra.mxu0 0.0
    %212 = vmatprep.subr.mxu0 0.0
    %213 = vmatpush1.msra.mxu0 0.0
    %214 = vmatprep.subr.mxu0 0.0
    %215 = vmatpush1.msra.mxu0 0.0
    %216 = vmatprep.subr.mxu0 0.0
    %217 = vmatpush1.msra.mxu0 0.0
    %218 = vmatprep.subr.mxu0 0.0
    %219 = vmatpush1.msra.mxu0 0.0
    %220 = vmatprep.subr.mxu0 0.0
    %221 = vmatpush1.msra.mxu0 0.0
    %222 = vmatprep.subr.mxu0 0.0
    %223 = vmatpush1.msra.mxu0 0.0
    %224 = vmatprep.subr.mxu0 0.0
    %225 = vmatpush1.msra.mxu0 %v168
    %226 = vmatprep.subr.mxu0 0.0
    %227 = vmatpush1.msra.mxu0 %v167
    %228 = vmatprep.subr.mxu0 0.0
    %229 = vmatpush2.msra.mxu0 0.0
    %230 = vmatprep.subr.mxu0 0.0
    %231 = vmatpush2.msra.mxu0 0.0
    %232 = vmatprep.subr.mxu0 0.0
    %233 = vmatpush2.msra.mxu0 0.0
    %234 = vmatprep.subr.mxu0 0.0
    %235 = vmatpush2.msra.mxu0 0.0
    %236 = vmatprep.subr.mxu0 0.0
    %237 = vmatpush2.msra.mxu0 0.0
    %238 = vmatprep.subr.mxu0 0.0
    %239 = vmatpush2.msra.mxu0 0.0
    %240 = vmatprep.subr.mxu0 0.0
    %241 = vmatpush2.msra.mxu0 0.0
    %242 = vmatprep.subr.mxu0 0.0
    %243 = vmatpush2.msra.mxu0 0.0
    %244 = vmatprep.subr.mxu0 0.0
    %245 = vmatpush2.msra.mxu0 0.0
    %246 = vmatprep.subr.mxu0 0.0
    %247 = vmatpush2.msra.mxu0 0.0
    %248 = vmatprep.subr.mxu0 0.0
    %249 = vmatpush2.msra.mxu0 0.0
    %250 = vmatprep.subr.mxu0 0.0
    %251 = vmatpush2.msra.mxu0 0.0
    %252 = vmatprep.subr.mxu0 0.0
    %253 = vmatpush2.msra.mxu0 0.0
    %254 = vmatprep.subr.mxu0 0.0
    %255 = vmatpush2.msra.mxu0 0.0
    %256 = vmatprep.subr.mxu0 0.0
    %257 = vmatpush2.msra.mxu0 0.0
    %258 = vmatprep.subr.mxu0 0.0
    %259 = vmatpush2.msra.mxu0 0.0
    %260 = vmatprep.mubr.f32.mxu0 0.0
    %261 = vmatmul.mubr.f32.gmra.mxu0 %v191
    %v262 = vpop.f32.mrf.mxu0
    %v263 = vadd.f32 %v188, %v262
    %v264 = vpop.f32.mrf.mxu0
    %265 = vmatprep.mubr.f32.mxu0 0.0
    %266 = vmatmul.mubr.f32.gmra.mxu0 %v194
    %v267 = vpop.f32.mrf.mxu0
    %v268 = vadd.f32 %v188, %v267
    %v269 = vpop.f32.mrf.mxu0
    %270 = vdwg.mxu0
    %v271 = vadd.f32 %v263, %v182
    %v272 = vadd.f32 %v268, %v182
    %v273 = vld [vmem:[#allocation7] sm:$0xff]
    %v274 = vld [vmem:[#allocation7 + $0x8] sm:$0xff]
    %v275 = vld [vmem:[#allocation7 + $0x10] sm:$0xff]
    %v276 = vld [vmem:[#allocation7 + $0x18] sm:$0xff]
    %v277 = vld [vmem:[#allocation7 + $0x20] sm:$0xff]
    %v278 = vld [vmem:[#allocation7 + $0x28] sm:$0xff]
    %v279 = vld [vmem:[#allocation7 + $0x30] sm:$0xff]
    %v280 = vld [vmem:[#allocation7 + $0x38] sm:$0xff]
    %v281 = vld [vmem:[#allocation7 + $0x40] sm:$0xff]
    %v282 = vld [vmem:[#allocation7 + $0x48] sm:$0xff]
    %v283 = vld [vmem:[#allocation7 + $0x50] sm:$0xff]
    %v284 = vld [vmem:[#allocation7 + $0x58] sm:$0xff]
    %v285 = vld [vmem:[#allocation7 + $0x60] sm:$0xff]
    %v286 = vld [vmem:[#allocation7 + $0x68] sm:$0xff]
    %v287 = vld [vmem:[#allocation7 + $0x70] sm:$0xff]
    %v288 = vld [vmem:[#allocation7 + $0x78] sm:$0xff]
    %v289 = vld [vmem:[#allocation7 + $0x80] sm:$0xff]
    %v290 = vld [vmem:[#allocation7 + $0x88] sm:$0xff]
    %v291 = vld [vmem:[#allocation7 + $0x90] sm:$0xff]
    %v292 = vld [vmem:[#allocation7 + $0x98] sm:$0xff]
    %v293 = vld [vmem:[#allocation9] sm:$0xff]
    %v294 = vlaneseq
    %v295 = vshrl.u32 %v294, 7
    %v296 = vsub.s32 0, %v295
    %v297 = vrot.slane %v293, %v296
    %vm298 = vcmask 261120
    %v300 = vsel %vm298, %v271, 0
    %v303 = vsel %vm298, %v272, 0
    %305 = vmatprep.subr.mxu0 0.0
    %306 = vmatpush1.msra.mxu0 0.0
    %307 = vmatprep.subr.mxu0 0.0
    %308 = vmatpush1.msra.mxu0 0.0
    %309 = vmatprep.subr.mxu0 0.0
    %310 = vmatpush1.msra.mxu0 0.0
    %311 = vmatprep.subr.mxu0 0.0
    %312 = vmatpush1.msra.mxu0 0.0
    %313 = vmatprep.subr.mxu0 0.0
    %314 = vmatpush1.msra.mxu0 0.0
    %315 = vmatprep.subr.mxu0 0.0
    %316 = vmatpush1.msra.mxu0 0.0
    %317 = vmatprep.subr.mxu0 0.0
    %318 = vmatpush1.msra.mxu0 0.0
    %319 = vmatprep.subr.mxu0 0.0
    %320 = vmatpush1.msra.mxu0 0.0
    %321 = vmatprep.subr.mxu0 0.0
    %322 = vmatpush1.msra.mxu0 0.0
    %323 = vmatprep.subr.mxu0 0.0
    %324 = vmatpush1.msra.mxu0 0.0
    %325 = vmatprep.subr.mxu0 0.0
    %326 = vmatpush1.msra.mxu0 0.0
    %327 = vmatprep.subr.mxu0 0.0
    %328 = vmatpush1.msra.mxu0 0.0
    %329 = vmatprep.subr.mxu0 0.0
    %330 = vmatpush1.msra.mxu0 %v276
    %331 = vmatprep.subr.mxu0 0.0
    %332 = vmatpush1.msra.mxu0 %v275
    %333 = vmatprep.subr.mxu0 0.0
    %334 = vmatpush1.msra.mxu0 %v274
    %335 = vmatprep.subr.mxu0 0.0
    %336 = vmatpush1.msra.mxu0 %v273
    %337 = vmatprep.subr.mxu0 0.0
    %338 = vmatpush2.msra.mxu0 0.0
    %339 = vmatprep.subr.mxu0 0.0
    %340 = vmatpush2.msra.mxu0 0.0
    %341 = vmatprep.subr.mxu0 0.0
    %342 = vmatpush2.msra.mxu0 0.0
    %343 = vmatprep.subr.mxu0 0.0
    %344 = vmatpush2.msra.mxu0 0.0
    %345 = vmatprep.subr.mxu0 0.0
    %346 = vmatpush2.msra.mxu0 0.0
    %347 = vmatprep.subr.mxu0 0.0
    %348 = vmatpush2.msra.mxu0 0.0
    %349 = vmatprep.subr.mxu0 0.0
    %350 = vmatpush2.msra.mxu0 0.0
    %351 = vmatprep.subr.mxu0 0.0
    %352 = vmatpush2.msra.mxu0 0.0
    %353 = vmatprep.subr.mxu0 0.0
    %354 = vmatpush2.msra.mxu0 0.0
    %355 = vmatprep.subr.mxu0 0.0
    %356 = vmatpush2.msra.mxu0 0.0
    %357 = vmatprep.subr.mxu0 0.0
    %358 = vmatpush2.msra.mxu0 0.0
    %359 = vmatprep.subr.mxu0 0.0
    %360 = vmatpush2.msra.mxu0 0.0
    %361 = vmatprep.subr.mxu0 0.0
    %362 = vmatpush2.msra.mxu0 0.0
    %363 = vmatprep.subr.mxu0 0.0
    %364 = vmatpush2.msra.mxu0 0.0
    %365 = vmatprep.subr.mxu0 0.0
    %366 = vmatpush2.msra.mxu0 0.0
    %367 = vmatprep.subr.mxu0 0.0
    %368 = vmatpush2.msra.mxu0 0.0
    %369 = vmatprep.mubr.f32.mxu0 0.0
    %370 = vmatmul.mubr.f32.gmra.mxu0 %v300
    %v371 = vpop.f32.mrf.mxu0
    %v372 = vadd.f32 %v297, %v371
    %v373 = vpop.f32.mrf.mxu0
    %374 = vmatprep.mubr.f32.mxu0 0.0
    %375 = vmatmul.mubr.f32.gmra.mxu0 %v303
    %v376 = vpop.f32.mrf.mxu0
    %v377 = vadd.f32 %v297, %v376
    %v378 = vpop.f32.mrf.mxu0
    %379 = vdwg.mxu0
    %382 = vrot.lane.b32.xlu0 %v372, 120
    %v383 = vpop.permute.xlu0 %382
    %384 = vrot.lane.b32.xlu0 %v377, 120
    %v385 = vpop.permute.xlu0 %384
    %386 = vrot.lane.b32.xlu0 %v372, 112
    %v387 = vpop.permute.xlu0 %386
    %388 = vrot.lane.b32.xlu0 %v377, 112
    %v389 = vpop.permute.xlu0 %388
    %390 = vrot.lane.b32.xlu0 %v372, 104
    %v391 = vpop.permute.xlu0 %390
    %392 = vrot.lane.b32.xlu0 %v377, 104
    %v393 = vpop.permute.xlu0 %392
    %v394 = vlaneseq
    %v395 = vshrl.u32 %v394, 7
    %v396 = vsub.s32 0, %v395
    %v397 = vrot.slane %v141, %v396
    %v398 = vlaneseq
    %v399 = vshrl.u32 %v398, 7
    %v400 = vsub.s32 0, %v399
    %v401 = vrot.slane %v155, %v400
    %v402 = vlaneseq
    %v403 = vshrl.u32 %v402, 7
    %v404 = vsub.s32 0, %v403
    %v405 = vrot.slane %v163, %v404
    %v406 = vlaneseq
    %v407 = vshrl.u32 %v406, 7
    %v408 = vsub.s32 0, %v407
    %v409 = vrot.slane %v165, %v408
    %v410 = vlaneseq
    %v411 = vshrl.u32 %v410, 7
    %v412 = vsub.s32 0, %v411
    %v413 = vrot.slane %v148, %v412
    %v414 = vlaneseq
    %v415 = vshrl.u32 %v414, 7
    %v416 = vsub.s32 0, %v415
    %v417 = vrot.slane %v162, %v416
    %v418 = vlaneseq
    %v419 = vshrl.u32 %v418, 7
    %v420 = vsub.s32 0, %v419
    %v421 = vrot.slane %v164, %v420
    %v422 = vlaneseq
    %v423 = vshrl.u32 %v422, 7
    %v424 = vsub.s32 0, %v423
    %v425 = vrot.slane %v166, %v424
    %434 = vrot.lane.b32.xlu0 %v372, 96
    %v435 = vpop.permute.xlu0 %434
    %vm436 = vcmask 64512
    %v437 = vsel %vm436, %v372, 0
    %v439 = vsel %vm436, %v435, 0
    %441 = vmatprep.subr.mxu0 0.0
    %442 = vmatpush1.xpose.msra.mxu0 0.0
    %443 = vmatprep.subr.mxu0 0.0
    %444 = vmatpush1.xpose.msra.mxu0 0.0
    %445 = vmatprep.subr.mxu0 0.0
    %446 = vmatpush1.xpose.msra.mxu0 0.0
    %447 = vmatprep.subr.mxu0 0.0
    %448 = vmatpush1.xpose.msra.mxu0 0.0
    %449 = vmatprep.subr.mxu0 0.0
    %450 = vmatpush1.xpose.msra.mxu0 0.0
    %451 = vmatprep.subr.mxu0 0.0
    %452 = vmatpush1.xpose.msra.mxu0 0.0
    %453 = vmatprep.subr.mxu0 0.0
    %454 = vmatpush1.xpose.msra.mxu0 0.0
    %455 = vmatprep.subr.mxu0 0.0
    %456 = vmatpush1.xpose.msra.mxu0 0.0
    %457 = vmatprep.subr.mxu0 0.0
    %458 = vmatpush1.xpose.msra.mxu0 0.0
    %459 = vmatprep.subr.mxu0 0.0
    %460 = vmatpush1.xpose.msra.mxu0 0.0
    %461 = vmatprep.subr.mxu0 0.0
    %462 = vmatpush1.xpose.msra.mxu0 0.0
    %463 = vmatprep.subr.mxu0 0.0
    %464 = vmatpush1.xpose.msra.mxu0 0.0
    %465 = vmatprep.subr.mxu0 0.0
    %466 = vmatpush1.xpose.msra.mxu0 0.0
    %467 = vmatprep.subr.mxu0 0.0
    %468 = vmatpush1.xpose.msra.mxu0 0.0
    %469 = vmatprep.subr.mxu0 0.0
    %470 = vmatpush1.xpose.msra.mxu0 0.0
    %471 = vmatprep.subr.mxu0 0.0
    %472 = vmatpush1.xpose.msra.mxu0 %v439
    %473 = vmatprep.subr.mxu0 0.0
    %474 = vmatpush2.xpose.msra.mxu0 0.0
    %475 = vmatprep.subr.mxu0 0.0
    %476 = vmatpush2.xpose.msra.mxu0 0.0
    %477 = vmatprep.subr.mxu0 0.0
    %478 = vmatpush2.xpose.msra.mxu0 0.0
    %479 = vmatprep.subr.mxu0 0.0
    %480 = vmatpush2.xpose.msra.mxu0 0.0
    %481 = vmatprep.subr.mxu0 0.0
    %482 = vmatpush2.xpose.msra.mxu0 0.0
    %483 = vmatprep.subr.mxu0 0.0
    %484 = vmatpush2.xpose.msra.mxu0 0.0
    %485 = vmatprep.subr.mxu0 0.0
    %486 = vmatpush2.xpose.msra.mxu0 0.0
    %487 = vmatprep.subr.mxu0 0.0
    %488 = vmatpush2.xpose.msra.mxu0 0.0
    %489 = vmatprep.subr.mxu0 0.0
    %490 = vmatpush2.xpose.msra.mxu0 0.0
    %491 = vmatprep.subr.mxu0 0.0
    %492 = vmatpush2.xpose.msra.mxu0 0.0
    %493 = vmatprep.subr.mxu0 0.0
    %494 = vmatpush2.xpose.msra.mxu0 0.0
    %495 = vmatprep.subr.mxu0 0.0
    %496 = vmatpush2.xpose.msra.mxu0 0.0
    %497 = vmatprep.subr.mxu0 0.0
    %498 = vmatpush2.xpose.msra.mxu0 0.0
    %499 = vmatprep.subr.mxu0 0.0
    %500 = vmatpush2.xpose.msra.mxu0 0.0
    %501 = vmatprep.subr.mxu0 0.0
    %502 = vmatpush2.xpose.msra.mxu0 0.0
    %503 = vmatprep.subr.mxu0 0.0
    %504 = vmatpush2.xpose.msra.mxu0 0.0
    %505 = vmatprep.mubr.f32.mxu0 0.0
    %506 = vmatmul.mubr.f32.gmra.mxu0 %v437
    %v507 = vpop.f32.mrf.mxu0
    %v508 = vadd.f32 %v397, %v507
    %v509 = vpop.f32.mrf.mxu0
    %510 = vdwg.mxu0
    %511 = vrot.lane.b32.xlu0 %v377, 96
    %v512 = vpop.permute.xlu0 %511
    %v513 = vsel %vm436, %v377, 0
    %v515 = vsel %vm436, %v512, 0
    %517 = vmatprep.subr.mxu0 0.0
    %518 = vmatpush1.xpose.msra.mxu0 0.0
    %519 = vmatprep.subr.mxu0 0.0
    %520 = vmatpush1.xpose.msra.mxu0 0.0
    %521 = vmatprep.subr.mxu0 0.0
    %522 = vmatpush1.xpose.msra.mxu0 0.0
    %523 = vmatprep.subr.mxu0 0.0
    %524 = vmatpush1.xpose.msra.mxu0 0.0
    %525 = vmatprep.subr.mxu0 0.0
    %526 = vmatpush1.xpose.msra.mxu0 0.0
    %527 = vmatprep.subr.mxu0 0.0
    %528 = vmatpush1.xpose.msra.mxu0 0.0
    %529 = vmatprep.subr.mxu0 0.0
    %530 = vmatpush1.xpose.msra.mxu0 0.0
    %531 = vmatprep.subr.mxu0 0.0
    %532 = vmatpush1.xpose.msra.mxu0 0.0
    %533 = vmatprep.subr.mxu0 0.0
    %534 = vmatpush1.xpose.msra.mxu0 0.0
    %535 = vmatprep.subr.mxu0 0.0
    %536 = vmatpush1.xpose.msra.mxu0 0.0
    %537 = vmatprep.subr.mxu0 0.0
    %538 = vmatpush1.xpose.msra.mxu0 0.0
    %539 = vmatprep.subr.mxu0 0.0
    %540 = vmatpush1.xpose.msra.mxu0 0.0
    %541 = vmatprep.subr.mxu0 0.0
    %542 = vmatpush1.xpose.msra.mxu0 0.0
    %543 = vmatprep.subr.mxu0 0.0
    %544 = vmatpush1.xpose.msra.mxu0 0.0
    %545 = vmatprep.subr.mxu0 0.0
    %546 = vmatpush1.xpose.msra.mxu0 0.0
    %547 = vmatprep.subr.mxu0 0.0
    %548 = vmatpush1.xpose.msra.mxu0 %v515
    %549 = vmatprep.subr.mxu0 0.0
    %550 = vmatpush2.xpose.msra.mxu0 0.0
    %551 = vmatprep.subr.mxu0 0.0
    %552 = vmatpush2.xpose.msra.mxu0 0.0
    %553 = vmatprep.subr.mxu0 0.0
    %554 = vmatpush2.xpose.msra.mxu0 0.0
    %555 = vmatprep.subr.mxu0 0.0
    %556 = vmatpush2.xpose.msra.mxu0 0.0
    %557 = vmatprep.subr.mxu0 0.0
    %558 = vmatpush2.xpose.msra.mxu0 0.0
    %559 = vmatprep.subr.mxu0 0.0
    %560 = vmatpush2.xpose.msra.mxu0 0.0
    %561 = vmatprep.subr.mxu0 0.0
    %562 = vmatpush2.xpose.msra.mxu0 0.0
    %563 = vmatprep.subr.mxu0 0.0
    %564 = vmatpush2.xpose.msra.mxu0 0.0
    %565 = vmatprep.subr.mxu0 0.0
    %566 = vmatpush2.xpose.msra.mxu0 0.0
    %567 = vmatprep.subr.mxu0 0.0
    %568 = vmatpush2.xpose.msra.mxu0 0.0
    %569 = vmatprep.subr.mxu0 0.0
    %570 = vmatpush2.xpose.msra.mxu0 0.0
    %571 = vmatprep.subr.mxu0 0.0
    %572 = vmatpush2.xpose.msra.mxu0 0.0
    %573 = vmatprep.subr.mxu0 0.0
    %574 = vmatpush2.xpose.msra.mxu0 0.0
    %575 = vmatprep.subr.mxu0 0.0
    %576 = vmatpush2.xpose.msra.mxu0 0.0
    %577 = vmatprep.subr.mxu0 0.0
    %578 = vmatpush2.xpose.msra.mxu0 0.0
    %579 = vmatprep.subr.mxu0 0.0
    %580 = vmatpush2.xpose.msra.mxu0 0.0
    %581 = vmatprep.mubr.f32.mxu0 0.0
    %582 = vmatmul.mubr.f32.gmra.mxu0 %v513
    %v583 = vpop.f32.mrf.mxu0
    %v584 = vadd.f32 %v401, %v583
    %v585 = vpop.f32.mrf.mxu0
    %586 = vdwg.mxu0
    %587 = vrot.lane.b32.xlu0 %v383, 96
    %v588 = vpop.permute.xlu0 %587
    %v589 = vsel %vm436, %v383, 0
    %v591 = vsel %vm436, %v588, 0
    %593 = vmatprep.subr.mxu0 0.0
    %594 = vmatpush1.xpose.msra.mxu0 0.0
    %595 = vmatprep.subr.mxu0 0.0
    %596 = vmatpush1.xpose.msra.mxu0 0.0
    %597 = vmatprep.subr.mxu0 0.0
    %598 = vmatpush1.xpose.msra.mxu0 0.0
    %599 = vmatprep.subr.mxu0 0.0
    %600 = vmatpush1.xpose.msra.mxu0 0.0
    %601 = vmatprep.subr.mxu0 0.0
    %602 = vmatpush1.xpose.msra.mxu0 0.0
    %603 = vmatprep.subr.mxu0 0.0
    %604 = vmatpush1.xpose.msra.mxu0 0.0
    %605 = vmatprep.subr.mxu0 0.0
    %606 = vmatpush1.xpose.msra.mxu0 0.0
    %607 = vmatprep.subr.mxu0 0.0
    %608 = vmatpush1.xpose.msra.mxu0 0.0
    %609 = vmatprep.subr.mxu0 0.0
    %610 = vmatpush1.xpose.msra.mxu0 0.0
    %611 = vmatprep.subr.mxu0 0.0
    %612 = vmatpush1.xpose.msra.mxu0 0.0
    %613 = vmatprep.subr.mxu0 0.0
    %614 = vmatpush1.xpose.msra.mxu0 0.0
    %615 = vmatprep.subr.mxu0 0.0
    %616 = vmatpush1.xpose.msra.mxu0 0.0
    %617 = vmatprep.subr.mxu0 0.0
    %618 = vmatpush1.xpose.msra.mxu0 0.0
    %619 = vmatprep.subr.mxu0 0.0
    %620 = vmatpush1.xpose.msra.mxu0 0.0
    %621 = vmatprep.subr.mxu0 0.0
    %622 = vmatpush1.xpose.msra.mxu0 0.0
    %623 = vmatprep.subr.mxu0 0.0
    %624 = vmatpush1.xpose.msra.mxu0 %v591
    %625 = vmatprep.subr.mxu0 0.0
    %626 = vmatpush2.xpose.msra.mxu0 0.0
    %627 = vmatprep.subr.mxu0 0.0
    %628 = vmatpush2.xpose.msra.mxu0 0.0
    %629 = vmatprep.subr.mxu0 0.0
    %630 = vmatpush2.xpose.msra.mxu0 0.0
    %631 = vmatprep.subr.mxu0 0.0
    %632 = vmatpush2.xpose.msra.mxu0 0.0
    %633 = vmatprep.subr.mxu0 0.0
    %634 = vmatpush2.xpose.msra.mxu0 0.0
    %635 = vmatprep.subr.mxu0 0.0
    %636 = vmatpush2.xpose.msra.mxu0 0.0
    %637 = vmatprep.subr.mxu0 0.0
    %638 = vmatpush2.xpose.msra.mxu0 0.0
    %639 = vmatprep.subr.mxu0 0.0
    %640 = vmatpush2.xpose.msra.mxu0 0.0
    %641 = vmatprep.subr.mxu0 0.0
    %642 = vmatpush2.xpose.msra.mxu0 0.0
    %643 = vmatprep.subr.mxu0 0.0
    %644 = vmatpush2.xpose.msra.mxu0 0.0
    %645 = vmatprep.subr.mxu0 0.0
    %646 = vmatpush2.xpose.msra.mxu0 0.0
    %647 = vmatprep.subr.mxu0 0.0
    %648 = vmatpush2.xpose.msra.mxu0 0.0
    %649 = vmatprep.subr.mxu0 0.0
    %650 = vmatpush2.xpose.msra.mxu0 0.0
    %651 = vmatprep.subr.mxu0 0.0
    %652 = vmatpush2.xpose.msra.mxu0 0.0
    %653 = vmatprep.subr.mxu0 0.0
    %654 = vmatpush2.xpose.msra.mxu0 0.0
    %655 = vmatprep.subr.mxu0 0.0
    %656 = vmatpush2.xpose.msra.mxu0 0.0
    %657 = vmatprep.mubr.f32.mxu0 0.0
    %658 = vmatmul.mubr.f32.gmra.mxu0 %v589
    %v659 = vpop.f32.mrf.mxu0
    %v660 = vadd.f32 %v405, %v659
    %v661 = vpop.f32.mrf.mxu0
    %662 = vdwg.mxu0
    %663 = vrot.lane.b32.xlu0 %v385, 96
    %v664 = vpop.permute.xlu0 %663
    %v665 = vsel %vm436, %v385, 0
    %v667 = vsel %vm436, %v664, 0
    %669 = vmatprep.subr.mxu0 0.0
    %670 = vmatpush1.xpose.msra.mxu0 0.0
    %671 = vmatprep.subr.mxu0 0.0
    %672 = vmatpush1.xpose.msra.mxu0 0.0
    %673 = vmatprep.subr.mxu0 0.0
    %674 = vmatpush1.xpose.msra.mxu0 0.0
    %675 = vmatprep.subr.mxu0 0.0
    %676 = vmatpush1.xpose.msra.mxu0 0.0
    %677 = vmatprep.subr.mxu0 0.0
    %678 = vmatpush1.xpose.msra.mxu0 0.0
    %679 = vmatprep.subr.mxu0 0.0
    %680 = vmatpush1.xpose.msra.mxu0 0.0
    %681 = vmatprep.subr.mxu0 0.0
    %682 = vmatpush1.xpose.msra.mxu0 0.0
    %683 = vmatprep.subr.mxu0 0.0
    %684 = vmatpush1.xpose.msra.mxu0 0.0
    %685 = vmatprep.subr.mxu0 0.0
    %686 = vmatpush1.xpose.msra.mxu0 0.0
    %687 = vmatprep.subr.mxu0 0.0
    %688 = vmatpush1.xpose.msra.mxu0 0.0
    %689 = vmatprep.subr.mxu0 0.0
    %690 = vmatpush1.xpose.msra.mxu0 0.0
    %691 = vmatprep.subr.mxu0 0.0
    %692 = vmatpush1.xpose.msra.mxu0 0.0
    %693 = vmatprep.subr.mxu0 0.0
    %694 = vmatpush1.xpose.msra.mxu0 0.0
    %695 = vmatprep.subr.mxu0 0.0
    %696 = vmatpush1.xpose.msra.mxu0 0.0
    %697 = vmatprep.subr.mxu0 0.0
    %698 = vmatpush1.xpose.msra.mxu0 0.0
    %699 = vmatprep.subr.mxu0 0.0
    %700 = vmatpush1.xpose.msra.mxu0 %v667
    %701 = vmatprep.subr.mxu0 0.0
    %702 = vmatpush2.xpose.msra.mxu0 0.0
    %703 = vmatprep.subr.mxu0 0.0
    %704 = vmatpush2.xpose.msra.mxu0 0.0
    %705 = vmatprep.subr.mxu0 0.0
    %706 = vmatpush2.xpose.msra.mxu0 0.0
    %707 = vmatprep.subr.mxu0 0.0
    %708 = vmatpush2.xpose.msra.mxu0 0.0
    %709 = vmatprep.subr.mxu0 0.0
    %710 = vmatpush2.xpose.msra.mxu0 0.0
    %711 = vmatprep.subr.mxu0 0.0
    %712 = vmatpush2.xpose.msra.mxu0 0.0
    %713 = vmatprep.subr.mxu0 0.0
    %714 = vmatpush2.xpose.msra.mxu0 0.0
    %715 = vmatprep.subr.mxu0 0.0
    %716 = vmatpush2.xpose.msra.mxu0 0.0
    %717 = vmatprep.subr.mxu0 0.0
    %718 = vmatpush2.xpose.msra.mxu0 0.0
    %719 = vmatprep.subr.mxu0 0.0
    %720 = vmatpush2.xpose.msra.mxu0 0.0
    %721 = vmatprep.subr.mxu0 0.0
    %722 = vmatpush2.xpose.msra.mxu0 0.0
    %723 = vmatprep.subr.mxu0 0.0
    %724 = vmatpush2.xpose.msra.mxu0 0.0
    %725 = vmatprep.subr.mxu0 0.0
    %726 = vmatpush2.xpose.msra.mxu0 0.0
    %727 = vmatprep.subr.mxu0 0.0
    %728 = vmatpush2.xpose.msra.mxu0 0.0
    %729 = vmatprep.subr.mxu0 0.0
    %730 = vmatpush2.xpose.msra.mxu0 0.0
    %731 = vmatprep.subr.mxu0 0.0
    %732 = vmatpush2.xpose.msra.mxu0 0.0
    %733 = vmatprep.mubr.f32.mxu0 0.0
    %734 = vmatmul.mubr.f32.gmra.mxu0 %v665
    %v735 = vpop.f32.mrf.mxu0
    %v736 = vadd.f32 %v409, %v735
    %v737 = vpop.f32.mrf.mxu0
    %738 = vdwg.mxu0
    %739 = vrot.lane.b32.xlu0 %v387, 96
    %v740 = vpop.permute.xlu0 %739
    %v741 = vsel %vm436, %v387, 0
    %v743 = vsel %vm436, %v740, 0
    %745 = vmatprep.subr.mxu0 0.0
    %746 = vmatpush1.xpose.msra.mxu0 0.0
    %747 = vmatprep.subr.mxu0 0.0
    %748 = vmatpush1.xpose.msra.mxu0 0.0
    %749 = vmatprep.subr.mxu0 0.0
    %750 = vmatpush1.xpose.msra.mxu0 0.0
    %751 = vmatprep.subr.mxu0 0.0
    %752 = vmatpush1.xpose.msra.mxu0 0.0
    %753 = vmatprep.subr.mxu0 0.0
    %754 = vmatpush1.xpose.msra.mxu0 0.0
    %755 = vmatprep.subr.mxu0 0.0
    %756 = vmatpush1.xpose.msra.mxu0 0.0
    %757 = vmatprep.subr.mxu0 0.0
    %758 = vmatpush1.xpose.msra.mxu0 0.0
    %759 = vmatprep.subr.mxu0 0.0
    %760 = vmatpush1.xpose.msra.mxu0 0.0
    %761 = vmatprep.subr.mxu0 0.0
    %762 = vmatpush1.xpose.msra.mxu0 0.0
    %763 = vmatprep.subr.mxu0 0.0
    %764 = vmatpush1.xpose.msra.mxu0 0.0
    %765 = vmatprep.subr.mxu0 0.0
    %766 = vmatpush1.xpose.msra.mxu0 0.0
    %767 = vmatprep.subr.mxu0 0.0
    %768 = vmatpush1.xpose.msra.mxu0 0.0
    %769 = vmatprep.subr.mxu0 0.0
    %770 = vmatpush1.xpose.msra.mxu0 0.0
    %771 = vmatprep.subr.mxu0 0.0
    %772 = vmatpush1.xpose.msra.mxu0 0.0
    %773 = vmatprep.subr.mxu0 0.0
    %774 = vmatpush1.xpose.msra.mxu0 0.0
    %775 = vmatprep.subr.mxu0 0.0
    %776 = vmatpush1.xpose.msra.mxu0 %v743
    %777 = vmatprep.subr.mxu0 0.0
    %778 = vmatpush2.xpose.msra.mxu0 0.0
    %779 = vmatprep.subr.mxu0 0.0
    %780 = vmatpush2.xpose.msra.mxu0 0.0
    %781 = vmatprep.subr.mxu0 0.0
    %782 = vmatpush2.xpose.msra.mxu0 0.0
    %783 = vmatprep.subr.mxu0 0.0
    %784 = vmatpush2.xpose.msra.mxu0 0.0
    %785 = vmatprep.subr.mxu0 0.0
    %786 = vmatpush2.xpose.msra.mxu0 0.0
    %787 = vmatprep.subr.mxu0 0.0
    %788 = vmatpush2.xpose.msra.mxu0 0.0
    %789 = vmatprep.subr.mxu0 0.0
    %790 = vmatpush2.xpose.msra.mxu0 0.0
    %791 = vmatprep.subr.mxu0 0.0
    %792 = vmatpush2.xpose.msra.mxu0 0.0
    %793 = vmatprep.subr.mxu0 0.0
    %794 = vmatpush2.xpose.msra.mxu0 0.0
    %795 = vmatprep.subr.mxu0 0.0
    %796 = vmatpush2.xpose.msra.mxu0 0.0
    %797 = vmatprep.subr.mxu0 0.0
    %798 = vmatpush2.xpose.msra.mxu0 0.0
    %799 = vmatprep.subr.mxu0 0.0
    %800 = vmatpush2.xpose.msra.mxu0 0.0
    %801 = vmatprep.subr.mxu0 0.0
    %802 = vmatpush2.xpose.msra.mxu0 0.0
    %803 = vmatprep.subr.mxu0 0.0
    %804 = vmatpush2.xpose.msra.mxu0 0.0
    %805 = vmatprep.subr.mxu0 0.0
    %806 = vmatpush2.xpose.msra.mxu0 0.0
    %807 = vmatprep.subr.mxu0 0.0
    %808 = vmatpush2.xpose.msra.mxu0 0.0
    %809 = vmatprep.mubr.f32.mxu0 0.0
    %810 = vmatmul.mubr.f32.gmra.mxu0 %v741
    %v811 = vpop.f32.mrf.mxu0
    %v812 = vadd.f32 %v413, %v811
    %v813 = vpop.f32.mrf.mxu0
    %814 = vdwg.mxu0
    %815 = vrot.lane.b32.xlu0 %v389, 96
    %v816 = vpop.permute.xlu0 %815
    %v817 = vsel %vm436, %v389, 0
    %v819 = vsel %vm436, %v816, 0
    %821 = vmatprep.subr.mxu0 0.0
    %822 = vmatpush1.xpose.msra.mxu0 0.0
    %823 = vmatprep.subr.mxu0 0.0
    %824 = vmatpush1.xpose.msra.mxu0 0.0
    %825 = vmatprep.subr.mxu0 0.0
    %826 = vmatpush1.xpose.msra.mxu0 0.0
    %827 = vmatprep.subr.mxu0 0.0
    %828 = vmatpush1.xpose.msra.mxu0 0.0
    %829 = vmatprep.subr.mxu0 0.0
    %830 = vmatpush1.xpose.msra.mxu0 0.0
    %831 = vmatprep.subr.mxu0 0.0
    %832 = vmatpush1.xpose.msra.mxu0 0.0
    %833 = vmatprep.subr.mxu0 0.0
    %834 = vmatpush1.xpose.msra.mxu0 0.0
    %835 = vmatprep.subr.mxu0 0.0
    %836 = vmatpush1.xpose.msra.mxu0 0.0
    %837 = vmatprep.subr.mxu0 0.0
    %838 = vmatpush1.xpose.msra.mxu0 0.0
    %839 = vmatprep.subr.mxu0 0.0
    %840 = vmatpush1.xpose.msra.mxu0 0.0
    %841 = vmatprep.subr.mxu0 0.0
    %842 = vmatpush1.xpose.msra.mxu0 0.0
    %843 = vmatprep.subr.mxu0 0.0
    %844 = vmatpush1.xpose.msra.mxu0 0.0
    %845 = vmatprep.subr.mxu0 0.0
    %846 = vmatpush1.xpose.msra.mxu0 0.0
    %847 = vmatprep.subr.mxu0 0.0
    %848 = vmatpush1.xpose.msra.mxu0 0.0
    %849 = vmatprep.subr.mxu0 0.0
    %850 = vmatpush1.xpose.msra.mxu0 0.0
    %851 = vmatprep.subr.mxu0 0.0
    %852 = vmatpush1.xpose.msra.mxu0 %v819
    %853 = vmatprep.subr.mxu0 0.0
    %854 = vmatpush2.xpose.msra.mxu0 0.0
    %855 = vmatprep.subr.mxu0 0.0
    %856 = vmatpush2.xpose.msra.mxu0 0.0
    %857 = vmatprep.subr.mxu0 0.0
    %858 = vmatpush2.xpose.msra.mxu0 0.0
    %859 = vmatprep.subr.mxu0 0.0
    %860 = vmatpush2.xpose.msra.mxu0 0.0
    %861 = vmatprep.subr.mxu0 0.0
    %862 = vmatpush2.xpose.msra.mxu0 0.0
    %863 = vmatprep.subr.mxu0 0.0
    %864 = vmatpush2.xpose.msra.mxu0 0.0
    %865 = vmatprep.subr.mxu0 0.0
    %866 = vmatpush2.xpose.msra.mxu0 0.0
    %867 = vmatprep.subr.mxu0 0.0
    %868 = vmatpush2.xpose.msra.mxu0 0.0
    %869 = vmatprep.subr.mxu0 0.0
    %870 = vmatpush2.xpose.msra.mxu0 0.0
    %871 = vmatprep.subr.mxu0 0.0
    %872 = vmatpush2.xpose.msra.mxu0 0.0
    %873 = vmatprep.subr.mxu0 0.0
    %874 = vmatpush2.xpose.msra.mxu0 0.0
    %875 = vmatprep.subr.mxu0 0.0
    %876 = vmatpush2.xpose.msra.mxu0 0.0
    %877 = vmatprep.subr.mxu0 0.0
    %878 = vmatpush2.xpose.msra.mxu0 0.0
    %879 = vmatprep.subr.mxu0 0.0
    %880 = vmatpush2.xpose.msra.mxu0 0.0
    %881 = vmatprep.subr.mxu0 0.0
    %882 = vmatpush2.xpose.msra.mxu0 0.0
    %883 = vmatprep.subr.mxu0 0.0
    %884 = vmatpush2.xpose.msra.mxu0 0.0
    %885 = vmatprep.mubr.f32.mxu0 0.0
    %886 = vmatmul.mubr.f32.gmra.mxu0 %v817
    %v887 = vpop.f32.mrf.mxu0
    %v888 = vadd.f32 %v417, %v887
    %v889 = vpop.f32.mrf.mxu0
    %890 = vdwg.mxu0
    %891 = vrot.lane.b32.xlu0 %v391, 96
    %v892 = vpop.permute.xlu0 %891
    %v893 = vsel %vm436, %v391, 0
    %v895 = vsel %vm436, %v892, 0
    %897 = vmatprep.subr.mxu0 0.0
    %898 = vmatpush1.xpose.msra.mxu0 0.0
    %899 = vmatprep.subr.mxu0 0.0
    %900 = vmatpush1.xpose.msra.mxu0 0.0
    %901 = vmatprep.subr.mxu0 0.0
    %902 = vmatpush1.xpose.msra.mxu0 0.0
    %903 = vmatprep.subr.mxu0 0.0
    %904 = vmatpush1.xpose.msra.mxu0 0.0
    %905 = vmatprep.subr.mxu0 0.0
    %906 = vmatpush1.xpose.msra.mxu0 0.0
    %907 = vmatprep.subr.mxu0 0.0
    %908 = vmatpush1.xpose.msra.mxu0 0.0
    %909 = vmatprep.subr.mxu0 0.0
    %910 = vmatpush1.xpose.msra.mxu0 0.0
    %911 = vmatprep.subr.mxu0 0.0
    %912 = vmatpush1.xpose.msra.mxu0 0.0
    %913 = vmatprep.subr.mxu0 0.0
    %914 = vmatpush1.xpose.msra.mxu0 0.0
    %915 = vmatprep.subr.mxu0 0.0
    %916 = vmatpush1.xpose.msra.mxu0 0.0
    %917 = vmatprep.subr.mxu0 0.0
    %918 = vmatpush1.xpose.msra.mxu0 0.0
    %919 = vmatprep.subr.mxu0 0.0
    %920 = vmatpush1.xpose.msra.mxu0 0.0
    %921 = vmatprep.subr.mxu0 0.0
    %922 = vmatpush1.xpose.msra.mxu0 0.0
    %923 = vmatprep.subr.mxu0 0.0
    %924 = vmatpush1.xpose.msra.mxu0 0.0
    %925 = vmatprep.subr.mxu0 0.0
    %926 = vmatpush1.xpose.msra.mxu0 0.0
    %927 = vmatprep.subr.mxu0 0.0
    %928 = vmatpush1.xpose.msra.mxu0 %v895
    %929 = vmatprep.subr.mxu0 0.0
    %930 = vmatpush2.xpose.msra.mxu0 0.0
    %931 = vmatprep.subr.mxu0 0.0
    %932 = vmatpush2.xpose.msra.mxu0 0.0
    %933 = vmatprep.subr.mxu0 0.0
    %934 = vmatpush2.xpose.msra.mxu0 0.0
    %935 = vmatprep.subr.mxu0 0.0
    %936 = vmatpush2.xpose.msra.mxu0 0.0
    %937 = vmatprep.subr.mxu0 0.0
    %938 = vmatpush2.xpose.msra.mxu0 0.0
    %939 = vmatprep.subr.mxu0 0.0
    %940 = vmatpush2.xpose.msra.mxu0 0.0
    %941 = vmatprep.subr.mxu0 0.0
    %942 = vmatpush2.xpose.msra.mxu0 0.0
    %943 = vmatprep.subr.mxu0 0.0
    %944 = vmatpush2.xpose.msra.mxu0 0.0
    %945 = vmatprep.subr.mxu0 0.0
    %946 = vmatpush2.xpose.msra.mxu0 0.0
    %947 = vmatprep.subr.mxu0 0.0
    %948 = vmatpush2.xpose.msra.mxu0 0.0
    %949 = vmatprep.subr.mxu0 0.0
    %950 = vmatpush2.xpose.msra.mxu0 0.0
    %951 = vmatprep.subr.mxu0 0.0
    %952 = vmatpush2.xpose.msra.mxu0 0.0
    %953 = vmatprep.subr.mxu0 0.0
    %954 = vmatpush2.xpose.msra.mxu0 0.0
    %955 = vmatprep.subr.mxu0 0.0
    %956 = vmatpush2.xpose.msra.mxu0 0.0
    %957 = vmatprep.subr.mxu0 0.0
    %958 = vmatpush2.xpose.msra.mxu0 0.0
    %959 = vmatprep.subr.mxu0 0.0
    %960 = vmatpush2.xpose.msra.mxu0 0.0
    %961 = vmatprep.mubr.f32.mxu0 0.0
    %962 = vmatmul.mubr.f32.gmra.mxu0 %v893
    %v963 = vpop.f32.mrf.mxu0
    %v964 = vadd.f32 %v421, %v963
    %v965 = vpop.f32.mrf.mxu0
    %966 = vdwg.mxu0
    %967 = vrot.lane.b32.xlu0 %v393, 96
    %v968 = vpop.permute.xlu0 %967
    %v969 = vsel %vm436, %v393, 0
    %v971 = vsel %vm436, %v968, 0
    %973 = vmatprep.subr.mxu0 0.0
    %974 = vmatpush1.xpose.msra.mxu0 0.0
    %975 = vmatprep.subr.mxu0 0.0
    %976 = vmatpush1.xpose.msra.mxu0 0.0
    %977 = vmatprep.subr.mxu0 0.0
    %978 = vmatpush1.xpose.msra.mxu0 0.0
    %979 = vmatprep.subr.mxu0 0.0
    %980 = vmatpush1.xpose.msra.mxu0 0.0
    %981 = vmatprep.subr.mxu0 0.0
    %982 = vmatpush1.xpose.msra.mxu0 0.0
    %983 = vmatprep.subr.mxu0 0.0
    %984 = vmatpush1.xpose.msra.mxu0 0.0
    %985 = vmatprep.subr.mxu0 0.0
    %986 = vmatpush1.xpose.msra.mxu0 0.0
    %987 = vmatprep.subr.mxu0 0.0
    %988 = vmatpush1.xpose.msra.mxu0 0.0
    %989 = vmatprep.subr.mxu0 0.0
    %990 = vmatpush1.xpose.msra.mxu0 0.0
    %991 = vmatprep.subr.mxu0 0.0
    %992 = vmatpush1.xpose.msra.mxu0 0.0
    %993 = vmatprep.subr.mxu0 0.0
    %994 = vmatpush1.xpose.msra.mxu0 0.0
    %995 = vmatprep.subr.mxu0 0.0
    %996 = vmatpush1.xpose.msra.mxu0 0.0
    %997 = vmatprep.subr.mxu0 0.0
    %998 = vmatpush1.xpose.msra.mxu0 0.0
    %999 = vmatprep.subr.mxu0 0.0
    %1000 = vmatpush1.xpose.msra.mxu0 0.0
    %1001 = vmatprep.subr.mxu0 0.0
    %1002 = vmatpush1.xpose.msra.mxu0 0.0
    %1003 = vmatprep.subr.mxu0 0.0
    %1004 = vmatpush1.xpose.msra.mxu0 %v971
    %1005 = vmatprep.subr.mxu0 0.0
    %1006 = vmatpush2.xpose.msra.mxu0 0.0
    %1007 = vmatprep.subr.mxu0 0.0
    %1008 = vmatpush2.xpose.msra.mxu0 0.0
    %1009 = vmatprep.subr.mxu0 0.0
    %1010 = vmatpush2.xpose.msra.mxu0 0.0
    %1011 = vmatprep.subr.mxu0 0.0
    %1012 = vmatpush2.xpose.msra.mxu0 0.0
    %1013 = vmatprep.subr.mxu0 0.0
    %1014 = vmatpush2.xpose.msra.mxu0 0.0
    %1015 = vmatprep.subr.mxu0 0.0
    %1016 = vmatpush2.xpose.msra.mxu0 0.0
    %1017 = vmatprep.subr.mxu0 0.0
    %1018 = vmatpush2.xpose.msra.mxu0 0.0
    %1019 = vmatprep.subr.mxu0 0.0
    %1020 = vmatpush2.xpose.msra.mxu0 0.0
    %1021 = vmatprep.subr.mxu0 0.0
    %1022 = vmatpush2.xpose.msra.mxu0 0.0
    %1023 = vmatprep.subr.mxu0 0.0
    %1024 = vmatpush2.xpose.msra.mxu0 0.0
    %1025 = vmatprep.subr.mxu0 0.0
    %1026 = vmatpush2.xpose.msra.mxu0 0.0
    %1027 = vmatprep.subr.mxu0 0.0
    %1028 = vmatpush2.xpose.msra.mxu0 0.0
    %1029 = vmatprep.subr.mxu0 0.0
    %1030 = vmatpush2.xpose.msra.mxu0 0.0
    %1031 = vmatprep.subr.mxu0 0.0
    %1032 = vmatpush2.xpose.msra.mxu0 0.0
    %1033 = vmatprep.subr.mxu0 0.0
    %1034 = vmatpush2.xpose.msra.mxu0 0.0
    %1035 = vmatprep.subr.mxu0 0.0
    %1036 = vmatpush2.xpose.msra.mxu0 0.0
    %1037 = vmatprep.mubr.f32.mxu0 0.0
    %1038 = vmatmul.mubr.f32.gmra.mxu0 %v969
    %v1039 = vpop.f32.mrf.mxu0
    %v1040 = vadd.f32 %v425, %v1039
    %v1041 = vpop.f32.mrf.mxu0
    %1042 = vdwg.mxu0
    %v1043 = vsel %vm436, %v508, -inf
    %1044 = vmax.xlane.f32.xlu0 %v1043
    %v1045 = vpop.xlane.xlu0 %1044
    %v1046 = vsel %vm436, %v584, -inf
    %1047 = vmax.xlane.f32.xlu0 %v1046
    %v1048 = vpop.xlane.xlu0 %1047
    %v1049 = vsel %vm436, %v660, -inf
    %1050 = vmax.xlane.f32.xlu0 %v1049
    %v1051 = vpop.xlane.xlu0 %1050
    %v1052 = vsel %vm436, %v736, -inf
    %1053 = vmax.xlane.f32.xlu0 %v1052
    %v1054 = vpop.xlane.xlu0 %1053
    %v1055 = vsel %vm436, %v812, -inf
    %1056 = vmax.xlane.f32.xlu0 %v1055
    %v1057 = vpop.xlane.xlu0 %1056
    %v1058 = vsel %vm436, %v888, -inf
    %1059 = vmax.xlane.f32.xlu0 %v1058
    %v1060 = vpop.xlane.xlu0 %1059
    %v1061 = vsel %vm436, %v964, -inf
    %1062 = vmax.xlane.f32.xlu0 %v1061
    %v1063 = vpop.xlane.xlu0 %1062
    %v1064 = vsel %vm436, %v1040, -inf
    %1065 = vmax.xlane.f32.xlu0 %v1064
    %v1066 = vpop.xlane.xlu0 %1065
    %v1067 = vsub.f32 %v508, %v1045
    %v1068 = vsub.f32 %v584, %v1048
    %v1069 = vsub.f32 %v660, %v1051
    %v1070 = vsub.f32 %v736, %v1054
    %v1071 = vsub.f32 %v812, %v1057
    %v1072 = vsub.f32 %v888, %v1060
    %v1073 = vsub.f32 %v964, %v1063
    %v1074 = vsub.f32 %v1040, %v1066
    %v1075 = vmul.f32 %v1067, 1.442695
    %v1076 = vpow.pop %v1075
    %v1077 = vmul.f32 %v1068, 1.442695
    %v1078 = vpow.pop %v1077
    %v1079 = vmul.f32 %v1069, 1.442695
    %v1080 = vpow.pop %v1079
    %v1081 = vmul.f32 %v1070, 1.442695
    %v1082 = vpow.pop %v1081
    %v1083 = vmul.f32 %v1071, 1.442695
    %v1084 = vpow.pop %v1083
    %v1085 = vmul.f32 %v1072, 1.442695
    %v1086 = vpow.pop %v1085
    %v1087 = vmul.f32 %v1073, 1.442695
    %v1088 = vpow.pop %v1087
    %v1089 = vmul.f32 %v1074, 1.442695
    %v1090 = vpow.pop %v1089
    %v1091 = vsel %vm436, %v1076, 0.0
    %1092 = vadd.xlane.f32.xlu0 %v1091
    %v1093 = vpop.xlane.xlu0 %1092
    %v1094 = vsel %vm436, %v1078, 0.0
    %1095 = vadd.xlane.f32.xlu0 %v1094
    %v1096 = vpop.xlane.xlu0 %1095
    %v1097 = vsel %vm436, %v1080, 0.0
    %1098 = vadd.xlane.f32.xlu0 %v1097
    %v1099 = vpop.xlane.xlu0 %1098
    %v1100 = vsel %vm436, %v1082, 0.0
    %1101 = vadd.xlane.f32.xlu0 %v1100
    %v1102 = vpop.xlane.xlu0 %1101
    %v1103 = vsel %vm436, %v1084, 0.0
    %1104 = vadd.xlane.f32.xlu0 %v1103
    %v1105 = vpop.xlane.xlu0 %1104
    %v1106 = vsel %vm436, %v1086, 0.0
    %1107 = vadd.xlane.f32.xlu0 %v1106
    %v1108 = vpop.xlane.xlu0 %1107
    %v1109 = vsel %vm436, %v1088, 0.0
    %1110 = vadd.xlane.f32.xlu0 %v1109
    %v1111 = vpop.xlane.xlu0 %1110
    %v1112 = vsel %vm436, %v1090, 0.0
    %1113 = vadd.xlane.f32.xlu0 %v1112
    %v1114 = vpop.xlane.xlu0 %1113
    %1115 = vrot.lane.b32.xlu0 %v372, 64
    %v1116 = vpop.permute.xlu0 %1115
    %v1119 = vsel %vm436, %v1076, 0
    %1121 = vmatprep.subr.mxu0 0.0
    %1122 = vmatpush1.msra.mxu0 0.0
    %1123 = vmatprep.subr.mxu0 0.0
    %1124 = vmatpush1.msra.mxu0 0.0
    %1125 = vmatprep.subr.mxu0 0.0
    %1126 = vmatpush1.msra.mxu0 0.0
    %1127 = vmatprep.subr.mxu0 0.0
    %1128 = vmatpush1.msra.mxu0 0.0
    %1129 = vmatprep.subr.mxu0 0.0
    %1130 = vmatpush1.msra.mxu0 0.0
    %1131 = vmatprep.subr.mxu0 0.0
    %1132 = vmatpush1.msra.mxu0 0.0
    %1133 = vmatprep.subr.mxu0 0.0
    %1134 = vmatpush1.msra.mxu0 0.0
    %1135 = vmatprep.subr.mxu0 0.0
    %1136 = vmatpush1.msra.mxu0 0.0
    %1137 = vmatprep.subr.mxu0 0.0
    %1138 = vmatpush1.msra.mxu0 0.0
    %1139 = vmatprep.subr.mxu0 0.0
    %1140 = vmatpush1.msra.mxu0 0.0
    %1141 = vmatprep.subr.mxu0 0.0
    %1142 = vmatpush1.msra.mxu0 0.0
    %1143 = vmatprep.subr.mxu0 0.0
    %1144 = vmatpush1.msra.mxu0 0.0
    %1145 = vmatprep.subr.mxu0 0.0
    %1146 = vmatpush1.msra.mxu0 0.0
    %1147 = vmatprep.subr.mxu0 0.0
    %1148 = vmatpush1.msra.mxu0 0.0
    %1149 = vmatprep.subr.mxu0 0.0
    %1150 = vmatpush1.msra.mxu0 0.0
    %1151 = vmatprep.subr.mxu0 0.0
    %1152 = vmatpush1.msra.mxu0 %v1116
    %1153 = vmatprep.subr.mxu0 0.0
    %1154 = vmatpush2.msra.mxu0 0.0
    %1155 = vmatprep.subr.mxu0 0.0
    %1156 = vmatpush2.msra.mxu0 0.0
    %1157 = vmatprep.subr.mxu0 0.0
    %1158 = vmatpush2.msra.mxu0 0.0
    %1159 = vmatprep.subr.mxu0 0.0
    %1160 = vmatpush2.msra.mxu0 0.0
    %1161 = vmatprep.subr.mxu0 0.0
    %1162 = vmatpush2.msra.mxu0 0.0
    %1163 = vmatprep.subr.mxu0 0.0
    %1164 = vmatpush2.msra.mxu0 0.0
    %1165 = vmatprep.subr.mxu0 0.0
    %1166 = vmatpush2.msra.mxu0 0.0
    %1167 = vmatprep.subr.mxu0 0.0
    %1168 = vmatpush2.msra.mxu0 0.0
    %1169 = vmatprep.subr.mxu0 0.0
    %1170 = vmatpush2.msra.mxu0 0.0
    %1171 = vmatprep.subr.mxu0 0.0
    %1172 = vmatpush2.msra.mxu0 0.0
    %1173 = vmatprep.subr.mxu0 0.0
    %1174 = vmatpush2.msra.mxu0 0.0
    %1175 = vmatprep.subr.mxu0 0.0
    %1176 = vmatpush2.msra.mxu0 0.0
    %1177 = vmatprep.subr.mxu0 0.0
    %1178 = vmatpush2.msra.mxu0 0.0
    %1179 = vmatprep.subr.mxu0 0.0
    %1180 = vmatpush2.msra.mxu0 0.0
    %1181 = vmatprep.subr.mxu0 0.0
    %1182 = vmatpush2.msra.mxu0 0.0
    %1183 = vmatprep.subr.mxu0 0.0
    %1184 = vmatpush2.msra.mxu0 0.0
    %1185 = vmatprep.mubr.f32.mxu0 0.0
    %1186 = vmatmul.mubr.f32.gmra.mxu0 %v1119
    %v1187 = vpop.f32.mrf.mxu0
    %v1188 = vadd.f32 0.0, %v1187
    %v1189 = vpop.f32.mrf.mxu0
    %1190 = vdwg.mxu0
    %1191 = vrot.lane.b32.xlu0 %v377, 64
    %v1192 = vpop.permute.xlu0 %1191
    %v1195 = vsel %vm436, %v1078, 0
    %1197 = vmatprep.subr.mxu0 0.0
    %1198 = vmatpush1.msra.mxu0 0.0
    %1199 = vmatprep.subr.mxu0 0.0
    %1200 = vmatpush1.msra.mxu0 0.0
    %1201 = vmatprep.subr.mxu0 0.0
    %1202 = vmatpush1.msra.mxu0 0.0
    %1203 = vmatprep.subr.mxu0 0.0
    %1204 = vmatpush1.msra.mxu0 0.0
    %1205 = vmatprep.subr.mxu0 0.0
    %1206 = vmatpush1.msra.mxu0 0.0
    %1207 = vmatprep.subr.mxu0 0.0
    %1208 = vmatpush1.msra.mxu0 0.0
    %1209 = vmatprep.subr.mxu0 0.0
    %1210 = vmatpush1.msra.mxu0 0.0
    %1211 = vmatprep.subr.mxu0 0.0
    %1212 = vmatpush1.msra.mxu0 0.0
    %1213 = vmatprep.subr.mxu0 0.0
    %1214 = vmatpush1.msra.mxu0 0.0
    %1215 = vmatprep.subr.mxu0 0.0
    %1216 = vmatpush1.msra.mxu0 0.0
    %1217 = vmatprep.subr.mxu0 0.0
    %1218 = vmatpush1.msra.mxu0 0.0
    %1219 = vmatprep.subr.mxu0 0.0
    %1220 = vmatpush1.msra.mxu0 0.0
    %1221 = vmatprep.subr.mxu0 0.0
    %1222 = vmatpush1.msra.mxu0 0.0
    %1223 = vmatprep.subr.mxu0 0.0
    %1224 = vmatpush1.msra.mxu0 0.0
    %1225 = vmatprep.subr.mxu0 0.0
    %1226 = vmatpush1.msra.mxu0 0.0
    %1227 = vmatprep.subr.mxu0 0.0
    %1228 = vmatpush1.msra.mxu0 %v1192
    %1229 = vmatprep.subr.mxu0 0.0
    %1230 = vmatpush2.msra.mxu0 0.0
    %1231 = vmatprep.subr.mxu0 0.0
    %1232 = vmatpush2.msra.mxu0 0.0
    %1233 = vmatprep.subr.mxu0 0.0
    %1234 = vmatpush2.msra.mxu0 0.0
    %1235 = vmatprep.subr.mxu0 0.0
    %1236 = vmatpush2.msra.mxu0 0.0
    %1237 = vmatprep.subr.mxu0 0.0
    %1238 = vmatpush2.msra.mxu0 0.0
    %1239 = vmatprep.subr.mxu0 0.0
    %1240 = vmatpush2.msra.mxu0 0.0
    %1241 = vmatprep.subr.mxu0 0.0
    %1242 = vmatpush2.msra.mxu0 0.0
    %1243 = vmatprep.subr.mxu0 0.0
    %1244 = vmatpush2.msra.mxu0 0.0
    %1245 = vmatprep.subr.mxu0 0.0
    %1246 = vmatpush2.msra.mxu0 0.0
    %1247 = vmatprep.subr.mxu0 0.0
    %1248 = vmatpush2.msra.mxu0 0.0
    %1249 = vmatprep.subr.mxu0 0.0
    %1250 = vmatpush2.msra.mxu0 0.0
    %1251 = vmatprep.subr.mxu0 0.0
    %1252 = vmatpush2.msra.mxu0 0.0
    %1253 = vmatprep.subr.mxu0 0.0
    %1254 = vmatpush2.msra.mxu0 0.0
    %1255 = vmatprep.subr.mxu0 0.0
    %1256 = vmatpush2.msra.mxu0 0.0
    %1257 = vmatprep.subr.mxu0 0.0
    %1258 = vmatpush2.msra.mxu0 0.0
    %1259 = vmatprep.subr.mxu0 0.0
    %1260 = vmatpush2.msra.mxu0 0.0
    %1261 = vmatprep.mubr.f32.mxu0 0.0
    %1262 = vmatmul.mubr.f32.gmra.mxu0 %v1195
    %v1263 = vpop.f32.mrf.mxu0
    %v1264 = vadd.f32 0.0, %v1263
    %v1265 = vpop.f32.mrf.mxu0
    %1266 = vdwg.mxu0
    %1267 = vrot.lane.b32.xlu0 %v383, 64
    %v1268 = vpop.permute.xlu0 %1267
    %v1271 = vsel %vm436, %v1080, 0
    %1273 = vmatprep.subr.mxu0 0.0
    %1274 = vmatpush1.msra.mxu0 0.0
    %1275 = vmatprep.subr.mxu0 0.0
    %1276 = vmatpush1.msra.mxu0 0.0
    %1277 = vmatprep.subr.mxu0 0.0
    %1278 = vmatpush1.msra.mxu0 0.0
    %1279 = vmatprep.subr.mxu0 0.0
    %1280 = vmatpush1.msra.mxu0 0.0
    %1281 = vmatprep.subr.mxu0 0.0
    %1282 = vmatpush1.msra.mxu0 0.0
    %1283 = vmatprep.subr.mxu0 0.0
    %1284 = vmatpush1.msra.mxu0 0.0
    %1285 = vmatprep.subr.mxu0 0.0
    %1286 = vmatpush1.msra.mxu0 0.0
    %1287 = vmatprep.subr.mxu0 0.0
    %1288 = vmatpush1.msra.mxu0 0.0
    %1289 = vmatprep.subr.mxu0 0.0
    %1290 = vmatpush1.msra.mxu0 0.0
    %1291 = vmatprep.subr.mxu0 0.0
    %1292 = vmatpush1.msra.mxu0 0.0
    %1293 = vmatprep.subr.mxu0 0.0
    %1294 = vmatpush1.msra.mxu0 0.0
    %1295 = vmatprep.subr.mxu0 0.0
    %1296 = vmatpush1.msra.mxu0 0.0
    %1297 = vmatprep.subr.mxu0 0.0
    %1298 = vmatpush1.msra.mxu0 0.0
    %1299 = vmatprep.subr.mxu0 0.0
    %1300 = vmatpush1.msra.mxu0 0.0
    %1301 = vmatprep.subr.mxu0 0.0
    %1302 = vmatpush1.msra.mxu0 0.0
    %1303 = vmatprep.subr.mxu0 0.0
    %1304 = vmatpush1.msra.mxu0 %v1268
    %1305 = vmatprep.subr.mxu0 0.0
    %1306 = vmatpush2.msra.mxu0 0.0
    %1307 = vmatprep.subr.mxu0 0.0
    %1308 = vmatpush2.msra.mxu0 0.0
    %1309 = vmatprep.subr.mxu0 0.0
    %1310 = vmatpush2.msra.mxu0 0.0
    %1311 = vmatprep.subr.mxu0 0.0
    %1312 = vmatpush2.msra.mxu0 0.0
    %1313 = vmatprep.subr.mxu0 0.0
    %1314 = vmatpush2.msra.mxu0 0.0
    %1315 = vmatprep.subr.mxu0 0.0
    %1316 = vmatpush2.msra.mxu0 0.0
    %1317 = vmatprep.subr.mxu0 0.0
    %1318 = vmatpush2.msra.mxu0 0.0
    %1319 = vmatprep.subr.mxu0 0.0
    %1320 = vmatpush2.msra.mxu0 0.0
    %1321 = vmatprep.subr.mxu0 0.0
    %1322 = vmatpush2.msra.mxu0 0.0
    %1323 = vmatprep.subr.mxu0 0.0
    %1324 = vmatpush2.msra.mxu0 0.0
    %1325 = vmatprep.subr.mxu0 0.0
    %1326 = vmatpush2.msra.mxu0 0.0
    %1327 = vmatprep.subr.mxu0 0.0
    %1328 = vmatpush2.msra.mxu0 0.0
    %1329 = vmatprep.subr.mxu0 0.0
    %1330 = vmatpush2.msra.mxu0 0.0
    %1331 = vmatprep.subr.mxu0 0.0
    %1332 = vmatpush2.msra.mxu0 0.0
    %1333 = vmatprep.subr.mxu0 0.0
    %1334 = vmatpush2.msra.mxu0 0.0
    %1335 = vmatprep.subr.mxu0 0.0
    %1336 = vmatpush2.msra.mxu0 0.0
    %1337 = vmatprep.mubr.f32.mxu0 0.0
    %1338 = vmatmul.mubr.f32.gmra.mxu0 %v1271
    %v1339 = vpop.f32.mrf.mxu0
    %v1340 = vadd.f32 0.0, %v1339
    %v1341 = vpop.f32.mrf.mxu0
    %1342 = vdwg.mxu0
    %1343 = vrot.lane.b32.xlu0 %v385, 64
    %v1344 = vpop.permute.xlu0 %1343
    %v1347 = vsel %vm436, %v1082, 0
    %1349 = vmatprep.subr.mxu0 0.0
    %1350 = vmatpush1.msra.mxu0 0.0
    %1351 = vmatprep.subr.mxu0 0.0
    %1352 = vmatpush1.msra.mxu0 0.0
    %1353 = vmatprep.subr.mxu0 0.0
    %1354 = vmatpush1.msra.mxu0 0.0
    %1355 = vmatprep.subr.mxu0 0.0
    %1356 = vmatpush1.msra.mxu0 0.0
    %1357 = vmatprep.subr.mxu0 0.0
    %1358 = vmatpush1.msra.mxu0 0.0
    %1359 = vmatprep.subr.mxu0 0.0
    %1360 = vmatpush1.msra.mxu0 0.0
    %1361 = vmatprep.subr.mxu0 0.0
    %1362 = vmatpush1.msra.mxu0 0.0
    %1363 = vmatprep.subr.mxu0 0.0
    %1364 = vmatpush1.msra.mxu0 0.0
    %1365 = vmatprep.subr.mxu0 0.0
    %1366 = vmatpush1.msra.mxu0 0.0
    %1367 = vmatprep.subr.mxu0 0.0
    %1368 = vmatpush1.msra.mxu0 0.0
    %1369 = vmatprep.subr.mxu0 0.0
    %1370 = vmatpush1.msra.mxu0 0.0
    %1371 = vmatprep.subr.mxu0 0.0
    %1372 = vmatpush1.msra.mxu0 0.0
    %1373 = vmatprep.subr.mxu0 0.0
    %1374 = vmatpush1.msra.mxu0 0.0
    %1375 = vmatprep.subr.mxu0 0.0
    %1376 = vmatpush1.msra.mxu0 0.0
    %1377 = vmatprep.subr.mxu0 0.0
    %1378 = vmatpush1.msra.mxu0 0.0
    %1379 = vmatprep.subr.mxu0 0.0
    %1380 = vmatpush1.msra.mxu0 %v1344
    %1381 = vmatprep.subr.mxu0 0.0
    %1382 = vmatpush2.msra.mxu0 0.0
    %1383 = vmatprep.subr.mxu0 0.0
    %1384 = vmatpush2.msra.mxu0 0.0
    %1385 = vmatprep.subr.mxu0 0.0
    %1386 = vmatpush2.msra.mxu0 0.0
    %1387 = vmatprep.subr.mxu0 0.0
    %1388 = vmatpush2.msra.mxu0 0.0
    %1389 = vmatprep.subr.mxu0 0.0
    %1390 = vmatpush2.msra.mxu0 0.0
    %1391 = vmatprep.subr.mxu0 0.0
    %1392 = vmatpush2.msra.mxu0 0.0
    %1393 = vmatprep.subr.mxu0 0.0
    %1394 = vmatpush2.msra.mxu0 0.0
    %1395 = vmatprep.subr.mxu0 0.0
    %1396 = vmatpush2.msra.mxu0 0.0
    %1397 = vmatprep.subr.mxu0 0.0
    %1398 = vmatpush2.msra.mxu0 0.0
    %1399 = vmatprep.subr.mxu0 0.0
    %1400 = vmatpush2.msra.mxu0 0.0
    %1401 = vmatprep.subr.mxu0 0.0
    %1402 = vmatpush2.msra.mxu0 0.0
    %1403 = vmatprep.subr.mxu0 0.0
    %1404 = vmatpush2.msra.mxu0 0.0
    %1405 = vmatprep.subr.mxu0 0.0
    %1406 = vmatpush2.msra.mxu0 0.0
    %1407 = vmatprep.subr.mxu0 0.0
    %1408 = vmatpush2.msra.mxu0 0.0
    %1409 = vmatprep.subr.mxu0 0.0
    %1410 = vmatpush2.msra.mxu0 0.0
    %1411 = vmatprep.subr.mxu0 0.0
    %1412 = vmatpush2.msra.mxu0 0.0
    %1413 = vmatprep.mubr.f32.mxu0 0.0
    %1414 = vmatmul.mubr.f32.gmra.mxu0 %v1347
    %v1415 = vpop.f32.mrf.mxu0
    %v1416 = vadd.f32 0.0, %v1415
    %v1417 = vpop.f32.mrf.mxu0
    %1418 = vdwg.mxu0
    %1419 = vrot.lane.b32.xlu0 %v387, 64
    %v1420 = vpop.permute.xlu0 %1419
    %v1423 = vsel %vm436, %v1084, 0
    %1425 = vmatprep.subr.mxu0 0.0
    %1426 = vmatpush1.msra.mxu0 0.0
    %1427 = vmatprep.subr.mxu0 0.0
    %1428 = vmatpush1.msra.mxu0 0.0
    %1429 = vmatprep.subr.mxu0 0.0
    %1430 = vmatpush1.msra.mxu0 0.0
    %1431 = vmatprep.subr.mxu0 0.0
    %1432 = vmatpush1.msra.mxu0 0.0
    %1433 = vmatprep.subr.mxu0 0.0
    %1434 = vmatpush1.msra.mxu0 0.0
    %1435 = vmatprep.subr.mxu0 0.0
    %1436 = vmatpush1.msra.mxu0 0.0
    %1437 = vmatprep.subr.mxu0 0.0
    %1438 = vmatpush1.msra.mxu0 0.0
    %1439 = vmatprep.subr.mxu0 0.0
    %1440 = vmatpush1.msra.mxu0 0.0
    %1441 = vmatprep.subr.mxu0 0.0
    %1442 = vmatpush1.msra.mxu0 0.0
    %1443 = vmatprep.subr.mxu0 0.0
    %1444 = vmatpush1.msra.mxu0 0.0
    %1445 = vmatprep.subr.mxu0 0.0
    %1446 = vmatpush1.msra.mxu0 0.0
    %1447 = vmatprep.subr.mxu0 0.0
    %1448 = vmatpush1.msra.mxu0 0.0
    %1449 = vmatprep.subr.mxu0 0.0
    %1450 = vmatpush1.msra.mxu0 0.0
    %1451 = vmatprep.subr.mxu0 0.0
    %1452 = vmatpush1.msra.mxu0 0.0
    %1453 = vmatprep.subr.mxu0 0.0
    %1454 = vmatpush1.msra.mxu0 0.0
    %1455 = vmatprep.subr.mxu0 0.0
    %1456 = vmatpush1.msra.mxu0 %v1420
    %1457 = vmatprep.subr.mxu0 0.0
    %1458 = vmatpush2.msra.mxu0 0.0
    %1459 = vmatprep.subr.mxu0 0.0
    %1460 = vmatpush2.msra.mxu0 0.0
    %1461 = vmatprep.subr.mxu0 0.0
    %1462 = vmatpush2.msra.mxu0 0.0
    %1463 = vmatprep.subr.mxu0 0.0
    %1464 = vmatpush2.msra.mxu0 0.0
    %1465 = vmatprep.subr.mxu0 0.0
    %1466 = vmatpush2.msra.mxu0 0.0
    %1467 = vmatprep.subr.mxu0 0.0
    %1468 = vmatpush2.msra.mxu0 0.0
    %1469 = vmatprep.subr.mxu0 0.0
    %1470 = vmatpush2.msra.mxu0 0.0
    %1471 = vmatprep.subr.mxu0 0.0
    %1472 = vmatpush2.msra.mxu0 0.0
    %1473 = vmatprep.subr.mxu0 0.0
    %1474 = vmatpush2.msra.mxu0 0.0
    %1475 = vmatprep.subr.mxu0 0.0
    %1476 = vmatpush2.msra.mxu0 0.0
    %1477 = vmatprep.subr.mxu0 0.0
    %1478 = vmatpush2.msra.mxu0 0.0
    %1479 = vmatprep.subr.mxu0 0.0
    %1480 = vmatpush2.msra.mxu0 0.0
    %1481 = vmatprep.subr.mxu0 0.0
    %1482 = vmatpush2.msra.mxu0 0.0
    %1483 = vmatprep.subr.mxu0 0.0
    %1484 = vmatpush2.msra.mxu0 0.0
    %1485 = vmatprep.subr.mxu0 0.0
    %1486 = vmatpush2.msra.mxu0 0.0
    %1487 = vmatprep.subr.mxu0 0.0
    %1488 = vmatpush2.msra.mxu0 0.0
    %1489 = vmatprep.mubr.f32.mxu0 0.0
    %1490 = vmatmul.mubr.f32.gmra.mxu0 %v1423
    %v1491 = vpop.f32.mrf.mxu0
    %v1492 = vadd.f32 0.0, %v1491
    %v1493 = vpop.f32.mrf.mxu0
    %1494 = vdwg.mxu0
    %1495 = vrot.lane.b32.xlu0 %v389, 64
    %v1496 = vpop.permute.xlu0 %1495
    %v1499 = vsel %vm436, %v1086, 0
    %1501 = vmatprep.subr.mxu0 0.0
    %1502 = vmatpush1.msra.mxu0 0.0
    %1503 = vmatprep.subr.mxu0 0.0
    %1504 = vmatpush1.msra.mxu0 0.0
    %1505 = vmatprep.subr.mxu0 0.0
    %1506 = vmatpush1.msra.mxu0 0.0
    %1507 = vmatprep.subr.mxu0 0.0
    %1508 = vmatpush1.msra.mxu0 0.0
    %1509 = vmatprep.subr.mxu0 0.0
    %1510 = vmatpush1.msra.mxu0 0.0
    %1511 = vmatprep.subr.mxu0 0.0
    %1512 = vmatpush1.msra.mxu0 0.0
    %1513 = vmatprep.subr.mxu0 0.0
    %1514 = vmatpush1.msra.mxu0 0.0
    %1515 = vmatprep.subr.mxu0 0.0
    %1516 = vmatpush1.msra.mxu0 0.0
    %1517 = vmatprep.subr.mxu0 0.0
    %1518 = vmatpush1.msra.mxu0 0.0
    %1519 = vmatprep.subr.mxu0 0.0
    %1520 = vmatpush1.msra.mxu0 0.0
    %1521 = vmatprep.subr.mxu0 0.0
    %1522 = vmatpush1.msra.mxu0 0.0
    %1523 = vmatprep.subr.mxu0 0.0
    %1524 = vmatpush1.msra.mxu0 0.0
    %1525 = vmatprep.subr.mxu0 0.0
    %1526 = vmatpush1.msra.mxu0 0.0
    %1527 = vmatprep.subr.mxu0 0.0
    %1528 = vmatpush1.msra.mxu0 0.0
    %1529 = vmatprep.subr.mxu0 0.0
    %1530 = vmatpush1.msra.mxu0 0.0
    %1531 = vmatprep.subr.mxu0 0.0
    %1532 = vmatpush1.msra.mxu0 %v1496
    %1533 = vmatprep.subr.mxu0 0.0
    %1534 = vmatpush2.msra.mxu0 0.0
    %1535 = vmatprep.subr.mxu0 0.0
    %1536 = vmatpush2.msra.mxu0 0.0
    %1537 = vmatprep.subr.mxu0 0.0
    %1538 = vmatpush2.msra.mxu0 0.0
    %1539 = vmatprep.subr.mxu0 0.0
    %1540 = vmatpush2.msra.mxu0 0.0
    %1541 = vmatprep.subr.mxu0 0.0
    %1542 = vmatpush2.msra.mxu0 0.0
    %1543 = vmatprep.subr.mxu0 0.0
    %1544 = vmatpush2.msra.mxu0 0.0
    %1545 = vmatprep.subr.mxu0 0.0
    %1546 = vmatpush2.msra.mxu0 0.0
    %1547 = vmatprep.subr.mxu0 0.0
    %1548 = vmatpush2.msra.mxu0 0.0
    %1549 = vmatprep.subr.mxu0 0.0
    %1550 = vmatpush2.msra.mxu0 0.0
    %1551 = vmatprep.subr.mxu0 0.0
    %1552 = vmatpush2.msra.mxu0 0.0
    %1553 = vmatprep.subr.mxu0 0.0
    %1554 = vmatpush2.msra.mxu0 0.0
    %1555 = vmatprep.subr.mxu0 0.0
    %1556 = vmatpush2.msra.mxu0 0.0
    %1557 = vmatprep.subr.mxu0 0.0
    %1558 = vmatpush2.msra.mxu0 0.0
    %1559 = vmatprep.subr.mxu0 0.0
    %1560 = vmatpush2.msra.mxu0 0.0
    %1561 = vmatprep.subr.mxu0 0.0
    %1562 = vmatpush2.msra.mxu0 0.0
    %1563 = vmatprep.subr.mxu0 0.0
    %1564 = vmatpush2.msra.mxu0 0.0
    %1565 = vmatprep.mubr.f32.mxu0 0.0
    %1566 = vmatmul.mubr.f32.gmra.mxu0 %v1499
    %v1567 = vpop.f32.mrf.mxu0
    %v1568 = vadd.f32 0.0, %v1567
    %v1569 = vpop.f32.mrf.mxu0
    %1570 = vdwg.mxu0
    %1571 = vrot.lane.b32.xlu0 %v391, 64
    %v1572 = vpop.permute.xlu0 %1571
    %v1575 = vsel %vm436, %v1088, 0
    %1577 = vmatprep.subr.mxu0 0.0
    %1578 = vmatpush1.msra.mxu0 0.0
    %1579 = vmatprep.subr.mxu0 0.0
    %1580 = vmatpush1.msra.mxu0 0.0
    %1581 = vmatprep.subr.mxu0 0.0
    %1582 = vmatpush1.msra.mxu0 0.0
    %1583 = vmatprep.subr.mxu0 0.0
    %1584 = vmatpush1.msra.mxu0 0.0
    %1585 = vmatprep.subr.mxu0 0.0
    %1586 = vmatpush1.msra.mxu0 0.0
    %1587 = vmatprep.subr.mxu0 0.0
    %1588 = vmatpush1.msra.mxu0 0.0
    %1589 = vmatprep.subr.mxu0 0.0
    %1590 = vmatpush1.msra.mxu0 0.0
    %1591 = vmatprep.subr.mxu0 0.0
    %1592 = vmatpush1.msra.mxu0 0.0
    %1593 = vmatprep.subr.mxu0 0.0
    %1594 = vmatpush1.msra.mxu0 0.0
    %1595 = vmatprep.subr.mxu0 0.0
    %1596 = vmatpush1.msra.mxu0 0.0
    %1597 = vmatprep.subr.mxu0 0.0
    %1598 = vmatpush1.msra.mxu0 0.0
    %1599 = vmatprep.subr.mxu0 0.0
    %1600 = vmatpush1.msra.mxu0 0.0
    %1601 = vmatprep.subr.mxu0 0.0
    %1602 = vmatpush1.msra.mxu0 0.0
    %1603 = vmatprep.subr.mxu0 0.0
    %1604 = vmatpush1.msra.mxu0 0.0
    %1605 = vmatprep.subr.mxu0 0.0
    %1606 = vmatpush1.msra.mxu0 0.0
    %1607 = vmatprep.subr.mxu0 0.0
    %1608 = vmatpush1.msra.mxu0 %v1572
    %1609 = vmatprep.subr.mxu0 0.0
    %1610 = vmatpush2.msra.mxu0 0.0
    %1611 = vmatprep.subr.mxu0 0.0
    %1612 = vmatpush2.msra.mxu0 0.0
    %1613 = vmatprep.subr.mxu0 0.0
    %1614 = vmatpush2.msra.mxu0 0.0
    %1615 = vmatprep.subr.mxu0 0.0
    %1616 = vmatpush2.msra.mxu0 0.0
    %1617 = vmatprep.subr.mxu0 0.0
    %1618 = vmatpush2.msra.mxu0 0.0
    %1619 = vmatprep.subr.mxu0 0.0
    %1620 = vmatpush2.msra.mxu0 0.0
    %1621 = vmatprep.subr.mxu0 0.0
    %1622 = vmatpush2.msra.mxu0 0.0
    %1623 = vmatprep.subr.mxu0 0.0
    %1624 = vmatpush2.msra.mxu0 0.0
    %1625 = vmatprep.subr.mxu0 0.0
    %1626 = vmatpush2.msra.mxu0 0.0
    %1627 = vmatprep.subr.mxu0 0.0
    %1628 = vmatpush2.msra.mxu0 0.0
    %1629 = vmatprep.subr.mxu0 0.0
    %1630 = vmatpush2.msra.mxu0 0.0
    %1631 = vmatprep.subr.mxu0 0.0
    %1632 = vmatpush2.msra.mxu0 0.0
    %1633 = vmatprep.subr.mxu0 0.0
    %1634 = vmatpush2.msra.mxu0 0.0
    %1635 = vmatprep.subr.mxu0 0.0
    %1636 = vmatpush2.msra.mxu0 0.0
    %1637 = vmatprep.subr.mxu0 0.0
    %1638 = vmatpush2.msra.mxu0 0.0
    %1639 = vmatprep.subr.mxu0 0.0
    %1640 = vmatpush2.msra.mxu0 0.0
    %1641 = vmatprep.mubr.f32.mxu0 0.0
    %1642 = vmatmul.mubr.f32.gmra.mxu0 %v1575
    %v1643 = vpop.f32.mrf.mxu0
    %v1644 = vadd.f32 0.0, %v1643
    %v1645 = vpop.f32.mrf.mxu0
    %1646 = vdwg.mxu0
    %1647 = vrot.lane.b32.xlu0 %v393, 64
    %v1648 = vpop.permute.xlu0 %1647
    %v1651 = vsel %vm436, %v1090, 0
    %1653 = vmatprep.subr.mxu0 0.0
    %1654 = vmatpush1.msra.mxu0 0.0
    %1655 = vmatprep.subr.mxu0 0.0
    %1656 = vmatpush1.msra.mxu0 0.0
    %1657 = vmatprep.subr.mxu0 0.0
    %1658 = vmatpush1.msra.mxu0 0.0
    %1659 = vmatprep.subr.mxu0 0.0
    %1660 = vmatpush1.msra.mxu0 0.0
    %1661 = vmatprep.subr.mxu0 0.0
    %1662 = vmatpush1.msra.mxu0 0.0
    %1663 = vmatprep.subr.mxu0 0.0
    %1664 = vmatpush1.msra.mxu0 0.0
    %1665 = vmatprep.subr.mxu0 0.0
    %1666 = vmatpush1.msra.mxu0 0.0
    %1667 = vmatprep.subr.mxu0 0.0
    %1668 = vmatpush1.msra.mxu0 0.0
    %1669 = vmatprep.subr.mxu0 0.0
    %1670 = vmatpush1.msra.mxu0 0.0
    %1671 = vmatprep.subr.mxu0 0.0
    %1672 = vmatpush1.msra.mxu0 0.0
    %1673 = vmatprep.subr.mxu0 0.0
    %1674 = vmatpush1.msra.mxu0 0.0
    %1675 = vmatprep.subr.mxu0 0.0
    %1676 = vmatpush1.msra.mxu0 0.0
    %1677 = vmatprep.subr.mxu0 0.0
    %1678 = vmatpush1.msra.mxu0 0.0
    %1679 = vmatprep.subr.mxu0 0.0
    %1680 = vmatpush1.msra.mxu0 0.0
    %1681 = vmatprep.subr.mxu0 0.0
    %1682 = vmatpush1.msra.mxu0 0.0
    %1683 = vmatprep.subr.mxu0 0.0
    %1684 = vmatpush1.msra.mxu0 %v1648
    %1685 = vmatprep.subr.mxu0 0.0
    %1686 = vmatpush2.msra.mxu0 0.0
    %1687 = vmatprep.subr.mxu0 0.0
    %1688 = vmatpush2.msra.mxu0 0.0
    %1689 = vmatprep.subr.mxu0 0.0
    %1690 = vmatpush2.msra.mxu0 0.0
    %1691 = vmatprep.subr.mxu0 0.0
    %1692 = vmatpush2.msra.mxu0 0.0
    %1693 = vmatprep.subr.mxu0 0.0
    %1694 = vmatpush2.msra.mxu0 0.0
    %1695 = vmatprep.subr.mxu0 0.0
    %1696 = vmatpush2.msra.mxu0 0.0
    %1697 = vmatprep.subr.mxu0 0.0
    %1698 = vmatpush2.msra.mxu0 0.0
    %1699 = vmatprep.subr.mxu0 0.0
    %1700 = vmatpush2.msra.mxu0 0.0
    %1701 = vmatprep.subr.mxu0 0.0
    %1702 = vmatpush2.msra.mxu0 0.0
    %1703 = vmatprep.subr.mxu0 0.0
    %1704 = vmatpush2.msra.mxu0 0.0
    %1705 = vmatprep.subr.mxu0 0.0
    %1706 = vmatpush2.msra.mxu0 0.0
    %1707 = vmatprep.subr.mxu0 0.0
    %1708 = vmatpush2.msra.mxu0 0.0
    %1709 = vmatprep.subr.mxu0 0.0
    %1710 = vmatpush2.msra.mxu0 0.0
    %1711 = vmatprep.subr.mxu0 0.0
    %1712 = vmatpush2.msra.mxu0 0.0
    %1713 = vmatprep.subr.mxu0 0.0
    %1714 = vmatpush2.msra.mxu0 0.0
    %1715 = vmatprep.subr.mxu0 0.0
    %1716 = vmatpush2.msra.mxu0 0.0
    %1717 = vmatprep.mubr.f32.mxu0 0.0
    %1718 = vmatmul.mubr.f32.gmra.mxu0 %v1651
    %v1719 = vpop.f32.mrf.mxu0
    %v1720 = vadd.f32 0.0, %v1719
    %v1721 = vpop.f32.mrf.mxu0
    %1722 = vdwg.mxu0
    %v1723 = vrcp.pop %v1093
    %v1724 = vrcp.pop %v1096
    %v1725 = vrcp.pop %v1099
    %v1726 = vrcp.pop %v1102
    %v1727 = vrcp.pop %v1105
    %v1728 = vrcp.pop %v1108
    %v1729 = vrcp.pop %v1111
    %v1730 = vrcp.pop %v1114
    %v1731 = vmul.f32 %v1188, %v1723
    %v1732 = vmul.f32 %v1264, %v1724
    %v1733 = vmul.f32 %v1340, %v1725
    %v1734 = vmul.f32 %v1416, %v1726
    %v1735 = vmul.f32 %v1492, %v1727
    %v1736 = vmul.f32 %v1568, %v1728
    %v1737 = vmul.f32 %v1644, %v1729
    %v1738 = vmul.f32 %v1720, %v1730
    %1741 = vrot.lane.b32.xlu0 %v1733, 8
    %v1742 = vpop.permute.xlu0 %1741
    %1743 = vrot.lane.b32.xlu0 %v1734, 8
    %v1744 = vpop.permute.xlu0 %1743
    %1749 = vrot.lane.b32.xlu0 %v1735, 16
    %v1750 = vpop.permute.xlu0 %1749
    %1751 = vrot.lane.b32.xlu0 %v1736, 16
    %v1752 = vpop.permute.xlu0 %1751
    %1757 = vrot.lane.b32.xlu0 %v1737, 24
    %v1758 = vpop.permute.xlu0 %1757
    %1759 = vrot.lane.b32.xlu0 %v1738, 24
    %v1760 = vpop.permute.xlu0 %1759
    %v1763 = vsel %vm436, %v1731, %v1742
    %v1764 = vsel %vm436, %v1732, %v1744
    %v1765 = vsel %vm189, %v1763, %v1750
    %v1766 = vsel %vm189, %v1764, %v1752
    %vm1767 = vcmask 195584
    %v1768 = vsel %vm1767, %v1765, %v1758
    %v1769 = vsel %vm1767, %v1766, %v1760
    %v1770 = vlaneseq
    %v1771 = vshrl.u32 %v1770, 7
    %v1772 = vsub.s32 1, %v1771
    %v1773 = vrot.slane %v293, %v1772
    %v1775 = vsel %vm298, %v1768, 0
    %v1778 = vsel %vm298, %v1769, 0
    %1780 = vmatprep.subr.mxu0 0.0
    %1781 = vmatpush1.msra.mxu0 0.0
    %1782 = vmatprep.subr.mxu0 0.0
    %1783 = vmatpush1.msra.mxu0 0.0
    %1784 = vmatprep.subr.mxu0 0.0
    %1785 = vmatpush1.msra.mxu0 0.0
    %1786 = vmatprep.subr.mxu0 0.0
    %1787 = vmatpush1.msra.mxu0 0.0
    %1788 = vmatprep.subr.mxu0 0.0
    %1789 = vmatpush1.msra.mxu0 0.0
    %1790 = vmatprep.subr.mxu0 0.0
    %1791 = vmatpush1.msra.mxu0 0.0
    %1792 = vmatprep.subr.mxu0 0.0
    %1793 = vmatpush1.msra.mxu0 0.0
    %1794 = vmatprep.subr.mxu0 0.0
    %1795 = vmatpush1.msra.mxu0 0.0
    %1796 = vmatprep.subr.mxu0 0.0
    %1797 = vmatpush1.msra.mxu0 0.0
    %1798 = vmatprep.subr.mxu0 0.0
    %1799 = vmatpush1.msra.mxu0 0.0
    %1800 = vmatprep.subr.mxu0 0.0
    %1801 = vmatpush1.msra.mxu0 0.0
    %1802 = vmatprep.subr.mxu0 0.0
    %1803 = vmatpush1.msra.mxu0 0.0
    %1804 = vmatprep.subr.mxu0 0.0
    %1805 = vmatpush1.msra.mxu0 %v280
    %1806 = vmatprep.subr.mxu0 0.0
    %1807 = vmatpush1.msra.mxu0 %v279
    %1808 = vmatprep.subr.mxu0 0.0
    %1809 = vmatpush1.msra.mxu0 %v278
    %1810 = vmatprep.subr.mxu0 0.0
    %1811 = vmatpush1.msra.mxu0 %v277
    %1812 = vmatprep.subr.mxu0 0.0
    %1813 = vmatpush2.msra.mxu0 0.0
    %1814 = vmatprep.subr.mxu0 0.0
    %1815 = vmatpush2.msra.mxu0 0.0
    %1816 = vmatprep.subr.mxu0 0.0
    %1817 = vmatpush2.msra.mxu0 0.0
    %1818 = vmatprep.subr.mxu0 0.0
    %1819 = vmatpush2.msra.mxu0 0.0
    %1820 = vmatprep.subr.mxu0 0.0
    %1821 = vmatpush2.msra.mxu0 0.0
    %1822 = vmatprep.subr.mxu0 0.0
    %1823 = vmatpush2.msra.mxu0 0.0
    %1824 = vmatprep.subr.mxu0 0.0
    %1825 = vmatpush2.msra.mxu0 0.0
    %1826 = vmatprep.subr.mxu0 0.0
    %1827 = vmatpush2.msra.mxu0 0.0
    %1828 = vmatprep.subr.mxu0 0.0
    %1829 = vmatpush2.msra.mxu0 0.0
    %1830 = vmatprep.subr.mxu0 0.0
    %1831 = vmatpush2.msra.mxu0 0.0
    %1832 = vmatprep.subr.mxu0 0.0
    %1833 = vmatpush2.msra.mxu0 0.0
    %1834 = vmatprep.subr.mxu0 0.0
    %1835 = vmatpush2.msra.mxu0 0.0
    %1836 = vmatprep.subr.mxu0 0.0
    %1837 = vmatpush2.msra.mxu0 0.0
    %1838 = vmatprep.subr.mxu0 0.0
    %1839 = vmatpush2.msra.mxu0 0.0
    %1840 = vmatprep.subr.mxu0 0.0
    %1841 = vmatpush2.msra.mxu0 0.0
    %1842 = vmatprep.subr.mxu0 0.0
    %1843 = vmatpush2.msra.mxu0 0.0
    %1844 = vmatprep.mubr.f32.mxu0 0.0
    %1845 = vmatmul.mubr.f32.gmra.mxu0 %v1775
    %v1846 = vpop.f32.mrf.mxu0
    %v1847 = vadd.f32 %v1773, %v1846
    %v1848 = vpop.f32.mrf.mxu0
    %1849 = vmatprep.mubr.f32.mxu0 0.0
    %1850 = vmatmul.mubr.f32.gmra.mxu0 %v1778
    %v1851 = vpop.f32.mrf.mxu0
    %v1852 = vadd.f32 %v1773, %v1851
    %v1853 = vpop.f32.mrf.mxu0
    %1854 = vdwg.mxu0
    %v1855 = vadd.f32 %v271, %v1847
    %v1856 = vadd.f32 %v272, %v1852
    %v1857 = vsel %vm298, %v1855, 0.0
    %1858 = vadd.xlane.f32.xlu0 %v1857
    %v1859 = vpop.xlane.xlu0 %1858
    %v1860 = vsel %vm298, %v1856, 0.0
    %1861 = vadd.xlane.f32.xlu0 %v1860
    %v1862 = vpop.xlane.xlu0 %1861
    %v1863 = vrcp.pop 32.0
    %v1864 = vmul.f32 %v1859, %v1863
    %v1865 = vmul.f32 %v1862, %v1863
    %v1866 = vsub.f32 %v1855, %v1864
    %v1867 = vsub.f32 %v1856, %v1865
    %v1868 = vmul.f32 %v1866, %v1866
    %v1869 = vmul.f32 %v1867, %v1867
    %v1870 = vsel %vm298, %v1868, 0.0
    %1871 = vadd.xlane.f32.xlu0 %v1870
    %v1872 = vpop.xlane.xlu0 %1871
    %v1873 = vsel %vm298, %v1869, 0.0
    %1874 = vadd.xlane.f32.xlu0 %v1873
    %v1875 = vpop.xlane.xlu0 %1874
    %v1876 = vmul.f32 %v1872, %v1863
    %v1877 = vmul.f32 %v1875, %v1863
    %v1878 = vadd.f32 %v1876, 1e-05
    %v1879 = vadd.f32 %v1877, 1e-05
    %v1880 = vrsqrt.pop %v1878
    %v1881 = vrsqrt.pop %v1879
    %v1882 = vmul.f32 %v1866, %v1880
    %v1883 = vmul.f32 %v1867, %v1881
    %v1884 = vlaneseq
    %v1885 = vshrl.u32 %v1884, 7
    %v1886 = vsub.s32 4, %v1885
    %v1887 = vrot.slane %v293, %v1886
    %v1888 = vmul.f32 %v1882, %v1887
    %v1889 = vmul.f32 %v1883, %v1887
    %v1890 = vlaneseq
    %v1891 = vshrl.u32 %v1890, 7
    %v1892 = vsub.s32 5, %v1891
    %v1893 = vrot.slane %v293, %v1892
    %v1894 = vadd.f32 %v1888, %v1893
    %v1895 = vadd.f32 %v1889, %v1893
    %v1896 = vlaneseq
    %v1897 = vshrl.u32 %v1896, 7
    %v1898 = vsub.s32 2, %v1897
    %v1899 = vrot.slane %v293, %v1898
    %v1901 = vsel %vm298, %v1894, 0
    %v1904 = vsel %vm298, %v1895, 0
    %1906 = vmatprep.subr.mxu0 0.0
    %1907 = vmatpush1.msra.mxu0 0.0
    %1908 = vmatprep.subr.mxu0 0.0
    %1909 = vmatpush1.msra.mxu0 0.0
    %1910 = vmatprep.subr.mxu0 0.0
    %1911 = vmatpush1.msra.mxu0 0.0
    %1912 = vmatprep.subr.mxu0 0.0
    %1913 = vmatpush1.msra.mxu0 0.0
    %1914 = vmatprep.subr.mxu0 0.0
    %1915 = vmatpush1.msra.mxu0 0.0
    %1916 = vmatprep.subr.mxu0 0.0
    %1917 = vmatpush1.msra.mxu0 0.0
    %1918 = vmatprep.subr.mxu0 0.0
    %1919 = vmatpush1.msra.mxu0 0.0
    %1920 = vmatprep.subr.mxu0 0.0
    %1921 = vmatpush1.msra.mxu0 0.0
    %1922 = vmatprep.subr.mxu0 0.0
    %1923 = vmatpush1.msra.mxu0 0.0
    %1924 = vmatprep.subr.mxu0 0.0
    %1925 = vmatpush1.msra.mxu0 0.0
    %1926 = vmatprep.subr.mxu0 0.0
    %1927 = vmatpush1.msra.mxu0 0.0
    %1928 = vmatprep.subr.mxu0 0.0
    %1929 = vmatpush1.msra.mxu0 0.0
    %1930 = vmatprep.subr.mxu0 0.0
    %1931 = vmatpush1.msra.mxu0 %v284
    %1932 = vmatprep.subr.mxu0 0.0
    %1933 = vmatpush1.msra.mxu0 %v283
    %1934 = vmatprep.subr.mxu0 0.0
    %1935 = vmatpush1.msra.mxu0 %v282
    %1936 = vmatprep.subr.mxu0 0.0
    %1937 = vmatpush1.msra.mxu0 %v281
    %1938 = vmatprep.subr.mxu0 0.0
    %1939 = vmatpush2.msra.mxu0 0.0
    %1940 = vmatprep.subr.mxu0 0.0
    %1941 = vmatpush2.msra.mxu0 0.0
    %1942 = vmatprep.subr.mxu0 0.0
    %1943 = vmatpush2.msra.mxu0 0.0
    %1944 = vmatprep.subr.mxu0 0.0
    %1945 = vmatpush2.msra.mxu0 0.0
    %1946 = vmatprep.subr.mxu0 0.0
    %1947 = vmatpush2.msra.mxu0 0.0
    %1948 = vmatprep.subr.mxu0 0.0
    %1949 = vmatpush2.msra.mxu0 0.0
    %1950 = vmatprep.subr.mxu0 0.0
    %1951 = vmatpush2.msra.mxu0 0.0
    %1952 = vmatprep.subr.mxu0 0.0
    %1953 = vmatpush2.msra.mxu0 0.0
    %1954 = vmatprep.subr.mxu0 0.0
    %1955 = vmatpush2.msra.mxu0 0.0
    %1956 = vmatprep.subr.mxu0 0.0
    %1957 = vmatpush2.msra.mxu0 0.0
    %1958 = vmatprep.subr.mxu0 0.0
    %1959 = vmatpush2.msra.mxu0 0.0
    %1960 = vmatprep.subr.mxu0 0.0
    %1961 = vmatpush2.msra.mxu0 0.0
    %1962 = vmatprep.subr.mxu0 0.0
    %1963 = vmatpush2.msra.mxu0 0.0
    %1964 = vmatprep.subr.mxu0 0.0
    %1965 = vmatpush2.msra.mxu0 0.0
    %1966 = vmatprep.subr.mxu0 0.0
    %1967 = vmatpush2.msra.mxu0 0.0
    %1968 = vmatprep.subr.mxu0 0.0
    %1969 = vmatpush2.msra.mxu0 0.0
    %1970 = vmatprep.mubr.f32.mxu0 0.0
    %1971 = vmatmul.mubr.f32.gmra.mxu0 %v1901
    %v1972 = vpop.f32.mrf.mxu0
    %v1973 = vadd.f32 %v1899, %v1972
    %v1974 = vpop.f32.mrf.mxu0
    %1975 = vmatprep.mubr.f32.mxu0 0.0
    %1976 = vmatmul.mubr.f32.gmra.mxu0 %v1904
    %v1977 = vpop.f32.mrf.mxu0
    %v1978 = vadd.f32 %v1899, %v1977
    %v1979 = vpop.f32.mrf.mxu0
    %1980 = vdwg.mxu0
    %v1981 = vmax.f32 %v1973, 0.0
    %v1982 = vmax.f32 %v1978, 0.0
    %v1983 = vlaneseq
    %v1984 = vshrl.u32 %v1983, 7
    %v1985 = vsub.s32 3, %v1984
    %v1986 = vrot.slane %v293, %v1985
    %vm1987 = vcmask 523264
    %v1989 = vsel %vm1987, %v1981, 0
    %v1992 = vsel %vm1987, %v1982, 0
    %1994 = vmatprep.subr.mxu0 0.0
    %1995 = vmatpush1.msra.mxu0 0.0
    %1996 = vmatprep.subr.mxu0 0.0
    %1997 = vmatpush1.msra.mxu0 0.0
    %1998 = vmatprep.subr.mxu0 0.0
    %1999 = vmatpush1.msra.mxu0 0.0
    %2000 = vmatprep.subr.mxu0 0.0
    %2001 = vmatpush1.msra.mxu0 0.0
    %2002 = vmatprep.subr.mxu0 0.0
    %2003 = vmatpush1.msra.mxu0 0.0
    %2004 = vmatprep.subr.mxu0 0.0
    %2005 = vmatpush1.msra.mxu0 0.0
    %2006 = vmatprep.subr.mxu0 0.0
    %2007 = vmatpush1.msra.mxu0 0.0
    %2008 = vmatprep.subr.mxu0 0.0
    %2009 = vmatpush1.msra.mxu0 0.0
    %2010 = vmatprep.subr.mxu0 0.0
    %2011 = vmatpush1.msra.mxu0 %v292
    %2012 = vmatprep.subr.mxu0 0.0
    %2013 = vmatpush1.msra.mxu0 %v291
    %2014 = vmatprep.subr.mxu0 0.0
    %2015 = vmatpush1.msra.mxu0 %v290
    %2016 = vmatprep.subr.mxu0 0.0
    %2017 = vmatpush1.msra.mxu0 %v289
    %2018 = vmatprep.subr.mxu0 0.0
    %2019 = vmatpush1.msra.mxu0 %v288
    %2020 = vmatprep.subr.mxu0 0.0
    %2021 = vmatpush1.msra.mxu0 %v287
    %2022 = vmatprep.subr.mxu0 0.0
    %2023 = vmatpush1.msra.mxu0 %v286
    %2024 = vmatprep.subr.mxu0 0.0
    %2025 = vmatpush1.msra.mxu0 %v285
    %2026 = vmatprep.subr.mxu0 0.0
    %2027 = vmatpush2.msra.mxu0 0.0
    %2028 = vmatprep.subr.mxu0 0.0
    %2029 = vmatpush2.msra.mxu0 0.0
    %2030 = vmatprep.subr.mxu0 0.0
    %2031 = vmatpush2.msra.mxu0 0.0
    %2032 = vmatprep.subr.mxu0 0.0
    %2033 = vmatpush2.msra.mxu0 0.0
    %2034 = vmatprep.subr.mxu0 0.0
    %2035 = vmatpush2.msra.mxu0 0.0
    %2036 = vmatprep.subr.mxu0 0.0
    %2037 = vmatpush2.msra.mxu0 0.0
    %2038 = vmatprep.subr.mxu0 0.0
    %2039 = vmatpush2.msra.mxu0 0.0
    %2040 = vmatprep.subr.mxu0 0.0
    %2041 = vmatpush2.msra.mxu0 0.0
    %2042 = vmatprep.subr.mxu0 0.0
    %2043 = vmatpush2.msra.mxu0 0.0
    %2044 = vmatprep.subr.mxu0 0.0
    %2045 = vmatpush2.msra.mxu0 0.0
    %2046 = vmatprep.subr.mxu0 0.0
    %2047 = vmatpush2.msra.mxu0 0.0
    %2048 = vmatprep.subr.mxu0 0.0
    %2049 = vmatpush2.msra.mxu0 0.0
    %2050 = vmatprep.subr.mxu0 0.0
    %2051 = vmatpush2.msra.mxu0 0.0
    %2052 = vmatprep.subr.mxu0 0.0
    %2053 = vmatpush2.msra.mxu0 0.0
    %2054 = vmatprep.subr.mxu0 0.0
    %2055 = vmatpush2.msra.mxu0 0.0
    %2056 = vmatprep.subr.mxu0 0.0
    %2057 = vmatpush2.msra.mxu0 0.0
    %2058 = vmatprep.mubr.f32.mxu0 0.0
    %2059 = vmatmul.mubr.f32.gmra.mxu0 %v1989
    %v2060 = vpop.f32.mrf.mxu0
    %v2061 = vadd.f32 %v1986, %v2060
    %v2062 = vpop.f32.mrf.mxu0
    %2063 = vmatprep.mubr.f32.mxu0 0.0
    %2064 = vmatmul.mubr.f32.gmra.mxu0 %v1992
    %v2065 = vpop.f32.mrf.mxu0
    %v2066 = vadd.f32 %v1986, %v2065
    %v2067 = vpop.f32.mrf.mxu0
    %2068 = vdwg.mxu0
    %v2069 = vadd.f32 %v1894, %v2061
    %v2070 = vadd.f32 %v1895, %v2066
    %v2071 = vsel %vm298, %v2069, 0.0
    %2072 = vadd.xlane.f32.xlu0 %v2071
    %v2073 = vpop.xlane.xlu0 %2072
    %v2074 = vsel %vm298, %v2070, 0.0
    %2075 = vadd.xlane.f32.xlu0 %v2074
    %v2076 = vpop.xlane.xlu0 %2075
    %v2077 = vmul.f32 %v2073, %v1863
    %v2078 = vmul.f32 %v2076, %v1863
    %v2079 = vsub.f32 %v2069, %v2077
    %v2080 = vsub.f32 %v2070, %v2078
    %v2081 = vmul.f32 %v2079, %v2079
    %v2082 = vmul.f32 %v2080, %v2080
    %v2083 = vsel %vm298, %v2081, 0.0
    %2084 = vadd.xlane.f32.xlu0 %v2083
    %v2085 = vpop.xlane.xlu0 %2084
    %v2086 = vsel %vm298, %v2082, 0.0
    %2087 = vadd.xlane.f32.xlu0 %v2086
    %v2088 = vpop.xlane.xlu0 %2087
    %v2089 = vmul.f32 %v2085, %v1863
    %v2090 = vmul.f32 %v2088, %v1863
    %v2091 = vadd.f32 %v2089, 1e-05
    %v2092 = vadd.f32 %v2090, 1e-05
    %v2093 = vrsqrt.pop %v2091
    %v2094 = vrsqrt.pop %v2092
    %v2095 = vmul.f32 %v2079, %v2093
    %v2096 = vmul.f32 %v2080, %v2094
    %v2097 = vlaneseq
    %v2098 = vshrl.u32 %v2097, 7
    %v2099 = vsub.s32 6, %v2098
    %v2100 = vrot.slane %v293, %v2099
    %v2101 = vmul.f32 %v2095, %v2100
    %v2102 = vmul.f32 %v2096, %v2100
    %v2103 = vlaneseq
    %v2104 = vshrl.u32 %v2103, 7
    %v2105 = vsub.s32 7, %v2104
    %v2106 = vrot.slane %v293, %v2105
    %v2107 = vadd.f32 %v2101, %v2106
    %v2108 = vadd.f32 %v2102, %v2106
    %s2109 = scalar_lea.vmem [#allocation7], 160
    %v2110 = vld [vmem:[%s2109] sm:$0xff]
    %v2111 = vld [vmem:[%s2109 + $0x8] sm:$0xff]
    %v2112 = vld [vmem:[%s2109 + $0x10] sm:$0xff]
    %v2113 = vld [vmem:[%s2109 + $0x18] sm:$0xff]
    %v2114 = vld [vmem:[%s2109 + $0x20] sm:$0xff]
    %v2115 = vld [vmem:[%s2109 + $0x28] sm:$0xff]
    %v2116 = vld [vmem:[%s2109 + $0x30] sm:$0xff]
    %v2117 = vld [vmem:[%s2109 + $0x38] sm:$0xff]
    %v2118 = vld [vmem:[%s2109 + $0x40] sm:$0xff]
    %v2119 = vld [vmem:[%s2109 + $0x48] sm:$0xff]
    %v2120 = vld [vmem:[%s2109 + $0x50] sm:$0xff]
    %v2121 = vld [vmem:[%s2109 + $0x58] sm:$0xff]
    %v2122 = vld [vmem:[%s2109 + $0x60] sm:$0xff]
    %v2123 = vld [vmem:[%s2109 + $0x68] sm:$0xff]
    %v2124 = vld [vmem:[%s2109 + $0x70] sm:$0xff]
    %v2125 = vld [vmem:[%s2109 + $0x78] sm:$0xff]
    %v2126 = vld [vmem:[%s2109 + $0x80] sm:$0xff]
    %v2127 = vld [vmem:[%s2109 + $0x88] sm:$0xff]
    %v2128 = vld [vmem:[%s2109 + $0x90] sm:$0xff]
    %v2129 = vld [vmem:[%s2109 + $0x98] sm:$0xff]
    %s2130 = scalar_lea.vmem [#allocation9], 8
    %v2131 = vld [vmem:[%s2130] sm:$0xff]
    %v2132 = vlaneseq
    %v2133 = vshrl.u32 %v2132, 7
    %v2134 = vsub.s32 0, %v2133
    %v2135 = vrot.slane %v2131, %v2134
    %v2137 = vsel %vm298, %v2107, 0
    %v2140 = vsel %vm298, %v2108, 0
    %2142 = vmatprep.subr.mxu0 0.0
    %2143 = vmatpush1.msra.mxu0 0.0
    %2144 = vmatprep.subr.mxu0 0.0
    %2145 = vmatpush1.msra.mxu0 0.0
    %2146 = vmatprep.subr.mxu0 0.0
    %2147 = vmatpush1.msra.mxu0 0.0
    %2148 = vmatprep.subr.mxu0 0.0
    %2149 = vmatpush1.msra.mxu0 0.0
    %2150 = vmatprep.subr.mxu0 0.0
    %2151 = vmatpush1.msra.mxu0 0.0
    %2152 = vmatprep.subr.mxu0 0.0
    %2153 = vmatpush1.msra.mxu0 0.0
    %2154 = vmatprep.subr.mxu0 0.0
    %2155 = vmatpush1.msra.mxu0 0.0
    %2156 = vmatprep.subr.mxu0 0.0
    %2157 = vmatpush1.msra.mxu0 0.0
    %2158 = vmatprep.subr.mxu0 0.0
    %2159 = vmatpush1.msra.mxu0 0.0
    %2160 = vmatprep.subr.mxu0 0.0
    %2161 = vmatpush1.msra.mxu0 0.0
    %2162 = vmatprep.subr.mxu0 0.0
    %2163 = vmatpush1.msra.mxu0 0.0
    %2164 = vmatprep.subr.mxu0 0.0
    %2165 = vmatpush1.msra.mxu0 0.0
    %2166 = vmatprep.subr.mxu0 0.0
    %2167 = vmatpush1.msra.mxu0 %v2113
    %2168 = vmatprep.subr.mxu0 0.0
    %2169 = vmatpush1.msra.mxu0 %v2112
    %2170 = vmatprep.subr.mxu0 0.0
    %2171 = vmatpush1.msra.mxu0 %v2111
    %2172 = vmatprep.subr.mxu0 0.0
    %2173 = vmatpush1.msra.mxu0 %v2110
    %2174 = vmatprep.subr.mxu0 0.0
    %2175 = vmatpush2.msra.mxu0 0.0
    %2176 = vmatprep.subr.mxu0 0.0
    %2177 = vmatpush2.msra.mxu0 0.0
    %2178 = vmatprep.subr.mxu0 0.0
    %2179 = vmatpush2.msra.mxu0 0.0
    %2180 = vmatprep.subr.mxu0 0.0
    %2181 = vmatpush2.msra.mxu0 0.0
    %2182 = vmatprep.subr.mxu0 0.0
    %2183 = vmatpush2.msra.mxu0 0.0
    %2184 = vmatprep.subr.mxu0 0.0
    %2185 = vmatpush2.msra.mxu0 0.0
    %2186 = vmatprep.subr.mxu0 0.0
    %2187 = vmatpush2.msra.mxu0 0.0
    %2188 = vmatprep.subr.mxu0 0.0
    %2189 = vmatpush2.msra.mxu0 0.0
    %2190 = vmatprep.subr.mxu0 0.0
    %2191 = vmatpush2.msra.mxu0 0.0
    %2192 = vmatprep.subr.mxu0 0.0
    %2193 = vmatpush2.msra.mxu0 0.0
    %2194 = vmatprep.subr.mxu0 0.0
    %2195 = vmatpush2.msra.mxu0 0.0
    %2196 = vmatprep.subr.mxu0 0.0
    %2197 = vmatpush2.msra.mxu0 0.0
    %2198 = vmatprep.subr.mxu0 0.0
    %2199 = vmatpush2.msra.mxu0 0.0
    %2200 = vmatprep.subr.mxu0 0.0
    %2201 = vmatpush2.msra.mxu0 0.0
    %2202 = vmatprep.subr.mxu0 0.0
    %2203 = vmatpush2.msra.mxu0 0.0
    %2204 = vmatprep.subr.mxu0 0.0
    %2205 = vmatpush2.msra.mxu0 0.0
    %2206 = vmatprep.mubr.f32.mxu0 0.0
    %2207 = vmatmul.mubr.f32.gmra.mxu0 %v2137
    %v2208 = vpop.f32.mrf.mxu0
    %v2209 = vadd.f32 %v2135, %v2208
    %v2210 = vpop.f32.mrf.mxu0
    %2211 = vmatprep.mubr.f32.mxu0 0.0
    %2212 = vmatmul.mubr.f32.gmra.mxu0 %v2140
    %v2213 = vpop.f32.mrf.mxu0
    %v2214 = vadd.f32 %v2135, %v2213
    %v2215 = vpop.f32.mrf.mxu0
    %2216 = vdwg.mxu0
    %2219 = vrot.lane.b32.xlu0 %v2209, 120
    %v2220 = vpop.permute.xlu0 %2219
    %2221 = vrot.lane.b32.xlu0 %v2214, 120
    %v2222 = vpop.permute.xlu0 %2221
    %2223 = vrot.lane.b32.xlu0 %v2209, 112
    %v2224 = vpop.permute.xlu0 %2223
    %2225 = vrot.lane.b32.xlu0 %v2214, 112
    %v2226 = vpop.permute.xlu0 %2225
    %2227 = vrot.lane.b32.xlu0 %v2209, 104
    %v2228 = vpop.permute.xlu0 %2227
    %2229 = vrot.lane.b32.xlu0 %v2214, 104
    %v2230 = vpop.permute.xlu0 %2229
    %2231 = vrot.lane.b32.xlu0 %v2209, 96
    %v2232 = vpop.permute.xlu0 %2231
    %v2233 = vsel %vm436, %v2209, 0
    %v2235 = vsel %vm436, %v2232, 0
    %2237 = vmatprep.subr.mxu0 0.0
    %2238 = vmatpush1.xpose.msra.mxu0 0.0
    %2239 = vmatprep.subr.mxu0 0.0
    %2240 = vmatpush1.xpose.msra.mxu0 0.0
    %2241 = vmatprep.subr.mxu0 0.0
    %2242 = vmatpush1.xpose.msra.mxu0 0.0
    %2243 = vmatprep.subr.mxu0 0.0
    %2244 = vmatpush1.xpose.msra.mxu0 0.0
    %2245 = vmatprep.subr.mxu0 0.0
    %2246 = vmatpush1.xpose.msra.mxu0 0.0
    %2247 = vmatprep.subr.mxu0 0.0
    %2248 = vmatpush1.xpose.msra.mxu0 0.0
    %2249 = vmatprep.subr.mxu0 0.0
    %2250 = vmatpush1.xpose.msra.mxu0 0.0
    %2251 = vmatprep.subr.mxu0 0.0
    %2252 = vmatpush1.xpose.msra.mxu0 0.0
    %2253 = vmatprep.subr.mxu0 0.0
    %2254 = vmatpush1.xpose.msra.mxu0 0.0
    %2255 = vmatprep.subr.mxu0 0.0
    %2256 = vmatpush1.xpose.msra.mxu0 0.0
    %2257 = vmatprep.subr.mxu0 0.0
    %2258 = vmatpush1.xpose.msra.mxu0 0.0
    %2259 = vmatprep.subr.mxu0 0.0
    %2260 = vmatpush1.xpose.msra.mxu0 0.0
    %2261 = vmatprep.subr.mxu0 0.0
    %2262 = vmatpush1.xpose.msra.mxu0 0.0
    %2263 = vmatprep.subr.mxu0 0.0
    %2264 = vmatpush1.xpose.msra.mxu0 0.0
    %2265 = vmatprep.subr.mxu0 0.0
    %2266 = vmatpush1.xpose.msra.mxu0 0.0
    %2267 = vmatprep.subr.mxu0 0.0
    %2268 = vmatpush1.xpose.msra.mxu0 %v2235
    %2269 = vmatprep.subr.mxu0 0.0
    %2270 = vmatpush2.xpose.msra.mxu0 0.0
    %2271 = vmatprep.subr.mxu0 0.0
    %2272 = vmatpush2.xpose.msra.mxu0 0.0
    %2273 = vmatprep.subr.mxu0 0.0
    %2274 = vmatpush2.xpose.msra.mxu0 0.0
    %2275 = vmatprep.subr.mxu0 0.0
    %2276 = vmatpush2.xpose.msra.mxu0 0.0
    %2277 = vmatprep.subr.mxu0 0.0
    %2278 = vmatpush2.xpose.msra.mxu0 0.0
    %2279 = vmatprep.subr.mxu0 0.0
    %2280 = vmatpush2.xpose.msra.mxu0 0.0
    %2281 = vmatprep.subr.mxu0 0.0
    %2282 = vmatpush2.xpose.msra.mxu0 0.0
    %2283 = vmatprep.subr.mxu0 0.0
    %2284 = vmatpush2.xpose.msra.mxu0 0.0
    %2285 = vmatprep.subr.mxu0 0.0
    %2286 = vmatpush2.xpose.msra.mxu0 0.0
    %2287 = vmatprep.subr.mxu0 0.0
    %2288 = vmatpush2.xpose.msra.mxu0 0.0
    %2289 = vmatprep.subr.mxu0 0.0
    %2290 = vmatpush2.xpose.msra.mxu0 0.0
    %2291 = vmatprep.subr.mxu0 0.0
    %2292 = vmatpush2.xpose.msra.mxu0 0.0
    %2293 = vmatprep.subr.mxu0 0.0
    %2294 = vmatpush2.xpose.msra.mxu0 0.0
    %2295 = vmatprep.subr.mxu0 0.0
    %2296 = vmatpush2.xpose.msra.mxu0 0.0
    %2297 = vmatprep.subr.mxu0 0.0
    %2298 = vmatpush2.xpose.msra.mxu0 0.0
    %2299 = vmatprep.subr.mxu0 0.0
    %2300 = vmatpush2.xpose.msra.mxu0 0.0
    %2301 = vmatprep.mubr.f32.mxu0 0.0
    %2302 = vmatmul.mubr.f32.gmra.mxu0 %v2233
    %v2303 = vpop.f32.mrf.mxu0
    %v2304 = vadd.f32 %v397, %v2303
    %v2305 = vpop.f32.mrf.mxu0
    %2306 = vdwg.mxu0
    %2307 = vrot.lane.b32.xlu0 %v2214, 96
    %v2308 = vpop.permute.xlu0 %2307
    %v2309 = vsel %vm436, %v2214, 0
    %v2311 = vsel %vm436, %v2308, 0
    %2313 = vmatprep.subr.mxu0 0.0
    %2314 = vmatpush1.xpose.msra.mxu0 0.0
    %2315 = vmatprep.subr.mxu0 0.0
    %2316 = vmatpush1.xpose.msra.mxu0 0.0
    %2317 = vmatprep.subr.mxu0 0.0
    %2318 = vmatpush1.xpose.msra.mxu0 0.0
    %2319 = vmatprep.subr.mxu0 0.0
    %2320 = vmatpush1.xpose.msra.mxu0 0.0
    %2321 = vmatprep.subr.mxu0 0.0
    %2322 = vmatpush1.xpose.msra.mxu0 0.0
    %2323 = vmatprep.subr.mxu0 0.0
    %2324 = vmatpush1.xpose.msra.mxu0 0.0
    %2325 = vmatprep.subr.mxu0 0.0
    %2326 = vmatpush1.xpose.msra.mxu0 0.0
    %2327 = vmatprep.subr.mxu0 0.0
    %2328 = vmatpush1.xpose.msra.mxu0 0.0
    %2329 = vmatprep.subr.mxu0 0.0
    %2330 = vmatpush1.xpose.msra.mxu0 0.0
    %2331 = vmatprep.subr.mxu0 0.0
    %2332 = vmatpush1.xpose.msra.mxu0 0.0
    %2333 = vmatprep.subr.mxu0 0.0
    %2334 = vmatpush1.xpose.msra.mxu0 0.0
    %2335 = vmatprep.subr.mxu0 0.0
    %2336 = vmatpush1.xpose.msra.mxu0 0.0
    %2337 = vmatprep.subr.mxu0 0.0
    %2338 = vmatpush1.xpose.msra.mxu0 0.0
    %2339 = vmatprep.subr.mxu0 0.0
    %2340 = vmatpush1.xpose.msra.mxu0 0.0
    %2341 = vmatprep.subr.mxu0 0.0
    %2342 = vmatpush1.xpose.msra.mxu0 0.0
    %2343 = vmatprep.subr.mxu0 0.0
    %2344 = vmatpush1.xpose.msra.mxu0 %v2311
    %2345 = vmatprep.subr.mxu0 0.0
    %2346 = vmatpush2.xpose.msra.mxu0 0.0
    %2347 = vmatprep.subr.mxu0 0.0
    %2348 = vmatpush2.xpose.msra.mxu0 0.0
    %2349 = vmatprep.subr.mxu0 0.0
    %2350 = vmatpush2.xpose.msra.mxu0 0.0
    %2351 = vmatprep.subr.mxu0 0.0
    %2352 = vmatpush2.xpose.msra.mxu0 0.0
    %2353 = vmatprep.subr.mxu0 0.0
    %2354 = vmatpush2.xpose.msra.mxu0 0.0
    %2355 = vmatprep.subr.mxu0 0.0
    %2356 = vmatpush2.xpose.msra.mxu0 0.0
    %2357 = vmatprep.subr.mxu0 0.0
    %2358 = vmatpush2.xpose.msra.mxu0 0.0
    %2359 = vmatprep.subr.mxu0 0.0
    %2360 = vmatpush2.xpose.msra.mxu0 0.0
    %2361 = vmatprep.subr.mxu0 0.0
    %2362 = vmatpush2.xpose.msra.mxu0 0.0
    %2363 = vmatprep.subr.mxu0 0.0
    %2364 = vmatpush2.xpose.msra.mxu0 0.0
    %2365 = vmatprep.subr.mxu0 0.0
    %2366 = vmatpush2.xpose.msra.mxu0 0.0
    %2367 = vmatprep.subr.mxu0 0.0
    %2368 = vmatpush2.xpose.msra.mxu0 0.0
    %2369 = vmatprep.subr.mxu0 0.0
    %2370 = vmatpush2.xpose.msra.mxu0 0.0
    %2371 = vmatprep.subr.mxu0 0.0
    %2372 = vmatpush2.xpose.msra.mxu0 0.0
    %2373 = vmatprep.subr.mxu0 0.0
    %2374 = vmatpush2.xpose.msra.mxu0 0.0
    %2375 = vmatprep.subr.mxu0 0.0
    %2376 = vmatpush2.xpose.msra.mxu0 0.0
    %2377 = vmatprep.mubr.f32.mxu0 0.0
    %2378 = vmatmul.mubr.f32.gmra.mxu0 %v2309
    %v2379 = vpop.f32.mrf.mxu0
    %v2380 = vadd.f32 %v401, %v2379
    %v2381 = vpop.f32.mrf.mxu0
    %2382 = vdwg.mxu0
    %2383 = vrot.lane.b32.xlu0 %v2220, 96
    %v2384 = vpop.permute.xlu0 %2383
    %v2385 = vsel %vm436, %v2220, 0
    %v2387 = vsel %vm436, %v2384, 0
    %2389 = vmatprep.subr.mxu0 0.0
    %2390 = vmatpush1.xpose.msra.mxu0 0.0
    %2391 = vmatprep.subr.mxu0 0.0
    %2392 = vmatpush1.xpose.msra.mxu0 0.0
    %2393 = vmatprep.subr.mxu0 0.0
    %2394 = vmatpush1.xpose.msra.mxu0 0.0
    %2395 = vmatprep.subr.mxu0 0.0
    %2396 = vmatpush1.xpose.msra.mxu0 0.0
    %2397 = vmatprep.subr.mxu0 0.0
    %2398 = vmatpush1.xpose.msra.mxu0 0.0
    %2399 = vmatprep.subr.mxu0 0.0
    %2400 = vmatpush1.xpose.msra.mxu0 0.0
    %2401 = vmatprep.subr.mxu0 0.0
    %2402 = vmatpush1.xpose.msra.mxu0 0.0
    %2403 = vmatprep.subr.mxu0 0.0
    %2404 = vmatpush1.xpose.msra.mxu0 0.0
    %2405 = vmatprep.subr.mxu0 0.0
    %2406 = vmatpush1.xpose.msra.mxu0 0.0
    %2407 = vmatprep.subr.mxu0 0.0
    %2408 = vmatpush1.xpose.msra.mxu0 0.0
    %2409 = vmatprep.subr.mxu0 0.0
    %2410 = vmatpush1.xpose.msra.mxu0 0.0
    %2411 = vmatprep.subr.mxu0 0.0
    %2412 = vmatpush1.xpose.msra.mxu0 0.0
    %2413 = vmatprep.subr.mxu0 0.0
    %2414 = vmatpush1.xpose.msra.mxu0 0.0
    %2415 = vmatprep.subr.mxu0 0.0
    %2416 = vmatpush1.xpose.msra.mxu0 0.0
    %2417 = vmatprep.subr.mxu0 0.0
    %2418 = vmatpush1.xpose.msra.mxu0 0.0
    %2419 = vmatprep.subr.mxu0 0.0
    %2420 = vmatpush1.xpose.msra.mxu0 %v2387
    %2421 = vmatprep.subr.mxu0 0.0
    %2422 = vmatpush2.xpose.msra.mxu0 0.0
    %2423 = vmatprep.subr.mxu0 0.0
    %2424 = vmatpush2.xpose.msra.mxu0 0.0
    %2425 = vmatprep.subr.mxu0 0.0
    %2426 = vmatpush2.xpose.msra.mxu0 0.0
    %2427 = vmatprep.subr.mxu0 0.0
    %2428 = vmatpush2.xpose.msra.mxu0 0.0
    %2429 = vmatprep.subr.mxu0 0.0
    %2430 = vmatpush2.xpose.msra.mxu0 0.0
    %2431 = vmatprep.subr.mxu0 0.0
    %2432 = vmatpush2.xpose.msra.mxu0 0.0
    %2433 = vmatprep.subr.mxu0 0.0
    %2434 = vmatpush2.xpose.msra.mxu0 0.0
    %2435 = vmatprep.subr.mxu0 0.0
    %2436 = vmatpush2.xpose.msra.mxu0 0.0
    %2437 = vmatprep.subr.mxu0 0.0
    %2438 = vmatpush2.xpose.msra.mxu0 0.0
    %2439 = vmatprep.subr.mxu0 0.0
    %2440 = vmatpush2.xpose.msra.mxu0 0.0
    %2441 = vmatprep.subr.mxu0 0.0
    %2442 = vmatpush2.xpose.msra.mxu0 0.0
    %2443 = vmatprep.subr.mxu0 0.0
    %2444 = vmatpush2.xpose.msra.mxu0 0.0
    %2445 = vmatprep.subr.mxu0 0.0
    %2446 = vmatpush2.xpose.msra.mxu0 0.0
    %2447 = vmatprep.subr.mxu0 0.0
    %2448 = vmatpush2.xpose.msra.mxu0 0.0
    %2449 = vmatprep.subr.mxu0 0.0
    %2450 = vmatpush2.xpose.msra.mxu0 0.0
    %2451 = vmatprep.subr.mxu0 0.0
    %2452 = vmatpush2.xpose.msra.mxu0 0.0
    %2453 = vmatprep.mubr.f32.mxu0 0.0
    %2454 = vmatmul.mubr.f32.gmra.mxu0 %v2385
    %v2455 = vpop.f32.mrf.mxu0
    %v2456 = vadd.f32 %v405, %v2455
    %v2457 = vpop.f32.mrf.mxu0
    %2458 = vdwg.mxu0
    %2459 = vrot.lane.b32.xlu0 %v2222, 96
    %v2460 = vpop.permute.xlu0 %2459
    %v2461 = vsel %vm436, %v2222, 0
    %v2463 = vsel %vm436, %v2460, 0
    %2465 = vmatprep.subr.mxu0 0.0
    %2466 = vmatpush1.xpose.msra.mxu0 0.0
    %2467 = vmatprep.subr.mxu0 0.0
    %2468 = vmatpush1.xpose.msra.mxu0 0.0
    %2469 = vmatprep.subr.mxu0 0.0
    %2470 = vmatpush1.xpose.msra.mxu0 0.0
    %2471 = vmatprep.subr.mxu0 0.0
    %2472 = vmatpush1.xpose.msra.mxu0 0.0
    %2473 = vmatprep.subr.mxu0 0.0
    %2474 = vmatpush1.xpose.msra.mxu0 0.0
    %2475 = vmatprep.subr.mxu0 0.0
    %2476 = vmatpush1.xpose.msra.mxu0 0.0
    %2477 = vmatprep.subr.mxu0 0.0
    %2478 = vmatpush1.xpose.msra.mxu0 0.0
    %2479 = vmatprep.subr.mxu0 0.0
    %2480 = vmatpush1.xpose.msra.mxu0 0.0
    %2481 = vmatprep.subr.mxu0 0.0
    %2482 = vmatpush1.xpose.msra.mxu0 0.0
    %2483 = vmatprep.subr.mxu0 0.0
    %2484 = vmatpush1.xpose.msra.mxu0 0.0
    %2485 = vmatprep.subr.mxu0 0.0
    %2486 = vmatpush1.xpose.msra.mxu0 0.0
    %2487 = vmatprep.subr.mxu0 0.0
    %2488 = vmatpush1.xpose.msra.mxu0 0.0
    %2489 = vmatprep.subr.mxu0 0.0
    %2490 = vmatpush1.xpose.msra.mxu0 0.0
    %2491 = vmatprep.subr.mxu0 0.0
    %2492 = vmatpush1.xpose.msra.mxu0 0.0
    %2493 = vmatprep.subr.mxu0 0.0
    %2494 = vmatpush1.xpose.msra.mxu0 0.0
    %2495 = vmatprep.subr.mxu0 0.0
    %2496 = vmatpush1.xpose.msra.mxu0 %v2463
    %2497 = vmatprep.subr.mxu0 0.0
    %2498 = vmatpush2.xpose.msra.mxu0 0.0
    %2499 = vmatprep.subr.mxu0 0.0
    %2500 = vmatpush2.xpose.msra.mxu0 0.0
    %2501 = vmatprep.subr.mxu0 0.0
    %2502 = vmatpush2.xpose.msra.mxu0 0.0
    %2503 = vmatprep.subr.mxu0 0.0
    %2504 = vmatpush2.xpose.msra.mxu0 0.0
    %2505 = vmatprep.subr.mxu0 0.0
    %2506 = vmatpush2.xpose.msra.mxu0 0.0
    %2507 = vmatprep.subr.mxu0 0.0
    %2508 = vmatpush2.xpose.msra.mxu0 0.0
    %2509 = vmatprep.subr.mxu0 0.0
    %2510 = vmatpush2.xpose.msra.mxu0 0.0
    %2511 = vmatprep.subr.mxu0 0.0
    %2512 = vmatpush2.xpose.msra.mxu0 0.0
    %2513 = vmatprep.subr.mxu0 0.0
    %2514 = vmatpush2.xpose.msra.mxu0 0.0
    %2515 = vmatprep.subr.mxu0 0.0
    %2516 = vmatpush2.xpose.msra.mxu0 0.0
    %2517 = vmatprep.subr.mxu0 0.0
    %2518 = vmatpush2.xpose.msra.mxu0 0.0
    %2519 = vmatprep.subr.mxu0 0.0
    %2520 = vmatpush2.xpose.msra.mxu0 0.0
    %2521 = vmatprep.subr.mxu0 0.0
    %2522 = vmatpush2.xpose.msra.mxu0 0.0
    %2523 = vmatprep.subr.mxu0 0.0
    %2524 = vmatpush2.xpose.msra.mxu0 0.0
    %2525 = vmatprep.subr.mxu0 0.0
    %2526 = vmatpush2.xpose.msra.mxu0 0.0
    %2527 = vmatprep.subr.mxu0 0.0
    %2528 = vmatpush2.xpose.msra.mxu0 0.0
    %2529 = vmatprep.mubr.f32.mxu0 0.0
    %2530 = vmatmul.mubr.f32.gmra.mxu0 %v2461
    %v2531 = vpop.f32.mrf.mxu0
    %v2532 = vadd.f32 %v409, %v2531
    %v2533 = vpop.f32.mrf.mxu0
    %2534 = vdwg.mxu0
    %2535 = vrot.lane.b32.xlu0 %v2224, 96
    %v2536 = vpop.permute.xlu0 %2535
    %v2537 = vsel %vm436, %v2224, 0
    %v2539 = vsel %vm436, %v2536, 0
    %2541 = vmatprep.subr.mxu0 0.0
    %2542 = vmatpush1.xpose.msra.mxu0 0.0
    %2543 = vmatprep.subr.mxu0 0.0
    %2544 = vmatpush1.xpose.msra.mxu0 0.0
    %2545 = vmatprep.subr.mxu0 0.0
    %2546 = vmatpush1.xpose.msra.mxu0 0.0
    %2547 = vmatprep.subr.mxu0 0.0
    %2548 = vmatpush1.xpose.msra.mxu0 0.0
    %2549 = vmatprep.subr.mxu0 0.0
    %2550 = vmatpush1.xpose.msra.mxu0 0.0
    %2551 = vmatprep.subr.mxu0 0.0
    %2552 = vmatpush1.xpose.msra.mxu0 0.0
    %2553 = vmatprep.subr.mxu0 0.0
    %2554 = vmatpush1.xpose.msra.mxu0 0.0
    %2555 = vmatprep.subr.mxu0 0.0
    %2556 = vmatpush1.xpose.msra.mxu0 0.0
    %2557 = vmatprep.subr.mxu0 0.0
    %2558 = vmatpush1.xpose.msra.mxu0 0.0
    %2559 = vmatprep.subr.mxu0 0.0
    %2560 = vmatpush1.xpose.msra.mxu0 0.0
    %2561 = vmatprep.subr.mxu0 0.0
    %2562 = vmatpush1.xpose.msra.mxu0 0.0
    %2563 = vmatprep.subr.mxu0 0.0
    %2564 = vmatpush1.xpose.msra.mxu0 0.0
    %2565 = vmatprep.subr.mxu0 0.0
    %2566 = vmatpush1.xpose.msra.mxu0 0.0
    %2567 = vmatprep.subr.mxu0 0.0
    %2568 = vmatpush1.xpose.msra.mxu0 0.0
    %2569 = vmatprep.subr.mxu0 0.0
    %2570 = vmatpush1.xpose.msra.mxu0 0.0
    %2571 = vmatprep.subr.mxu0 0.0
    %2572 = vmatpush1.xpose.msra.mxu0 %v2539
    %2573 = vmatprep.subr.mxu0 0.0
    %2574 = vmatpush2.xpose.msra.mxu0 0.0
    %2575 = vmatprep.subr.mxu0 0.0
    %2576 = vmatpush2.xpose.msra.mxu0 0.0
    %2577 = vmatprep.subr.mxu0 0.0
    %2578 = vmatpush2.xpose.msra.mxu0 0.0
    %2579 = vmatprep.subr.mxu0 0.0
    %2580 = vmatpush2.xpose.msra.mxu0 0.0
    %2581 = vmatprep.subr.mxu0 0.0
    %2582 = vmatpush2.xpose.msra.mxu0 0.0
    %2583 = vmatprep.subr.mxu0 0.0
    %2584 = vmatpush2.xpose.msra.mxu0 0.0
    %2585 = vmatprep.subr.mxu0 0.0
    %2586 = vmatpush2.xpose.msra.mxu0 0.0
    %2587 = vmatprep.subr.mxu0 0.0
    %2588 = vmatpush2.xpose.msra.mxu0 0.0
    %2589 = vmatprep.subr.mxu0 0.0
    %2590 = vmatpush2.xpose.msra.mxu0 0.0
    %2591 = vmatprep.subr.mxu0 0.0
    %2592 = vmatpush2.xpose.msra.mxu0 0.0
    %2593 = vmatprep.subr.mxu0 0.0
    %2594 = vmatpush2.xpose.msra.mxu0 0.0
    %2595 = vmatprep.subr.mxu0 0.0
    %2596 = vmatpush2.xpose.msra.mxu0 0.0
    %2597 = vmatprep.subr.mxu0 0.0
    %2598 = vmatpush2.xpose.msra.mxu0 0.0
    %2599 = vmatprep.subr.mxu0 0.0
    %2600 = vmatpush2.xpose.msra.mxu0 0.0
    %2601 = vmatprep.subr.mxu0 0.0
    %2602 = vmatpush2.xpose.msra.mxu0 0.0
    %2603 = vmatprep.subr.mxu0 0.0
    %2604 = vmatpush2.xpose.msra.mxu0 0.0
    %2605 = vmatprep.mubr.f32.mxu0 0.0
    %2606 = vmatmul.mubr.f32.gmra.mxu0 %v2537
    %v2607 = vpop.f32.mrf.mxu0
    %v2608 = vadd.f32 %v413, %v2607
    %v2609 = vpop.f32.mrf.mxu0
    %2610 = vdwg.mxu0
    %2611 = vrot.lane.b32.xlu0 %v2226, 96
    %v2612 = vpop.permute.xlu0 %2611
    %v2613 = vsel %vm436, %v2226, 0
    %v2615 = vsel %vm436, %v2612, 0
    %2617 = vmatprep.subr.mxu0 0.0
    %2618 = vmatpush1.xpose.msra.mxu0 0.0
    %2619 = vmatprep.subr.mxu0 0.0
    %2620 = vmatpush1.xpose.msra.mxu0 0.0
    %2621 = vmatprep.subr.mxu0 0.0
    %2622 = vmatpush1.xpose.msra.mxu0 0.0
    %2623 = vmatprep.subr.mxu0 0.0
    %2624 = vmatpush1.xpose.msra.mxu0 0.0
    %2625 = vmatprep.subr.mxu0 0.0
    %2626 = vmatpush1.xpose.msra.mxu0 0.0
    %2627 = vmatprep.subr.mxu0 0.0
    %2628 = vmatpush1.xpose.msra.mxu0 0.0
    %2629 = vmatprep.subr.mxu0 0.0
    %2630 = vmatpush1.xpose.msra.mxu0 0.0
    %2631 = vmatprep.subr.mxu0 0.0
    %2632 = vmatpush1.xpose.msra.mxu0 0.0
    %2633 = vmatprep.subr.mxu0 0.0
    %2634 = vmatpush1.xpose.msra.mxu0 0.0
    %2635 = vmatprep.subr.mxu0 0.0
    %2636 = vmatpush1.xpose.msra.mxu0 0.0
    %2637 = vmatprep.subr.mxu0 0.0
    %2638 = vmatpush1.xpose.msra.mxu0 0.0
    %2639 = vmatprep.subr.mxu0 0.0
    %2640 = vmatpush1.xpose.msra.mxu0 0.0
    %2641 = vmatprep.subr.mxu0 0.0
    %2642 = vmatpush1.xpose.msra.mxu0 0.0
    %2643 = vmatprep.subr.mxu0 0.0
    %2644 = vmatpush1.xpose.msra.mxu0 0.0
    %2645 = vmatprep.subr.mxu0 0.0
    %2646 = vmatpush1.xpose.msra.mxu0 0.0
    %2647 = vmatprep.subr.mxu0 0.0
    %2648 = vmatpush1.xpose.msra.mxu0 %v2615
    %2649 = vmatprep.subr.mxu0 0.0
    %2650 = vmatpush2.xpose.msra.mxu0 0.0
    %2651 = vmatprep.subr.mxu0 0.0
    %2652 = vmatpush2.xpose.msra.mxu0 0.0
    %2653 = vmatprep.subr.mxu0 0.0
    %2654 = vmatpush2.xpose.msra.mxu0 0.0
    %2655 = vmatprep.subr.mxu0 0.0
    %2656 = vmatpush2.xpose.msra.mxu0 0.0
    %2657 = vmatprep.subr.mxu0 0.0
    %2658 = vmatpush2.xpose.msra.mxu0 0.0
    %2659 = vmatprep.subr.mxu0 0.0
    %2660 = vmatpush2.xpose.msra.mxu0 0.0
    %2661 = vmatprep.subr.mxu0 0.0
    %2662 = vmatpush2.xpose.msra.mxu0 0.0
    %2663 = vmatprep.subr.mxu0 0.0
    %2664 = vmatpush2.xpose.msra.mxu0 0.0
    %2665 = vmatprep.subr.mxu0 0.0
    %2666 = vmatpush2.xpose.msra.mxu0 0.0
    %2667 = vmatprep.subr.mxu0 0.0
    %2668 = vmatpush2.xpose.msra.mxu0 0.0
    %2669 = vmatprep.subr.mxu0 0.0
    %2670 = vmatpush2.xpose.msra.mxu0 0.0
    %2671 = vmatprep.subr.mxu0 0.0
    %2672 = vmatpush2.xpose.msra.mxu0 0.0
    %2673 = vmatprep.subr.mxu0 0.0
    %2674 = vmatpush2.xpose.msra.mxu0 0.0
    %2675 = vmatprep.subr.mxu0 0.0
    %2676 = vmatpush2.xpose.msra.mxu0 0.0
    %2677 = vmatprep.subr.mxu0 0.0
    %2678 = vmatpush2.xpose.msra.mxu0 0.0
    %2679 = vmatprep.subr.mxu0 0.0
    %2680 = vmatpush2.xpose.msra.mxu0 0.0
    %2681 = vmatprep.mubr.f32.mxu0 0.0
    %2682 = vmatmul.mubr.f32.gmra.mxu0 %v2613
    %v2683 = vpop.f32.mrf.mxu0
    %v2684 = vadd.f32 %v417, %v2683
    %v2685 = vpop.f32.mrf.mxu0
    %2686 = vdwg.mxu0
    %2687 = vrot.lane.b32.xlu0 %v2228, 96
    %v2688 = vpop.permute.xlu0 %2687
    %v2689 = vsel %vm436, %v2228, 0
    %v2691 = vsel %vm436, %v2688, 0
    %2693 = vmatprep.subr.mxu0 0.0
    %2694 = vmatpush1.xpose.msra.mxu0 0.0
    %2695 = vmatprep.subr.mxu0 0.0
    %2696 = vmatpush1.xpose.msra.mxu0 0.0
    %2697 = vmatprep.subr.mxu0 0.0
    %2698 = vmatpush1.xpose.msra.mxu0 0.0
    %2699 = vmatprep.subr.mxu0 0.0
    %2700 = vmatpush1.xpose.msra.mxu0 0.0
    %2701 = vmatprep.subr.mxu0 0.0
    %2702 = vmatpush1.xpose.msra.mxu0 0.0
    %2703 = vmatprep.subr.mxu0 0.0
    %2704 = vmatpush1.xpose.msra.mxu0 0.0
    %2705 = vmatprep.subr.mxu0 0.0
    %2706 = vmatpush1.xpose.msra.mxu0 0.0
    %2707 = vmatprep.subr.mxu0 0.0
    %2708 = vmatpush1.xpose.msra.mxu0 0.0
    %2709 = vmatprep.subr.mxu0 0.0
    %2710 = vmatpush1.xpose.msra.mxu0 0.0
    %2711 = vmatprep.subr.mxu0 0.0
    %2712 = vmatpush1.xpose.msra.mxu0 0.0
    %2713 = vmatprep.subr.mxu0 0.0
    %2714 = vmatpush1.xpose.msra.mxu0 0.0
    %2715 = vmatprep.subr.mxu0 0.0
    %2716 = vmatpush1.xpose.msra.mxu0 0.0
    %2717 = vmatprep.subr.mxu0 0.0
    %2718 = vmatpush1.xpose.msra.mxu0 0.0
    %2719 = vmatprep.subr.mxu0 0.0
    %2720 = vmatpush1.xpose.msra.mxu0 0.0
    %2721 = vmatprep.subr.mxu0 0.0
    %2722 = vmatpush1.xpose.msra.mxu0 0.0
    %2723 = vmatprep.subr.mxu0 0.0
    %2724 = vmatpush1.xpose.msra.mxu0 %v2691
    %2725 = vmatprep.subr.mxu0 0.0
    %2726 = vmatpush2.xpose.msra.mxu0 0.0
    %2727 = vmatprep.subr.mxu0 0.0
    %2728 = vmatpush2.xpose.msra.mxu0 0.0
    %2729 = vmatprep.subr.mxu0 0.0
    %2730 = vmatpush2.xpose.msra.mxu0 0.0
    %2731 = vmatprep.subr.mxu0 0.0
    %2732 = vmatpush2.xpose.msra.mxu0 0.0
    %2733 = vmatprep.subr.mxu0 0.0
    %2734 = vmatpush2.xpose.msra.mxu0 0.0
    %2735 = vmatprep.subr.mxu0 0.0
    %2736 = vmatpush2.xpose.msra.mxu0 0.0
    %2737 = vmatprep.subr.mxu0 0.0
    %2738 = vmatpush2.xpose.msra.mxu0 0.0
    %2739 = vmatprep.subr.mxu0 0.0
    %2740 = vmatpush2.xpose.msra.mxu0 0.0
    %2741 = vmatprep.subr.mxu0 0.0
    %2742 = vmatpush2.xpose.msra.mxu0 0.0
    %2743 = vmatprep.subr.mxu0 0.0
    %2744 = vmatpush2.xpose.msra.mxu0 0.0
    %2745 = vmatprep.subr.mxu0 0.0
    %2746 = vmatpush2.xpose.msra.mxu0 0.0
    %2747 = vmatprep.subr.mxu0 0.0
    %2748 = vmatpush2.xpose.msra.mxu0 0.0
    %2749 = vmatprep.subr.mxu0 0.0
    %2750 = vmatpush2.xpose.msra.mxu0 0.0
    %2751 = vmatprep.subr.mxu0 0.0
    %2752 = vmatpush2.xpose.msra.mxu0 0.0
    %2753 = vmatprep.subr.mxu0 0.0
    %2754 = vmatpush2.xpose.msra.mxu0 0.0
    %2755 = vmatprep.subr.mxu0 0.0
    %2756 = vmatpush2.xpose.msra.mxu0 0.0
    %2757 = vmatprep.mubr.f32.mxu0 0.0
    %2758 = vmatmul.mubr.f32.gmra.mxu0 %v2689
    %v2759 = vpop.f32.mrf.mxu0
    %v2760 = vadd.f32 %v421, %v2759
    %v2761 = vpop.f32.mrf.mxu0
    %2762 = vdwg.mxu0
    %2763 = vrot.lane.b32.xlu0 %v2230, 96
    %v2764 = vpop.permute.xlu0 %2763
    %v2765 = vsel %vm436, %v2230, 0
    %v2767 = vsel %vm436, %v2764, 0
    %2769 = vmatprep.subr.mxu0 0.0
    %2770 = vmatpush1.xpose.msra.mxu0 0.0
    %2771 = vmatprep.subr.mxu0 0.0
    %2772 = vmatpush1.xpose.msra.mxu0 0.0
    %2773 = vmatprep.subr.mxu0 0.0
    %2774 = vmatpush1.xpose.msra.mxu0 0.0
    %2775 = vmatprep.subr.mxu0 0.0
    %2776 = vmatpush1.xpose.msra.mxu0 0.0
    %2777 = vmatprep.subr.mxu0 0.0
    %2778 = vmatpush1.xpose.msra.mxu0 0.0
    %2779 = vmatprep.subr.mxu0 0.0
    %2780 = vmatpush1.xpose.msra.mxu0 0.0
    %2781 = vmatprep.subr.mxu0 0.0
    %2782 = vmatpush1.xpose.msra.mxu0 0.0
    %2783 = vmatprep.subr.mxu0 0.0
    %2784 = vmatpush1.xpose.msra.mxu0 0.0
    %2785 = vmatprep.subr.mxu0 0.0
    %2786 = vmatpush1.xpose.msra.mxu0 0.0
    %2787 = vmatprep.subr.mxu0 0.0
    %2788 = vmatpush1.xpose.msra.mxu0 0.0
    %2789 = vmatprep.subr.mxu0 0.0
    %2790 = vmatpush1.xpose.msra.mxu0 0.0
    %2791 = vmatprep.subr.mxu0 0.0
    %2792 = vmatpush1.xpose.msra.mxu0 0.0
    %2793 = vmatprep.subr.mxu0 0.0
    %2794 = vmatpush1.xpose.msra.mxu0 0.0
    %2795 = vmatprep.subr.mxu0 0.0
    %2796 = vmatpush1.xpose.msra.mxu0 0.0
    %2797 = vmatprep.subr.mxu0 0.0
    %2798 = vmatpush1.xpose.msra.mxu0 0.0
    %2799 = vmatprep.subr.mxu0 0.0
    %2800 = vmatpush1.xpose.msra.mxu0 %v2767
    %2801 = vmatprep.subr.mxu0 0.0
    %2802 = vmatpush2.xpose.msra.mxu0 0.0
    %2803 = vmatprep.subr.mxu0 0.0
    %2804 = vmatpush2.xpose.msra.mxu0 0.0
    %2805 = vmatprep.subr.mxu0 0.0
    %2806 = vmatpush2.xpose.msra.mxu0 0.0
    %2807 = vmatprep.subr.mxu0 0.0
    %2808 = vmatpush2.xpose.msra.mxu0 0.0
    %2809 = vmatprep.subr.mxu0 0.0
    %2810 = vmatpush2.xpose.msra.mxu0 0.0
    %2811 = vmatprep.subr.mxu0 0.0
    %2812 = vmatpush2.xpose.msra.mxu0 0.0
    %2813 = vmatprep.subr.mxu0 0.0
    %2814 = vmatpush2.xpose.msra.mxu0 0.0
    %2815 = vmatprep.subr.mxu0 0.0
    %2816 = vmatpush2.xpose.msra.mxu0 0.0
    %2817 = vmatprep.subr.mxu0 0.0
    %2818 = vmatpush2.xpose.msra.mxu0 0.0
    %2819 = vmatprep.subr.mxu0 0.0
    %2820 = vmatpush2.xpose.msra.mxu0 0.0
    %2821 = vmatprep.subr.mxu0 0.0
    %2822 = vmatpush2.xpose.msra.mxu0 0.0
    %2823 = vmatprep.subr.mxu0 0.0
    %2824 = vmatpush2.xpose.msra.mxu0 0.0
    %2825 = vmatprep.subr.mxu0 0.0
    %2826 = vmatpush2.xpose.msra.mxu0 0.0
    %2827 = vmatprep.subr.mxu0 0.0
    %2828 = vmatpush2.xpose.msra.mxu0 0.0
    %2829 = vmatprep.subr.mxu0 0.0
    %2830 = vmatpush2.xpose.msra.mxu0 0.0
    %2831 = vmatprep.subr.mxu0 0.0
    %2832 = vmatpush2.xpose.msra.mxu0 0.0
    %2833 = vmatprep.mubr.f32.mxu0 0.0
    %2834 = vmatmul.mubr.f32.gmra.mxu0 %v2765
    %v2835 = vpop.f32.mrf.mxu0
    %v2836 = vadd.f32 %v425, %v2835
    %v2837 = vpop.f32.mrf.mxu0
    %2838 = vdwg.mxu0
    %v2839 = vsel %vm436, %v2304, -inf
    %2840 = vmax.xlane.f32.xlu0 %v2839
    %v2841 = vpop.xlane.xlu0 %2840
    %v2842 = vsel %vm436, %v2380, -inf
    %2843 = vmax.xlane.f32.xlu0 %v2842
    %v2844 = vpop.xlane.xlu0 %2843
    %v2845 = vsel %vm436, %v2456, -inf
    %2846 = vmax.xlane.f32.xlu0 %v2845
    %v2847 = vpop.xlane.xlu0 %2846
    %v2848 = vsel %vm436, %v2532, -inf
    %2849 = vmax.xlane.f32.xlu0 %v2848
    %v2850 = vpop.xlane.xlu0 %2849
    %v2851 = vsel %vm436, %v2608, -inf
    %2852 = vmax.xlane.f32.xlu0 %v2851
    %v2853 = vpop.xlane.xlu0 %2852
    %v2854 = vsel %vm436, %v2684, -inf
    %2855 = vmax.xlane.f32.xlu0 %v2854
    %v2856 = vpop.xlane.xlu0 %2855
    %v2857 = vsel %vm436, %v2760, -inf
    %2858 = vmax.xlane.f32.xlu0 %v2857
    %v2859 = vpop.xlane.xlu0 %2858
    %v2860 = vsel %vm436, %v2836, -inf
    %2861 = vmax.xlane.f32.xlu0 %v2860
    %v2862 = vpop.xlane.xlu0 %2861
    %v2863 = vsub.f32 %v2304, %v2841
    %v2864 = vsub.f32 %v2380, %v2844
    %v2865 = vsub.f32 %v2456, %v2847
    %v2866 = vsub.f32 %v2532, %v2850
    %v2867 = vsub.f32 %v2608, %v2853
    %v2868 = vsub.f32 %v2684, %v2856
    %v2869 = vsub.f32 %v2760, %v2859
    %v2870 = vsub.f32 %v2836, %v2862
    %v2871 = vmul.f32 %v2863, 1.442695
    %v2872 = vpow.pop %v2871
    %v2873 = vmul.f32 %v2864, 1.442695
    %v2874 = vpow.pop %v2873
    %v2875 = vmul.f32 %v2865, 1.442695
    %v2876 = vpow.pop %v2875
    %v2877 = vmul.f32 %v2866, 1.442695
    %v2878 = vpow.pop %v2877
    %v2879 = vmul.f32 %v2867, 1.442695
    %v2880 = vpow.pop %v2879
    %v2881 = vmul.f32 %v2868, 1.442695
    %v2882 = vpow.pop %v2881
    %v2883 = vmul.f32 %v2869, 1.442695
    %v2884 = vpow.pop %v2883
    %v2885 = vmul.f32 %v2870, 1.442695
    %v2886 = vpow.pop %v2885
    %v2887 = vsel %vm436, %v2872, 0.0
    %2888 = vadd.xlane.f32.xlu0 %v2887
    %v2889 = vpop.xlane.xlu0 %2888
    %v2890 = vsel %vm436, %v2874, 0.0
    %2891 = vadd.xlane.f32.xlu0 %v2890
    %v2892 = vpop.xlane.xlu0 %2891
    %v2893 = vsel %vm436, %v2876, 0.0
    %2894 = vadd.xlane.f32.xlu0 %v2893
    %v2895 = vpop.xlane.xlu0 %2894
    %v2896 = vsel %vm436, %v2878, 0.0
    %2897 = vadd.xlane.f32.xlu0 %v2896
    %v2898 = vpop.xlane.xlu0 %2897
    %v2899 = vsel %vm436, %v2880, 0.0
    %2900 = vadd.xlane.f32.xlu0 %v2899
    %v2901 = vpop.xlane.xlu0 %2900
    %v2902 = vsel %vm436, %v2882, 0.0
    %2903 = vadd.xlane.f32.xlu0 %v2902
    %v2904 = vpop.xlane.xlu0 %2903
    %v2905 = vsel %vm436, %v2884, 0.0
    %2906 = vadd.xlane.f32.xlu0 %v2905
    %v2907 = vpop.xlane.xlu0 %2906
    %v2908 = vsel %vm436, %v2886, 0.0
    %2909 = vadd.xlane.f32.xlu0 %v2908
    %v2910 = vpop.xlane.xlu0 %2909
    %2911 = vrot.lane.b32.xlu0 %v2209, 64
    %v2912 = vpop.permute.xlu0 %2911
    %v2915 = vsel %vm436, %v2872, 0
    %2917 = vmatprep.subr.mxu0 0.0
    %2918 = vmatpush1.msra.mxu0 0.0
    %2919 = vmatprep.subr.mxu0 0.0
    %2920 = vmatpush1.msra.mxu0 0.0
    %2921 = vmatprep.subr.mxu0 0.0
    %2922 = vmatpush1.msra.mxu0 0.0
    %2923 = vmatprep.subr.mxu0 0.0
    %2924 = vmatpush1.msra.mxu0 0.0
    %2925 = vmatprep.subr.mxu0 0.0
    %2926 = vmatpush1.msra.mxu0 0.0
    %2927 = vmatprep.subr.mxu0 0.0
    %2928 = vmatpush1.msra.mxu0 0.0
    %2929 = vmatprep.subr.mxu0 0.0
    %2930 = vmatpush1.msra.mxu0 0.0
    %2931 = vmatprep.subr.mxu0 0.0
    %2932 = vmatpush1.msra.mxu0 0.0
    %2933 = vmatprep.subr.mxu0 0.0
    %2934 = vmatpush1.msra.mxu0 0.0
    %2935 = vmatprep.subr.mxu0 0.0
    %2936 = vmatpush1.msra.mxu0 0.0
    %2937 = vmatprep.subr.mxu0 0.0
    %2938 = vmatpush1.msra.mxu0 0.0
    %2939 = vmatprep.subr.mxu0 0.0
    %2940 = vmatpush1.msra.mxu0 0.0
    %2941 = vmatprep.subr.mxu0 0.0
    %2942 = vmatpush1.msra.mxu0 0.0
    %2943 = vmatprep.subr.mxu0 0.0
    %2944 = vmatpush1.msra.mxu0 0.0
    %2945 = vmatprep.subr.mxu0 0.0
    %2946 = vmatpush1.msra.mxu0 0.0
    %2947 = vmatprep.subr.mxu0 0.0
    %2948 = vmatpush1.msra.mxu0 %v2912
    %2949 = vmatprep.subr.mxu0 0.0
    %2950 = vmatpush2.msra.mxu0 0.0
    %2951 = vmatprep.subr.mxu0 0.0
    %2952 = vmatpush2.msra.mxu0 0.0
    %2953 = vmatprep.subr.mxu0 0.0
    %2954 = vmatpush2.msra.mxu0 0.0
    %2955 = vmatprep.subr.mxu0 0.0
    %2956 = vmatpush2.msra.mxu0 0.0
    %2957 = vmatprep.subr.mxu0 0.0
    %2958 = vmatpush2.msra.mxu0 0.0
    %2959 = vmatprep.subr.mxu0 0.0
    %2960 = vmatpush2.msra.mxu0 0.0
    %2961 = vmatprep.subr.mxu0 0.0
    %2962 = vmatpush2.msra.mxu0 0.0
    %2963 = vmatprep.subr.mxu0 0.0
    %2964 = vmatpush2.msra.mxu0 0.0
    %2965 = vmatprep.subr.mxu0 0.0
    %2966 = vmatpush2.msra.mxu0 0.0
    %2967 = vmatprep.subr.mxu0 0.0
    %2968 = vmatpush2.msra.mxu0 0.0
    %2969 = vmatprep.subr.mxu0 0.0
    %2970 = vmatpush2.msra.mxu0 0.0
    %2971 = vmatprep.subr.mxu0 0.0
    %2972 = vmatpush2.msra.mxu0 0.0
    %2973 = vmatprep.subr.mxu0 0.0
    %2974 = vmatpush2.msra.mxu0 0.0
    %2975 = vmatprep.subr.mxu0 0.0
    %2976 = vmatpush2.msra.mxu0 0.0
    %2977 = vmatprep.subr.mxu0 0.0
    %2978 = vmatpush2.msra.mxu0 0.0
    %2979 = vmatprep.subr.mxu0 0.0
    %2980 = vmatpush2.msra.mxu0 0.0
    %2981 = vmatprep.mubr.f32.mxu0 0.0
    %2982 = vmatmul.mubr.f32.gmra.mxu0 %v2915
    %v2983 = vpop.f32.mrf.mxu0
    %v2984 = vadd.f32 0.0, %v2983
    %v2985 = vpop.f32.mrf.mxu0
    %2986 = vdwg.mxu0
    %2987 = vrot.lane.b32.xlu0 %v2214, 64
    %v2988 = vpop.permute.xlu0 %2987
    %v2991 = vsel %vm436, %v2874, 0
    %2993 = vmatprep.subr.mxu0 0.0
    %2994 = vmatpush1.msra.mxu0 0.0
    %2995 = vmatprep.subr.mxu0 0.0
    %2996 = vmatpush1.msra.mxu0 0.0
    %2997 = vmatprep.subr.mxu0 0.0
    %2998 = vmatpush1.msra.mxu0 0.0
    %2999 = vmatprep.subr.mxu0 0.0
    %3000 = vmatpush1.msra.mxu0 0.0
    %3001 = vmatprep.subr.mxu0 0.0
    %3002 = vmatpush1.msra.mxu0 0.0
    %3003 = vmatprep.subr.mxu0 0.0
    %3004 = vmatpush1.msra.mxu0 0.0
    %3005 = vmatprep.subr.mxu0 0.0
    %3006 = vmatpush1.msra.mxu0 0.0
    %3007 = vmatprep.subr.mxu0 0.0
    %3008 = vmatpush1.msra.mxu0 0.0
    %3009 = vmatprep.subr.mxu0 0.0
    %3010 = vmatpush1.msra.mxu0 0.0
    %3011 = vmatprep.subr.mxu0 0.0
    %3012 = vmatpush1.msra.mxu0 0.0
    %3013 = vmatprep.subr.mxu0 0.0
    %3014 = vmatpush1.msra.mxu0 0.0
    %3015 = vmatprep.subr.mxu0 0.0
    %3016 = vmatpush1.msra.mxu0 0.0
    %3017 = vmatprep.subr.mxu0 0.0
    %3018 = vmatpush1.msra.mxu0 0.0
    %3019 = vmatprep.subr.mxu0 0.0
    %3020 = vmatpush1.msra.mxu0 0.0
    %3021 = vmatprep.subr.mxu0 0.0
    %3022 = vmatpush1.msra.mxu0 0.0
    %3023 = vmatprep.subr.mxu0 0.0
    %3024 = vmatpush1.msra.mxu0 %v2988
    %3025 = vmatprep.subr.mxu0 0.0
    %3026 = vmatpush2.msra.mxu0 0.0
    %3027 = vmatprep.subr.mxu0 0.0
    %3028 = vmatpush2.msra.mxu0 0.0
    %3029 = vmatprep.subr.mxu0 0.0
    %3030 = vmatpush2.msra.mxu0 0.0
    %3031 = vmatprep.subr.mxu0 0.0
    %3032 = vmatpush2.msra.mxu0 0.0
    %3033 = vmatprep.subr.mxu0 0.0
    %3034 = vmatpush2.msra.mxu0 0.0
    %3035 = vmatprep.subr.mxu0 0.0
    %3036 = vmatpush2.msra.mxu0 0.0
    %3037 = vmatprep.subr.mxu0 0.0
    %3038 = vmatpush2.msra.mxu0 0.0
    %3039 = vmatprep.subr.mxu0 0.0
    %3040 = vmatpush2.msra.mxu0 0.0
    %3041 = vmatprep.subr.mxu0 0.0
    %3042 = vmatpush2.msra.mxu0 0.0
    %3043 = vmatprep.subr.mxu0 0.0
    %3044 = vmatpush2.msra.mxu0 0.0
    %3045 = vmatprep.subr.mxu0 0.0
    %3046 = vmatpush2.msra.mxu0 0.0
    %3047 = vmatprep.subr.mxu0 0.0
    %3048 = vmatpush2.msra.mxu0 0.0
    %3049 = vmatprep.subr.mxu0 0.0
    %3050 = vmatpush2.msra.mxu0 0.0
    %3051 = vmatprep.subr.mxu0 0.0
    %3052 = vmatpush2.msra.mxu0 0.0
    %3053 = vmatprep.subr.mxu0 0.0
    %3054 = vmatpush2.msra.mxu0 0.0
    %3055 = vmatprep.subr.mxu0 0.0
    %3056 = vmatpush2.msra.mxu0 0.0
    %3057 = vmatprep.mubr.f32.mxu0 0.0
    %3058 = vmatmul.mubr.f32.gmra.mxu0 %v2991
    %v3059 = vpop.f32.mrf.mxu0
    %v3060 = vadd.f32 0.0, %v3059
    %v3061 = vpop.f32.mrf.mxu0
    %3062 = vdwg.mxu0
    %3063 = vrot.lane.b32.xlu0 %v2220, 64
    %v3064 = vpop.permute.xlu0 %3063
    %v3067 = vsel %vm436, %v2876, 0
    %3069 = vmatprep.subr.mxu0 0.0
    %3070 = vmatpush1.msra.mxu0 0.0
    %3071 = vmatprep.subr.mxu0 0.0
    %3072 = vmatpush1.msra.mxu0 0.0
    %3073 = vmatprep.subr.mxu0 0.0
    %3074 = vmatpush1.msra.mxu0 0.0
    %3075 = vmatprep.subr.mxu0 0.0
    %3076 = vmatpush1.msra.mxu0 0.0
    %3077 = vmatprep.subr.mxu0 0.0
    %3078 = vmatpush1.msra.mxu0 0.0
    %3079 = vmatprep.subr.mxu0 0.0
    %3080 = vmatpush1.msra.mxu0 0.0
    %3081 = vmatprep.subr.mxu0 0.0
    %3082 = vmatpush1.msra.mxu0 0.0
    %3083 = vmatprep.subr.mxu0 0.0
    %3084 = vmatpush1.msra.mxu0 0.0
    %3085 = vmatprep.subr.mxu0 0.0
    %3086 = vmatpush1.msra.mxu0 0.0
    %3087 = vmatprep.subr.mxu0 0.0
    %3088 = vmatpush1.msra.mxu0 0.0
    %3089 = vmatprep.subr.mxu0 0.0
    %3090 = vmatpush1.msra.mxu0 0.0
    %3091 = vmatprep.subr.mxu0 0.0
    %3092 = vmatpush1.msra.mxu0 0.0
    %3093 = vmatprep.subr.mxu0 0.0
    %3094 = vmatpush1.msra.mxu0 0.0
    %3095 = vmatprep.subr.mxu0 0.0
    %3096 = vmatpush1.msra.mxu0 0.0
    %3097 = vmatprep.subr.mxu0 0.0
    %3098 = vmatpush1.msra.mxu0 0.0
    %3099 = vmatprep.subr.mxu0 0.0
    %3100 = vmatpush1.msra.mxu0 %v3064
    %3101 = vmatprep.subr.mxu0 0.0
    %3102 = vmatpush2.msra.mxu0 0.0
    %3103 = vmatprep.subr.mxu0 0.0
    %3104 = vmatpush2.msra.mxu0 0.0
    %3105 = vmatprep.subr.mxu0 0.0
    %3106 = vmatpush2.msra.mxu0 0.0
    %3107 = vmatprep.subr.mxu0 0.0
    %3108 = vmatpush2.msra.mxu0 0.0
    %3109 = vmatprep.subr.mxu0 0.0
    %3110 = vmatpush2.msra.mxu0 0.0
    %3111 = vmatprep.subr.mxu0 0.0
    %3112 = vmatpush2.msra.mxu0 0.0
    %3113 = vmatprep.subr.mxu0 0.0
    %3114 = vmatpush2.msra.mxu0 0.0
    %3115 = vmatprep.subr.mxu0 0.0
    %3116 = vmatpush2.msra.mxu0 0.0
    %3117 = vmatprep.subr.mxu0 0.0
    %3118 = vmatpush2.msra.mxu0 0.0
    %3119 = vmatprep.subr.mxu0 0.0
    %3120 = vmatpush2.msra.mxu0 0.0
    %3121 = vmatprep.subr.mxu0 0.0
    %3122 = vmatpush2.msra.mxu0 0.0
    %3123 = vmatprep.subr.mxu0 0.0
    %3124 = vmatpush2.msra.mxu0 0.0
    %3125 = vmatprep.subr.mxu0 0.0
    %3126 = vmatpush2.msra.mxu0 0.0
    %3127 = vmatprep.subr.mxu0 0.0
    %3128 = vmatpush2.msra.mxu0 0.0
    %3129 = vmatprep.subr.mxu0 0.0
    %3130 = vmatpush2.msra.mxu0 0.0
    %3131 = vmatprep.subr.mxu0 0.0
    %3132 = vmatpush2.msra.mxu0 0.0
    %3133 = vmatprep.mubr.f32.mxu0 0.0
    %3134 = vmatmul.mubr.f32.gmra.mxu0 %v3067
    %v3135 = vpop.f32.mrf.mxu0
    %v3136 = vadd.f32 0.0, %v3135
    %v3137 = vpop.f32.mrf.mxu0
    %3138 = vdwg.mxu0
    %3139 = vrot.lane.b32.xlu0 %v2222, 64
    %v3140 = vpop.permute.xlu0 %3139
    %v3143 = vsel %vm436, %v2878, 0
    %3145 = vmatprep.subr.mxu0 0.0
    %3146 = vmatpush1.msra.mxu0 0.0
    %3147 = vmatprep.subr.mxu0 0.0
    %3148 = vmatpush1.msra.mxu0 0.0
    %3149 = vmatprep.subr.mxu0 0.0
    %3150 = vmatpush1.msra.mxu0 0.0
    %3151 = vmatprep.subr.mxu0 0.0
    %3152 = vmatpush1.msra.mxu0 0.0
    %3153 = vmatprep.subr.mxu0 0.0
    %3154 = vmatpush1.msra.mxu0 0.0
    %3155 = vmatprep.subr.mxu0 0.0
    %3156 = vmatpush1.msra.mxu0 0.0
    %3157 = vmatprep.subr.mxu0 0.0
    %3158 = vmatpush1.msra.mxu0 0.0
    %3159 = vmatprep.subr.mxu0 0.0
    %3160 = vmatpush1.msra.mxu0 0.0
    %3161 = vmatprep.subr.mxu0 0.0
    %3162 = vmatpush1.msra.mxu0 0.0
    %3163 = vmatprep.subr.mxu0 0.0
    %3164 = vmatpush1.msra.mxu0 0.0
    %3165 = vmatprep.subr.mxu0 0.0
    %3166 = vmatpush1.msra.mxu0 0.0
    %3167 = vmatprep.subr.mxu0 0.0
    %3168 = vmatpush1.msra.mxu0 0.0
    %3169 = vmatprep.subr.mxu0 0.0
    %3170 = vmatpush1.msra.mxu0 0.0
    %3171 = vmatprep.subr.mxu0 0.0
    %3172 = vmatpush1.msra.mxu0 0.0
    %3173 = vmatprep.subr.mxu0 0.0
    %3174 = vmatpush1.msra.mxu0 0.0
    %3175 = vmatprep.subr.mxu0 0.0
    %3176 = vmatpush1.msra.mxu0 %v3140
    %3177 = vmatprep.subr.mxu0 0.0
    %3178 = vmatpush2.msra.mxu0 0.0
    %3179 = vmatprep.subr.mxu0 0.0
    %3180 = vmatpush2.msra.mxu0 0.0
    %3181 = vmatprep.subr.mxu0 0.0
    %3182 = vmatpush2.msra.mxu0 0.0
    %3183 = vmatprep.subr.mxu0 0.0
    %3184 = vmatpush2.msra.mxu0 0.0
    %3185 = vmatprep.subr.mxu0 0.0
    %3186 = vmatpush2.msra.mxu0 0.0
    %3187 = vmatprep.subr.mxu0 0.0
    %3188 = vmatpush2.msra.mxu0 0.0
    %3189 = vmatprep.subr.mxu0 0.0
    %3190 = vmatpush2.msra.mxu0 0.0
    %3191 = vmatprep.subr.mxu0 0.0
    %3192 = vmatpush2.msra.mxu0 0.0
    %3193 = vmatprep.subr.mxu0 0.0
    %3194 = vmatpush2.msra.mxu0 0.0
    %3195 = vmatprep.subr.mxu0 0.0
    %3196 = vmatpush2.msra.mxu0 0.0
    %3197 = vmatprep.subr.mxu0 0.0
    %3198 = vmatpush2.msra.mxu0 0.0
    %3199 = vmatprep.subr.mxu0 0.0
    %3200 = vmatpush2.msra.mxu0 0.0
    %3201 = vmatprep.subr.mxu0 0.0
    %3202 = vmatpush2.msra.mxu0 0.0
    %3203 = vmatprep.subr.mxu0 0.0
    %3204 = vmatpush2.msra.mxu0 0.0
    %3205 = vmatprep.subr.mxu0 0.0
    %3206 = vmatpush2.msra.mxu0 0.0
    %3207 = vmatprep.subr.mxu0 0.0
    %3208 = vmatpush2.msra.mxu0 0.0
    %3209 = vmatprep.mubr.f32.mxu0 0.0
    %3210 = vmatmul.mubr.f32.gmra.mxu0 %v3143
    %v3211 = vpop.f32.mrf.mxu0
    %v3212 = vadd.f32 0.0, %v3211
    %v3213 = vpop.f32.mrf.mxu0
    %3214 = vdwg.mxu0
    %3215 = vrot.lane.b32.xlu0 %v2224, 64
    %v3216 = vpop.permute.xlu0 %3215
    %v3219 = vsel %vm436, %v2880, 0
    %3221 = vmatprep.subr.mxu0 0.0
    %3222 = vmatpush1.msra.mxu0 0.0
    %3223 = vmatprep.subr.mxu0 0.0
    %3224 = vmatpush1.msra.mxu0 0.0
    %3225 = vmatprep.subr.mxu0 0.0
    %3226 = vmatpush1.msra.mxu0 0.0
    %3227 = vmatprep.subr.mxu0 0.0
    %3228 = vmatpush1.msra.mxu0 0.0
    %3229 = vmatprep.subr.mxu0 0.0
    %3230 = vmatpush1.msra.mxu0 0.0
    %3231 = vmatprep.subr.mxu0 0.0
    %3232 = vmatpush1.msra.mxu0 0.0
    %3233 = vmatprep.subr.mxu0 0.0
    %3234 = vmatpush1.msra.mxu0 0.0
    %3235 = vmatprep.subr.mxu0 0.0
    %3236 = vmatpush1.msra.mxu0 0.0
    %3237 = vmatprep.subr.mxu0 0.0
    %3238 = vmatpush1.msra.mxu0 0.0
    %3239 = vmatprep.subr.mxu0 0.0
    %3240 = vmatpush1.msra.mxu0 0.0
    %3241 = vmatprep.subr.mxu0 0.0
    %3242 = vmatpush1.msra.mxu0 0.0
    %3243 = vmatprep.subr.mxu0 0.0
    %3244 = vmatpush1.msra.mxu0 0.0
    %3245 = vmatprep.subr.mxu0 0.0
    %3246 = vmatpush1.msra.mxu0 0.0
    %3247 = vmatprep.subr.mxu0 0.0
    %3248 = vmatpush1.msra.mxu0 0.0
    %3249 = vmatprep.subr.mxu0 0.0
    %3250 = vmatpush1.msra.mxu0 0.0
    %3251 = vmatprep.subr.mxu0 0.0
    %3252 = vmatpush1.msra.mxu0 %v3216
    %3253 = vmatprep.subr.mxu0 0.0
    %3254 = vmatpush2.msra.mxu0 0.0
    %3255 = vmatprep.subr.mxu0 0.0
    %3256 = vmatpush2.msra.mxu0 0.0
    %3257 = vmatprep.subr.mxu0 0.0
    %3258 = vmatpush2.msra.mxu0 0.0
    %3259 = vmatprep.subr.mxu0 0.0
    %3260 = vmatpush2.msra.mxu0 0.0
    %3261 = vmatprep.subr.mxu0 0.0
    %3262 = vmatpush2.msra.mxu0 0.0
    %3263 = vmatprep.subr.mxu0 0.0
    %3264 = vmatpush2.msra.mxu0 0.0
    %3265 = vmatprep.subr.mxu0 0.0
    %3266 = vmatpush2.msra.mxu0 0.0
    %3267 = vmatprep.subr.mxu0 0.0
    %3268 = vmatpush2.msra.mxu0 0.0
    %3269 = vmatprep.subr.mxu0 0.0
    %3270 = vmatpush2.msra.mxu0 0.0
    %3271 = vmatprep.subr.mxu0 0.0
    %3272 = vmatpush2.msra.mxu0 0.0
    %3273 = vmatprep.subr.mxu0 0.0
    %3274 = vmatpush2.msra.mxu0 0.0
    %3275 = vmatprep.subr.mxu0 0.0
    %3276 = vmatpush2.msra.mxu0 0.0
    %3277 = vmatprep.subr.mxu0 0.0
    %3278 = vmatpush2.msra.mxu0 0.0
    %3279 = vmatprep.subr.mxu0 0.0
    %3280 = vmatpush2.msra.mxu0 0.0
    %3281 = vmatprep.subr.mxu0 0.0
    %3282 = vmatpush2.msra.mxu0 0.0
    %3283 = vmatprep.subr.mxu0 0.0
    %3284 = vmatpush2.msra.mxu0 0.0
    %3285 = vmatprep.mubr.f32.mxu0 0.0
    %3286 = vmatmul.mubr.f32.gmra.mxu0 %v3219
    %v3287 = vpop.f32.mrf.mxu0
    %v3288 = vadd.f32 0.0, %v3287
    %v3289 = vpop.f32.mrf.mxu0
    %3290 = vdwg.mxu0
    %3291 = vrot.lane.b32.xlu0 %v2226, 64
    %v3292 = vpop.permute.xlu0 %3291
    %v3295 = vsel %vm436, %v2882, 0
    %3297 = vmatprep.subr.mxu0 0.0
    %3298 = vmatpush1.msra.mxu0 0.0
    %3299 = vmatprep.subr.mxu0 0.0
    %3300 = vmatpush1.msra.mxu0 0.0
    %3301 = vmatprep.subr.mxu0 0.0
    %3302 = vmatpush1.msra.mxu0 0.0
    %3303 = vmatprep.subr.mxu0 0.0
    %3304 = vmatpush1.msra.mxu0 0.0
    %3305 = vmatprep.subr.mxu0 0.0
    %3306 = vmatpush1.msra.mxu0 0.0
    %3307 = vmatprep.subr.mxu0 0.0
    %3308 = vmatpush1.msra.mxu0 0.0
    %3309 = vmatprep.subr.mxu0 0.0
    %3310 = vmatpush1.msra.mxu0 0.0
    %3311 = vmatprep.subr.mxu0 0.0
    %3312 = vmatpush1.msra.mxu0 0.0
    %3313 = vmatprep.subr.mxu0 0.0
    %3314 = vmatpush1.msra.mxu0 0.0
    %3315 = vmatprep.subr.mxu0 0.0
    %3316 = vmatpush1.msra.mxu0 0.0
    %3317 = vmatprep.subr.mxu0 0.0
    %3318 = vmatpush1.msra.mxu0 0.0
    %3319 = vmatprep.subr.mxu0 0.0
    %3320 = vmatpush1.msra.mxu0 0.0
    %3321 = vmatprep.subr.mxu0 0.0
    %3322 = vmatpush1.msra.mxu0 0.0
    %3323 = vmatprep.subr.mxu0 0.0
    %3324 = vmatpush1.msra.mxu0 0.0
    %3325 = vmatprep.subr.mxu0 0.0
    %3326 = vmatpush1.msra.mxu0 0.0
    %3327 = vmatprep.subr.mxu0 0.0
    %3328 = vmatpush1.msra.mxu0 %v3292
    %3329 = vmatprep.subr.mxu0 0.0
    %3330 = vmatpush2.msra.mxu0 0.0
    %3331 = vmatprep.subr.mxu0 0.0
    %3332 = vmatpush2.msra.mxu0 0.0
    %3333 = vmatprep.subr.mxu0 0.0
    %3334 = vmatpush2.msra.mxu0 0.0
    %3335 = vmatprep.subr.mxu0 0.0
    %3336 = vmatpush2.msra.mxu0 0.0
    %3337 = vmatprep.subr.mxu0 0.0
    %3338 = vmatpush2.msra.mxu0 0.0
    %3339 = vmatprep.subr.mxu0 0.0
    %3340 = vmatpush2.msra.mxu0 0.0
    %3341 = vmatprep.subr.mxu0 0.0
    %3342 = vmatpush2.msra.mxu0 0.0
    %3343 = vmatprep.subr.mxu0 0.0
    %3344 = vmatpush2.msra.mxu0 0.0
    %3345 = vmatprep.subr.mxu0 0.0
    %3346 = vmatpush2.msra.mxu0 0.0
    %3347 = vmatprep.subr.mxu0 0.0
    %3348 = vmatpush2.msra.mxu0 0.0
    %3349 = vmatprep.subr.mxu0 0.0
    %3350 = vmatpush2.msra.mxu0 0.0
    %3351 = vmatprep.subr.mxu0 0.0
    %3352 = vmatpush2.msra.mxu0 0.0
    %3353 = vmatprep.subr.mxu0 0.0
    %3354 = vmatpush2.msra.mxu0 0.0
    %3355 = vmatprep.subr.mxu0 0.0
    %3356 = vmatpush2.msra.mxu0 0.0
    %3357 = vmatprep.subr.mxu0 0.0
    %3358 = vmatpush2.msra.mxu0 0.0
    %3359 = vmatprep.subr.mxu0 0.0
    %3360 = vmatpush2.msra.mxu0 0.0
    %3361 = vmatprep.mubr.f32.mxu0 0.0
    %3362 = vmatmul.mubr.f32.gmra.mxu0 %v3295
    %v3363 = vpop.f32.mrf.mxu0
    %v3364 = vadd.f32 0.0, %v3363
    %v3365 = vpop.f32.mrf.mxu0
    %3366 = vdwg.mxu0
    %3367 = vrot.lane.b32.xlu0 %v2228, 64
    %v3368 = vpop.permute.xlu0 %3367
    %v3371 = vsel %vm436, %v2884, 0
    %3373 = vmatprep.subr.mxu0 0.0
    %3374 = vmatpush1.msra.mxu0 0.0
    %3375 = vmatprep.subr.mxu0 0.0
    %3376 = vmatpush1.msra.mxu0 0.0
    %3377 = vmatprep.subr.mxu0 0.0
    %3378 = vmatpush1.msra.mxu0 0.0
    %3379 = vmatprep.subr.mxu0 0.0
    %3380 = vmatpush1.msra.mxu0 0.0
    %3381 = vmatprep.subr.mxu0 0.0
    %3382 = vmatpush1.msra.mxu0 0.0
    %3383 = vmatprep.subr.mxu0 0.0
    %3384 = vmatpush1.msra.mxu0 0.0
    %3385 = vmatprep.subr.mxu0 0.0
    %3386 = vmatpush1.msra.mxu0 0.0
    %3387 = vmatprep.subr.mxu0 0.0
    %3388 = vmatpush1.msra.mxu0 0.0
    %3389 = vmatprep.subr.mxu0 0.0
    %3390 = vmatpush1.msra.mxu0 0.0
    %3391 = vmatprep.subr.mxu0 0.0
    %3392 = vmatpush1.msra.mxu0 0.0
    %3393 = vmatprep.subr.mxu0 0.0
    %3394 = vmatpush1.msra.mxu0 0.0
    %3395 = vmatprep.subr.mxu0 0.0
    %3396 = vmatpush1.msra.mxu0 0.0
    %3397 = vmatprep.subr.mxu0 0.0
    %3398 = vmatpush1.msra.mxu0 0.0
    %3399 = vmatprep.subr.mxu0 0.0
    %3400 = vmatpush1.msra.mxu0 0.0
    %3401 = vmatprep.subr.mxu0 0.0
    %3402 = vmatpush1.msra.mxu0 0.0
    %3403 = vmatprep.subr.mxu0 0.0
    %3404 = vmatpush1.msra.mxu0 %v3368
    %3405 = vmatprep.subr.mxu0 0.0
    %3406 = vmatpush2.msra.mxu0 0.0
    %3407 = vmatprep.subr.mxu0 0.0
    %3408 = vmatpush2.msra.mxu0 0.0
    %3409 = vmatprep.subr.mxu0 0.0
    %3410 = vmatpush2.msra.mxu0 0.0
    %3411 = vmatprep.subr.mxu0 0.0
    %3412 = vmatpush2.msra.mxu0 0.0
    %3413 = vmatprep.subr.mxu0 0.0
    %3414 = vmatpush2.msra.mxu0 0.0
    %3415 = vmatprep.subr.mxu0 0.0
    %3416 = vmatpush2.msra.mxu0 0.0
    %3417 = vmatprep.subr.mxu0 0.0
    %3418 = vmatpush2.msra.mxu0 0.0
    %3419 = vmatprep.subr.mxu0 0.0
    %3420 = vmatpush2.msra.mxu0 0.0
    %3421 = vmatprep.subr.mxu0 0.0
    %3422 = vmatpush2.msra.mxu0 0.0
    %3423 = vmatprep.subr.mxu0 0.0
    %3424 = vmatpush2.msra.mxu0 0.0
    %3425 = vmatprep.subr.mxu0 0.0
    %3426 = vmatpush2.msra.mxu0 0.0
    %3427 = vmatprep.subr.mxu0 0.0
    %3428 = vmatpush2.msra.mxu0 0.0
    %3429 = vmatprep.subr.mxu0 0.0
    %3430 = vmatpush2.msra.mxu0 0.0
    %3431 = vmatprep.subr.mxu0 0.0
    %3432 = vmatpush2.msra.mxu0 0.0
    %3433 = vmatprep.subr.mxu0 0.0
    %3434 = vmatpush2.msra.mxu0 0.0
    %3435 = vmatprep.subr.mxu0 0.0
    %3436 = vmatpush2.msra.mxu0 0.0
    %3437 = vmatprep.mubr.f32.mxu0 0.0
    %3438 = vmatmul.mubr.f32.gmra.mxu0 %v3371
    %v3439 = vpop.f32.mrf.mxu0
    %v3440 = vadd.f32 0.0, %v3439
    %v3441 = vpop.f32.mrf.mxu0
    %3442 = vdwg.mxu0
    %3443 = vrot.lane.b32.xlu0 %v2230, 64
    %v3444 = vpop.permute.xlu0 %3443
    %v3447 = vsel %vm436, %v2886, 0
    %3449 = vmatprep.subr.mxu0 0.0
    %3450 = vmatpush1.msra.mxu0 0.0
    %3451 = vmatprep.subr.mxu0 0.0
    %3452 = vmatpush1.msra.mxu0 0.0
    %3453 = vmatprep.subr.mxu0 0.0
    %3454 = vmatpush1.msra.mxu0 0.0
    %3455 = vmatprep.subr.mxu0 0.0
    %3456 = vmatpush1.msra.mxu0 0.0
    %3457 = vmatprep.subr.mxu0 0.0
    %3458 = vmatpush1.msra.mxu0 0.0
    %3459 = vmatprep.subr.mxu0 0.0
    %3460 = vmatpush1.msra.mxu0 0.0
    %3461 = vmatprep.subr.mxu0 0.0
    %3462 = vmatpush1.msra.mxu0 0.0
    %3463 = vmatprep.subr.mxu0 0.0
    %3464 = vmatpush1.msra.mxu0 0.0
    %3465 = vmatprep.subr.mxu0 0.0
    %3466 = vmatpush1.msra.mxu0 0.0
    %3467 = vmatprep.subr.mxu0 0.0
    %3468 = vmatpush1.msra.mxu0 0.0
    %3469 = vmatprep.subr.mxu0 0.0
    %3470 = vmatpush1.msra.mxu0 0.0
    %3471 = vmatprep.subr.mxu0 0.0
    %3472 = vmatpush1.msra.mxu0 0.0
    %3473 = vmatprep.subr.mxu0 0.0
    %3474 = vmatpush1.msra.mxu0 0.0
    %3475 = vmatprep.subr.mxu0 0.0
    %3476 = vmatpush1.msra.mxu0 0.0
    %3477 = vmatprep.subr.mxu0 0.0
    %3478 = vmatpush1.msra.mxu0 0.0
    %3479 = vmatprep.subr.mxu0 0.0
    %3480 = vmatpush1.msra.mxu0 %v3444
    %3481 = vmatprep.subr.mxu0 0.0
    %3482 = vmatpush2.msra.mxu0 0.0
    %3483 = vmatprep.subr.mxu0 0.0
    %3484 = vmatpush2.msra.mxu0 0.0
    %3485 = vmatprep.subr.mxu0 0.0
    %3486 = vmatpush2.msra.mxu0 0.0
    %3487 = vmatprep.subr.mxu0 0.0
    %3488 = vmatpush2.msra.mxu0 0.0
    %3489 = vmatprep.subr.mxu0 0.0
    %3490 = vmatpush2.msra.mxu0 0.0
    %3491 = vmatprep.subr.mxu0 0.0
    %3492 = vmatpush2.msra.mxu0 0.0
    %3493 = vmatprep.subr.mxu0 0.0
    %3494 = vmatpush2.msra.mxu0 0.0
    %3495 = vmatprep.subr.mxu0 0.0
    %3496 = vmatpush2.msra.mxu0 0.0
    %3497 = vmatprep.subr.mxu0 0.0
    %3498 = vmatpush2.msra.mxu0 0.0
    %3499 = vmatprep.subr.mxu0 0.0
    %3500 = vmatpush2.msra.mxu0 0.0
    %3501 = vmatprep.subr.mxu0 0.0
    %3502 = vmatpush2.msra.mxu0 0.0
    %3503 = vmatprep.subr.mxu0 0.0
    %3504 = vmatpush2.msra.mxu0 0.0
    %3505 = vmatprep.subr.mxu0 0.0
    %3506 = vmatpush2.msra.mxu0 0.0
    %3507 = vmatprep.subr.mxu0 0.0
    %3508 = vmatpush2.msra.mxu0 0.0
    %3509 = vmatprep.subr.mxu0 0.0
    %3510 = vmatpush2.msra.mxu0 0.0
    %3511 = vmatprep.subr.mxu0 0.0
    %3512 = vmatpush2.msra.mxu0 0.0
    %3513 = vmatprep.mubr.f32.mxu0 0.0
    %3514 = vmatmul.mubr.f32.gmra.mxu0 %v3447
    %v3515 = vpop.f32.mrf.mxu0
    %v3516 = vadd.f32 0.0, %v3515
    %v3517 = vpop.f32.mrf.mxu0
    %3518 = vdwg.mxu0
    %v3519 = vrcp.pop %v2889
    %v3520 = vrcp.pop %v2892
    %v3521 = vrcp.pop %v2895
    %v3522 = vrcp.pop %v2898
    %v3523 = vrcp.pop %v2901
    %v3524 = vrcp.pop %v2904
    %v3525 = vrcp.pop %v2907
    %v3526 = vrcp.pop %v2910
    %v3527 = vmul.f32 %v2984, %v3519
    %v3528 = vmul.f32 %v3060, %v3520
    %v3529 = vmul.f32 %v3136, %v3521
    %v3530 = vmul.f32 %v3212, %v3522
    %v3531 = vmul.f32 %v3288, %v3523
    %v3532 = vmul.f32 %v3364, %v3524
    %v3533 = vmul.f32 %v3440, %v3525
    %v3534 = vmul.f32 %v3516, %v3526
    %3537 = vrot.lane.b32.xlu0 %v3529, 8
    %v3538 = vpop.permute.xlu0 %3537
    %3539 = vrot.lane.b32.xlu0 %v3530, 8
    %v3540 = vpop.permute.xlu0 %3539
    %3545 = vrot.lane.b32.xlu0 %v3531, 16
    %v3546 = vpop.permute.xlu0 %3545
    %3547 = vrot.lane.b32.xlu0 %v3532, 16
    %v3548 = vpop.permute.xlu0 %3547
    %3553 = vrot.lane.b32.xlu0 %v3533, 24
    %v3554 = vpop.permute.xlu0 %3553
    %3555 = vrot.lane.b32.xlu0 %v3534, 24
    %v3556 = vpop.permute.xlu0 %3555
    %v3559 = vsel %vm436, %v3527, %v3538
    %v3560 = vsel %vm436, %v3528, %v3540
    %v3561 = vsel %vm189, %v3559, %v3546
    %v3562 = vsel %vm189, %v3560, %v3548
    %v3563 = vsel %vm1767, %v3561, %v3554
    %v3564 = vsel %vm1767, %v3562, %v3556
    %v3565 = vlaneseq
    %v3566 = vshrl.u32 %v3565, 7
    %v3567 = vsub.s32 1, %v3566
    %v3568 = vrot.slane %v2131, %v3567
    %v3570 = vsel %vm298, %v3563, 0
    %v3573 = vsel %vm298, %v3564, 0
    %3575 = vmatprep.subr.mxu0 0.0
    %3576 = vmatpush1.msra.mxu0 0.0
    %3577 = vmatprep.subr.mxu0 0.0
    %3578 = vmatpush1.msra.mxu0 0.0
    %3579 = vmatprep.subr.mxu0 0.0
    %3580 = vmatpush1.msra.mxu0 0.0
    %3581 = vmatprep.subr.mxu0 0.0
    %3582 = vmatpush1.msra.mxu0 0.0
    %3583 = vmatprep.subr.mxu0 0.0
    %3584 = vmatpush1.msra.mxu0 0.0
    %3585 = vmatprep.subr.mxu0 0.0
    %3586 = vmatpush1.msra.mxu0 0.0
    %3587 = vmatprep.subr.mxu0 0.0
    %3588 = vmatpush1.msra.mxu0 0.0
    %3589 = vmatprep.subr.mxu0 0.0
    %3590 = vmatpush1.msra.mxu0 0.0
    %3591 = vmatprep.subr.mxu0 0.0
    %3592 = vmatpush1.msra.mxu0 0.0
    %3593 = vmatprep.subr.mxu0 0.0
    %3594 = vmatpush1.msra.mxu0 0.0
    %3595 = vmatprep.subr.mxu0 0.0
    %3596 = vmatpush1.msra.mxu0 0.0
    %3597 = vmatprep.subr.mxu0 0.0
    %3598 = vmatpush1.msra.mxu0 0.0
    %3599 = vmatprep.subr.mxu0 0.0
    %3600 = vmatpush1.msra.mxu0 %v2117
    %3601 = vmatprep.subr.mxu0 0.0
    %3602 = vmatpush1.msra.mxu0 %v2116
    %3603 = vmatprep.subr.mxu0 0.0
    %3604 = vmatpush1.msra.mxu0 %v2115
    %3605 = vmatprep.subr.mxu0 0.0
    %3606 = vmatpush1.msra.mxu0 %v2114
    %3607 = vmatprep.subr.mxu0 0.0
    %3608 = vmatpush2.msra.mxu0 0.0
    %3609 = vmatprep.subr.mxu0 0.0
    %3610 = vmatpush2.msra.mxu0 0.0
    %3611 = vmatprep.subr.mxu0 0.0
    %3612 = vmatpush2.msra.mxu0 0.0
    %3613 = vmatprep.subr.mxu0 0.0
    %3614 = vmatpush2.msra.mxu0 0.0
    %3615 = vmatprep.subr.mxu0 0.0
    %3616 = vmatpush2.msra.mxu0 0.0
    %3617 = vmatprep.subr.mxu0 0.0
    %3618 = vmatpush2.msra.mxu0 0.0
    %3619 = vmatprep.subr.mxu0 0.0
    %3620 = vmatpush2.msra.mxu0 0.0
    %3621 = vmatprep.subr.mxu0 0.0
    %3622 = vmatpush2.msra.mxu0 0.0
    %3623 = vmatprep.subr.mxu0 0.0
    %3624 = vmatpush2.msra.mxu0 0.0
    %3625 = vmatprep.subr.mxu0 0.0
    %3626 = vmatpush2.msra.mxu0 0.0
    %3627 = vmatprep.subr.mxu0 0.0
    %3628 = vmatpush2.msra.mxu0 0.0
    %3629 = vmatprep.subr.mxu0 0.0
    %3630 = vmatpush2.msra.mxu0 0.0
    %3631 = vmatprep.subr.mxu0 0.0
    %3632 = vmatpush2.msra.mxu0 0.0
    %3633 = vmatprep.subr.mxu0 0.0
    %3634 = vmatpush2.msra.mxu0 0.0
    %3635 = vmatprep.subr.mxu0 0.0
    %3636 = vmatpush2.msra.mxu0 0.0
    %3637 = vmatprep.subr.mxu0 0.0
    %3638 = vmatpush2.msra.mxu0 0.0
    %3639 = vmatprep.mubr.f32.mxu0 0.0
    %3640 = vmatmul.mubr.f32.gmra.mxu0 %v3570
    %v3641 = vpop.f32.mrf.mxu0
    %v3642 = vadd.f32 %v3568, %v3641
    %v3643 = vpop.f32.mrf.mxu0
    %3644 = vmatprep.mubr.f32.mxu0 0.0
    %3645 = vmatmul.mubr.f32.gmra.mxu0 %v3573
    %v3646 = vpop.f32.mrf.mxu0
    %v3647 = vadd.f32 %v3568, %v3646
    %v3648 = vpop.f32.mrf.mxu0
    %3649 = vdwg.mxu0
    %v3650 = vadd.f32 %v2107, %v3642
    %v3651 = vadd.f32 %v2108, %v3647
    %v3652 = vsel %vm298, %v3650, 0.0
    %3653 = vadd.xlane.f32.xlu0 %v3652
    %v3654 = vpop.xlane.xlu0 %3653
    %v3655 = vsel %vm298, %v3651, 0.0
    %3656 = vadd.xlane.f32.xlu0 %v3655
    %v3657 = vpop.xlane.xlu0 %3656
    %v3658 = vmul.f32 %v3654, %v1863
    %v3659 = vmul.f32 %v3657, %v1863
    %v3660 = vsub.f32 %v3650, %v3658
    %v3661 = vsub.f32 %v3651, %v3659
    %v3662 = vmul.f32 %v3660, %v3660
    %v3663 = vmul.f32 %v3661, %v3661
    %v3664 = vsel %vm298, %v3662, 0.0
    %3665 = vadd.xlane.f32.xlu0 %v3664
    %v3666 = vpop.xlane.xlu0 %3665
    %v3667 = vsel %vm298, %v3663, 0.0
    %3668 = vadd.xlane.f32.xlu0 %v3667
    %v3669 = vpop.xlane.xlu0 %3668
    %v3670 = vmul.f32 %v3666, %v1863
    %v3671 = vmul.f32 %v3669, %v1863
    %v3672 = vadd.f32 %v3670, 1e-05
    %v3673 = vadd.f32 %v3671, 1e-05
    %v3674 = vrsqrt.pop %v3672
    %v3675 = vrsqrt.pop %v3673
    %v3676 = vmul.f32 %v3660, %v3674
    %v3677 = vmul.f32 %v3661, %v3675
    %v3678 = vlaneseq
    %v3679 = vshrl.u32 %v3678, 7
    %v3680 = vsub.s32 4, %v3679
    %v3681 = vrot.slane %v2131, %v3680
    %v3682 = vmul.f32 %v3676, %v3681
    %v3683 = vmul.f32 %v3677, %v3681
    %v3684 = vlaneseq
    %v3685 = vshrl.u32 %v3684, 7
    %v3686 = vsub.s32 5, %v3685
    %v3687 = vrot.slane %v2131, %v3686
    %v3688 = vadd.f32 %v3682, %v3687
    %v3689 = vadd.f32 %v3683, %v3687
    %v3690 = vlaneseq
    %v3691 = vshrl.u32 %v3690, 7
    %v3692 = vsub.s32 2, %v3691
    %v3693 = vrot.slane %v2131, %v3692
    %v3695 = vsel %vm298, %v3688, 0
    %v3698 = vsel %vm298, %v3689, 0
    %3700 = vmatprep.subr.mxu0 0.0
    %3701 = vmatpush1.msra.mxu0 0.0
    %3702 = vmatprep.subr.mxu0 0.0
    %3703 = vmatpush1.msra.mxu0 0.0
    %3704 = vmatprep.subr.mxu0 0.0
    %3705 = vmatpush1.msra.mxu0 0.0
    %3706 = vmatprep.subr.mxu0 0.0
    %3707 = vmatpush1.msra.mxu0 0.0
    %3708 = vmatprep.subr.mxu0 0.0
    %3709 = vmatpush1.msra.mxu0 0.0
    %3710 = vmatprep.subr.mxu0 0.0
    %3711 = vmatpush1.msra.mxu0 0.0
    %3712 = vmatprep.subr.mxu0 0.0
    %3713 = vmatpush1.msra.mxu0 0.0
    %3714 = vmatprep.subr.mxu0 0.0
    %3715 = vmatpush1.msra.mxu0 0.0
    %3716 = vmatprep.subr.mxu0 0.0
    %3717 = vmatpush1.msra.mxu0 0.0
    %3718 = vmatprep.subr.mxu0 0.0
    %3719 = vmatpush1.msra.mxu0 0.0
    %3720 = vmatprep.subr.mxu0 0.0
    %3721 = vmatpush1.msra.mxu0 0.0
    %3722 = vmatprep.subr.mxu0 0.0
    %3723 = vmatpush1.msra.mxu0 0.0
    %3724 = vmatprep.subr.mxu0 0.0
    %3725 = vmatpush1.msra.mxu0 %v2121
    %3726 = vmatprep.subr.mxu0 0.0
    %3727 = vmatpush1.msra.mxu0 %v2120
    %3728 = vmatprep.subr.mxu0 0.0
    %3729 = vmatpush1.msra.mxu0 %v2119
    %3730 = vmatprep.subr.mxu0 0.0
    %3731 = vmatpush1.msra.mxu0 %v2118
    %3732 = vmatprep.subr.mxu0 0.0
    %3733 = vmatpush2.msra.mxu0 0.0
    %3734 = vmatprep.subr.mxu0 0.0
    %3735 = vmatpush2.msra.mxu0 0.0
    %3736 = vmatprep.subr.mxu0 0.0
    %3737 = vmatpush2.msra.mxu0 0.0
    %3738 = vmatprep.subr.mxu0 0.0
    %3739 = vmatpush2.msra.mxu0 0.0
    %3740 = vmatprep.subr.mxu0 0.0
    %3741 = vmatpush2.msra.mxu0 0.0
    %3742 = vmatprep.subr.mxu0 0.0
    %3743 = vmatpush2.msra.mxu0 0.0
    %3744 = vmatprep.subr.mxu0 0.0
    %3745 = vmatpush2.msra.mxu0 0.0
    %3746 = vmatprep.subr.mxu0 0.0
    %3747 = vmatpush2.msra.mxu0 0.0
    %3748 = vmatprep.subr.mxu0 0.0
    %3749 = vmatpush2.msra.mxu0 0.0
    %3750 = vmatprep.subr.mxu0 0.0
    %3751 = vmatpush2.msra.mxu0 0.0
    %3752 = vmatprep.subr.mxu0 0.0
    %3753 = vmatpush2.msra.mxu0 0.0
    %3754 = vmatprep.subr.mxu0 0.0
    %3755 = vmatpush2.msra.mxu0 0.0
    %3756 = vmatprep.subr.mxu0 0.0
    %3757 = vmatpush2.msra.mxu0 0.0
    %3758 = vmatprep.subr.mxu0 0.0
    %3759 = vmatpush2.msra.mxu0 0.0
    %3760 = vmatprep.subr.mxu0 0.0
    %3761 = vmatpush2.msra.mxu0 0.0
    %3762 = vmatprep.subr.mxu0 0.0
    %3763 = vmatpush2.msra.mxu0 0.0
    %3764 = vmatprep.mubr.f32.mxu0 0.0
    %3765 = vmatmul.mubr.f32.gmra.mxu0 %v3695
    %v3766 = vpop.f32.mrf.mxu0
    %v3767 = vadd.f32 %v3693, %v3766
    %v3768 = vpop.f32.mrf.mxu0
    %3769 = vmatprep.mubr.f32.mxu0 0.0
    %3770 = vmatmul.mubr.f32.gmra.mxu0 %v3698
    %v3771 = vpop.f32.mrf.mxu0
    %v3772 = vadd.f32 %v3693, %v3771
    %v3773 = vpop.f32.mrf.mxu0
    %3774 = vdwg.mxu0
    %v3775 = vmax.f32 %v3767, 0.0
    %v3776 = vmax.f32 %v3772, 0.0
    %v3777 = vlaneseq
    %v3778 = vshrl.u32 %v3777, 7
    %v3779 = vsub.s32 3, %v3778
    %v3780 = vrot.slane %v2131, %v3779
    %v3782 = vsel %vm1987, %v3775, 0
    %v3785 = vsel %vm1987, %v3776, 0
    %3787 = vmatprep.subr.mxu0 0.0
    %3788 = vmatpush1.msra.mxu0 0.0
    %3789 = vmatprep.subr.mxu0 0.0
    %3790 = vmatpush1.msra.mxu0 0.0
    %3791 = vmatprep.subr.mxu0 0.0
    %3792 = vmatpush1.msra.mxu0 0.0
    %3793 = vmatprep.subr.mxu0 0.0
    %3794 = vmatpush1.msra.mxu0 0.0
    %3795 = vmatprep.subr.mxu0 0.0
    %3796 = vmatpush1.msra.mxu0 0.0
    %3797 = vmatprep.subr.mxu0 0.0
    %3798 = vmatpush1.msra.mxu0 0.0
    %3799 = vmatprep.subr.mxu0 0.0
    %3800 = vmatpush1.msra.mxu0 0.0
    %3801 = vmatprep.subr.mxu0 0.0
    %3802 = vmatpush1.msra.mxu0 0.0
    %3803 = vmatprep.subr.mxu0 0.0
    %3804 = vmatpush1.msra.mxu0 %v2129
    %3805 = vmatprep.subr.mxu0 0.0
    %3806 = vmatpush1.msra.mxu0 %v2128
    %3807 = vmatprep.subr.mxu0 0.0
    %3808 = vmatpush1.msra.mxu0 %v2127
    %3809 = vmatprep.subr.mxu0 0.0
    %3810 = vmatpush1.msra.mxu0 %v2126
    %3811 = vmatprep.subr.mxu0 0.0
    %3812 = vmatpush1.msra.mxu0 %v2125
    %3813 = vmatprep.subr.mxu0 0.0
    %3814 = vmatpush1.msra.mxu0 %v2124
    %3815 = vmatprep.subr.mxu0 0.0
    %3816 = vmatpush1.msra.mxu0 %v2123
    %3817 = vmatprep.subr.mxu0 0.0
    %3818 = vmatpush1.msra.mxu0 %v2122
    %3819 = vmatprep.subr.mxu0 0.0
    %3820 = vmatpush2.msra.mxu0 0.0
    %3821 = vmatprep.subr.mxu0 0.0
    %3822 = vmatpush2.msra.mxu0 0.0
    %3823 = vmatprep.subr.mxu0 0.0
    %3824 = vmatpush2.msra.mxu0 0.0
    %3825 = vmatprep.subr.mxu0 0.0
    %3826 = vmatpush2.msra.mxu0 0.0
    %3827 = vmatprep.subr.mxu0 0.0
    %3828 = vmatpush2.msra.mxu0 0.0
    %3829 = vmatprep.subr.mxu0 0.0
    %3830 = vmatpush2.msra.mxu0 0.0
    %3831 = vmatprep.subr.mxu0 0.0
    %3832 = vmatpush2.msra.mxu0 0.0
    %3833 = vmatprep.subr.mxu0 0.0
    %3834 = vmatpush2.msra.mxu0 0.0
    %3835 = vmatprep.subr.mxu0 0.0
    %3836 = vmatpush2.msra.mxu0 0.0
    %3837 = vmatprep.subr.mxu0 0.0
    %3838 = vmatpush2.msra.mxu0 0.0
    %3839 = vmatprep.subr.mxu0 0.0
    %3840 = vmatpush2.msra.mxu0 0.0
    %3841 = vmatprep.subr.mxu0 0.0
    %3842 = vmatpush2.msra.mxu0 0.0
    %3843 = vmatprep.subr.mxu0 0.0
    %3844 = vmatpush2.msra.mxu0 0.0
    %3845 = vmatprep.subr.mxu0 0.0
    %3846 = vmatpush2.msra.mxu0 0.0
    %3847 = vmatprep.subr.mxu0 0.0
    %3848 = vmatpush2.msra.mxu0 0.0
    %3849 = vmatprep.subr.mxu0 0.0
    %3850 = vmatpush2.msra.mxu0 0.0
    %3851 = vmatprep.mubr.f32.mxu0 0.0
    %3852 = vmatmul.mubr.f32.gmra.mxu0 %v3782
    %v3853 = vpop.f32.mrf.mxu0
    %v3854 = vadd.f32 %v3780, %v3853
    %v3855 = vpop.f32.mrf.mxu0
    %3856 = vmatprep.mubr.f32.mxu0 0.0
    %3857 = vmatmul.mubr.f32.gmra.mxu0 %v3785
    %v3858 = vpop.f32.mrf.mxu0
    %v3859 = vadd.f32 %v3780, %v3858
    %v3860 = vpop.f32.mrf.mxu0
    %3861 = vdwg.mxu0
    %v3862 = vadd.f32 %v3688, %v3854
    %v3863 = vadd.f32 %v3689, %v3859
    %v3864 = vsel %vm298, %v3862, 0.0
    %3865 = vadd.xlane.f32.xlu0 %v3864
    %v3866 = vpop.xlane.xlu0 %3865
    %v3867 = vsel %vm298, %v3863, 0.0
    %3868 = vadd.xlane.f32.xlu0 %v3867
    %v3869 = vpop.xlane.xlu0 %3868
    %v3870 = vmul.f32 %v3866, %v1863
    %v3871 = vmul.f32 %v3869, %v1863
    %v3872 = vsub.f32 %v3862, %v3870
    %v3873 = vsub.f32 %v3863, %v3871
    %v3874 = vmul.f32 %v3872, %v3872
    %v3875 = vmul.f32 %v3873, %v3873
    %v3876 = vsel %vm298, %v3874, 0.0
    %3877 = vadd.xlane.f32.xlu0 %v3876
    %v3878 = vpop.xlane.xlu0 %3877
    %v3879 = vsel %vm298, %v3875, 0.0
    %3880 = vadd.xlane.f32.xlu0 %v3879
    %v3881 = vpop.xlane.xlu0 %3880
    %v3882 = vmul.f32 %v3878, %v1863
    %v3883 = vmul.f32 %v3881, %v1863
    %v3884 = vadd.f32 %v3882, 1e-05
    %v3885 = vadd.f32 %v3883, 1e-05
    %v3886 = vrsqrt.pop %v3884
    %v3887 = vrsqrt.pop %v3885
    %v3888 = vmul.f32 %v3872, %v3886
    %v3889 = vmul.f32 %v3873, %v3887
    %v3890 = vlaneseq
    %v3891 = vshrl.u32 %v3890, 7
    %v3892 = vsub.s32 6, %v3891
    %v3893 = vrot.slane %v2131, %v3892
    %v3894 = vmul.f32 %v3888, %v3893
    %v3895 = vmul.f32 %v3889, %v3893
    %v3896 = vlaneseq
    %v3897 = vshrl.u32 %v3896, 7
    %v3898 = vsub.s32 7, %v3897
    %v3899 = vrot.slane %v2131, %v3898
    %v3900 = vadd.f32 %v3894, %v3899
    %v3901 = vadd.f32 %v3895, %v3899
    %v3904 = vrot.slane %v3901, 7
    %vm3907 = vcmask 261127
    %v3908 = vsel %vm3907, %v3900, 0.0
    %3909 = vadd.xlane.f32.xlu0 %v3908
    %v3910 = vpop.xlane.xlu0 %3909
    %vm3911 = vcmask 253952
    %v3912 = vsel %vm3911, %v3904, 0.0
    %3913 = vadd.xlane.f32.xlu0 %v3912
    %v3914 = vpop.xlane.xlu0 %3913
    %v3915 = vmul.f32 %v3910, %v1863
    %v3916 = vmul.f32 %v3914, %v1863
    %v3919 = vrot.slane %v3916, 1
    %v3922 = vsub.f32 %v3900, %v3915
    %v3923 = vsub.f32 %v3901, %v3919
    %v3924 = vmul.f32 %v3922, %v3922
    %v3925 = vmul.f32 %v3923, %v3923
    %v3928 = vrot.slane %v3925, 7
    %v3931 = vsel %vm3907, %v3924, 0.0
    %3932 = vadd.xlane.f32.xlu0 %v3931
    %v3933 = vpop.xlane.xlu0 %3932
    %v3934 = vsel %vm3911, %v3928, 0.0
    %3935 = vadd.xlane.f32.xlu0 %v3934
    %v3936 = vpop.xlane.xlu0 %3935
    %v3937 = vmul.f32 %v3933, %v1863
    %v3938 = vmul.f32 %v3936, %v1863
    %v3939 = vadd.f32 %v3937, 1e-05
    %v3940 = vadd.f32 %v3938, 1e-05
    %v3941 = vrsqrt.pop %v3939
    %v3942 = vrsqrt.pop %v3940
    %v3945 = vrot.slane %v3942, 1
    %v3948 = vmul.f32 %v3922, %v3941
    %v3949 = vmul.f32 %v3923, %v3945
    %v3950 = vlaneseq
    %v3951 = vshrl.u32 %v3950, 7
    %v3952 = vsub.s32 1, %v3951
    %v3953 = vrot.slane %v181, %v3952
    %v3954 = vmul.f32 %v3948, %v3953
    %v3955 = vmul.f32 %v3949, %v3953
    %v3956 = vlaneseq
    %v3957 = vshrl.u32 %v3956, 7
    %v3958 = vsub.s32 2, %v3957
    %v3959 = vrot.slane %v181, %v3958
    %v3960 = vadd.f32 %v3954, %v3959
    %v3961 = vadd.f32 %v3955, %v3959
    %v3962 = vlaneseq
    %v3963 = vshrl.u32 %v3962, 7
    %v3964 = vsub.s32 3, %v3963
    %v3965 = vrot.slane %v181, %v3964
    %v3968 = vrot.slane %v3960, 7
    %v3969 = vrot.slane %v3961, 6
    %vm3970 = vcmask 1041409
    %v3971 = vsel %vm3970, %v3969, %v3968
    %v3972 = vsel %vm298, %v3971, 0
    %3974 = vmatprep.subr.mxu0 0.0
    %3975 = vmatpush1.msra.mxu0 0.0
    %3976 = vmatprep.subr.mxu0 0.0
    %3977 = vmatpush1.msra.mxu0 0.0
    %3978 = vmatprep.subr.mxu0 0.0
    %3979 = vmatpush1.msra.mxu0 0.0
    %3980 = vmatprep.subr.mxu0 0.0
    %3981 = vmatpush1.msra.mxu0 0.0
    %3982 = vmatprep.subr.mxu0 0.0
    %3983 = vmatpush1.msra.mxu0 0.0
    %3984 = vmatprep.subr.mxu0 0.0
    %3985 = vmatpush1.msra.mxu0 0.0
    %3986 = vmatprep.subr.mxu0 0.0
    %3987 = vmatpush1.msra.mxu0 0.0
    %3988 = vmatprep.subr.mxu0 0.0
    %3989 = vmatpush1.msra.mxu0 0.0
    %3990 = vmatprep.subr.mxu0 0.0
    %3991 = vmatpush1.msra.mxu0 0.0
    %3992 = vmatprep.subr.mxu0 0.0
    %3993 = vmatpush1.msra.mxu0 0.0
    %3994 = vmatprep.subr.mxu0 0.0
    %3995 = vmatpush1.msra.mxu0 0.0
    %3996 = vmatprep.subr.mxu0 0.0
    %3997 = vmatpush1.msra.mxu0 0.0
    %3998 = vmatprep.subr.mxu0 0.0
    %3999 = vmatpush1.msra.mxu0 %v172
    %4000 = vmatprep.subr.mxu0 0.0
    %4001 = vmatpush1.msra.mxu0 %v171
    %4002 = vmatprep.subr.mxu0 0.0
    %4003 = vmatpush1.msra.mxu0 %v170
    %4004 = vmatprep.subr.mxu0 0.0
    %4005 = vmatpush1.msra.mxu0 %v169
    %4006 = vmatprep.subr.mxu0 0.0
    %4007 = vmatpush2.msra.mxu0 0.0
    %4008 = vmatprep.subr.mxu0 0.0
    %4009 = vmatpush2.msra.mxu0 0.0
    %4010 = vmatprep.subr.mxu0 0.0
    %4011 = vmatpush2.msra.mxu0 0.0
    %4012 = vmatprep.subr.mxu0 0.0
    %4013 = vmatpush2.msra.mxu0 0.0
    %4014 = vmatprep.subr.mxu0 0.0
    %4015 = vmatpush2.msra.mxu0 0.0
    %4016 = vmatprep.subr.mxu0 0.0
    %4017 = vmatpush2.msra.mxu0 0.0
    %4018 = vmatprep.subr.mxu0 0.0
    %4019 = vmatpush2.msra.mxu0 0.0
    %4020 = vmatprep.subr.mxu0 0.0
    %4021 = vmatpush2.msra.mxu0 0.0
    %4022 = vmatprep.subr.mxu0 0.0
    %4023 = vmatpush2.msra.mxu0 0.0
    %4024 = vmatprep.subr.mxu0 0.0
    %4025 = vmatpush2.msra.mxu0 0.0
    %4026 = vmatprep.subr.mxu0 0.0
    %4027 = vmatpush2.msra.mxu0 0.0
    %4028 = vmatprep.subr.mxu0 0.0
    %4029 = vmatpush2.msra.mxu0 0.0
    %4030 = vmatprep.subr.mxu0 0.0
    %4031 = vmatpush2.msra.mxu0 0.0
    %4032 = vmatprep.subr.mxu0 0.0
    %4033 = vmatpush2.msra.mxu0 0.0
    %4034 = vmatprep.subr.mxu0 0.0
    %4035 = vmatpush2.msra.mxu0 0.0
    %4036 = vmatprep.subr.mxu0 0.0
    %4037 = vmatpush2.msra.mxu0 0.0
    %4038 = vmatprep.mubr.f32.mxu0 0.0
    %4039 = vmatmul.mubr.f32.gmra.mxu0 %v3972
    %v4040 = vpop.f32.mrf.mxu0
    %v4041 = vadd.f32 %v3965, %v4040
    %v4042 = vpop.f32.mrf.mxu0
    %4043 = vdwg.mxu0
    %v4044 = vmax.f32 %v4041, 0.0
    %v4045 = vlaneseq
    %v4046 = vshrl.u32 %v4045, 7
    %v4047 = vsub.s32 4, %v4046
    %v4048 = vrot.slane %v181, %v4047
    %v4050 = vsel %vm1987, %v4044, 0
    %4052 = vmatprep.subr.mxu0 0.0
    %4053 = vmatpush1.msra.mxu0 0.0
    %4054 = vmatprep.subr.mxu0 0.0
    %4055 = vmatpush1.msra.mxu0 0.0
    %4056 = vmatprep.subr.mxu0 0.0
    %4057 = vmatpush1.msra.mxu0 0.0
    %4058 = vmatprep.subr.mxu0 0.0
    %4059 = vmatpush1.msra.mxu0 0.0
    %4060 = vmatprep.subr.mxu0 0.0
    %4061 = vmatpush1.msra.mxu0 0.0
    %4062 = vmatprep.subr.mxu0 0.0
    %4063 = vmatpush1.msra.mxu0 0.0
    %4064 = vmatprep.subr.mxu0 0.0
    %4065 = vmatpush1.msra.mxu0 0.0
    %4066 = vmatprep.subr.mxu0 0.0
    %4067 = vmatpush1.msra.mxu0 0.0
    %4068 = vmatprep.subr.mxu0 0.0
    %4069 = vmatpush1.msra.mxu0 %v180
    %4070 = vmatprep.subr.mxu0 0.0
    %4071 = vmatpush1.msra.mxu0 %v179
    %4072 = vmatprep.subr.mxu0 0.0
    %4073 = vmatpush1.msra.mxu0 %v178
    %4074 = vmatprep.subr.mxu0 0.0
    %4075 = vmatpush1.msra.mxu0 %v177
    %4076 = vmatprep.subr.mxu0 0.0
    %4077 = vmatpush1.msra.mxu0 %v176
    %4078 = vmatprep.subr.mxu0 0.0
    %4079 = vmatpush1.msra.mxu0 %v175
    %4080 = vmatprep.subr.mxu0 0.0
    %4081 = vmatpush1.msra.mxu0 %v174
    %4082 = vmatprep.subr.mxu0 0.0
    %4083 = vmatpush1.msra.mxu0 %v173
    %4084 = vmatprep.subr.mxu0 0.0
    %4085 = vmatpush2.msra.mxu0 0.0
    %4086 = vmatprep.subr.mxu0 0.0
    %4087 = vmatpush2.msra.mxu0 0.0
    %4088 = vmatprep.subr.mxu0 0.0
    %4089 = vmatpush2.msra.mxu0 0.0
    %4090 = vmatprep.subr.mxu0 0.0
    %4091 = vmatpush2.msra.mxu0 0.0
    %4092 = vmatprep.subr.mxu0 0.0
    %4093 = vmatpush2.msra.mxu0 0.0
    %4094 = vmatprep.subr.mxu0 0.0
    %4095 = vmatpush2.msra.mxu0 0.0
    %4096 = vmatprep.subr.mxu0 0.0
    %4097 = vmatpush2.msra.mxu0 0.0
    %4098 = vmatprep.subr.mxu0 0.0
    %4099 = vmatpush2.msra.mxu0 0.0
    %4100 = vmatprep.subr.mxu0 0.0
    %4101 = vmatpush2.msra.mxu0 0.0
    %4102 = vmatprep.subr.mxu0 0.0
    %4103 = vmatpush2.msra.mxu0 0.0
    %4104 = vmatprep.subr.mxu0 0.0
    %4105 = vmatpush2.msra.mxu0 0.0
    %4106 = vmatprep.subr.mxu0 0.0
    %4107 = vmatpush2.msra.mxu0 0.0
    %4108 = vmatprep.subr.mxu0 0.0
    %4109 = vmatpush2.msra.mxu0 0.0
    %4110 = vmatprep.subr.mxu0 0.0
    %4111 = vmatpush2.msra.mxu0 0.0
    %4112 = vmatprep.subr.mxu0 0.0
    %4113 = vmatpush2.msra.mxu0 0.0
    %4114 = vmatprep.subr.mxu0 0.0
    %4115 = vmatpush2.msra.mxu0 0.0
    %4116 = vmatprep.mubr.f32.mxu0 0.0
    %4117 = vmatmul.mubr.f32.gmra.mxu0 %v4050
    %v4118 = vpop.f32.mrf.mxu0
    %v4119 = vadd.f32 %v4048, %v4118
    %v4120 = vpop.f32.mrf.mxu0
    %4121 = vdwg.mxu0
    %4122 = vst [vmem:[#allocation12] sm:$0x3] %v4119
    // Predicated region
    $region46: #{transformer_forward.1} parent=1 // pred_check
      _
    $region47: #{transformer_forward.1} parent=1 // pred_check_branch
      %4124 = sbr.rel (0) target = $region49
    $region48: #{transformer_forward.1} parent=1 // pred_region
      %s4126 = ssub.s32 32, 32
      %4127 = vsyncadd [#allocation4], %s4126
      %s4129 = sshll.u32 [#allocation12], 4
      %s4130 = int_to_ptr.vmem [resolvable:$true] %s4129
      %4132 = dma.vmem_to_hbm [thread:$0]  %s4130, 32, %s6, [#allocation4]
    $region49: #{transformer_forward.1} parent=1 // pred_fallthru
      _
    // Predicated region
    $region50: #{transformer_forward.1} parent=1 // pred_check
      _
    $region51: #{transformer_forward.1} parent=1 // pred_check_branch
      %4134 = sbr.rel (0) target = $region53
    $region52: #{transformer_forward.1} parent=1 // pred_region
      %4135 = dma.done [#allocation4], 32
    $region53: #{transformer_forward.1} parent=1 // pred_fallthru
      _
    %4136 = vsyncpa [#allocation3], 1
    %4137 = vsyncpa [#allocation8], 1
    %4138 = vsyncpa [#allocation11], 1
    %4139 = vsyncpa [#allocation4], 1
    %4140 = vsyncpa [#allocation5], 1

</llo_original>
